<compile_context>
chip_gen: v7x
topology: tpu7x:2x2x1
jax: 0.10.0
libtpu: 0.0.40
codegen_flags: <defaults>
</compile_context>

<pallas_src>
import math
import functools

import jax
import jax.numpy as jnp
from jax.experimental import pallas as pl
from jax.experimental.pallas import tpu as pltpu


# ----------------------------- model config ---------------------------------

def get_model_dims(model_size):
    # (width, num_layers, num_heads, mlp_ratio) -- small synthetic "tiny" config
    return {"tiny": (64, 2, 2, 4.0)}[model_size]


# ----------------------------- math helpers ---------------------------------

def _gelu_tanh(x):
    c = math.sqrt(2.0 / math.pi)
    return 0.5 * x * (1.0 + jnp.tanh(c * (x + 0.044715 * x * x * x)))


def _layernorm(x, w, b, eps=1e-5):
    mu = jnp.mean(x, axis=-1, keepdims=True)
    var = jnp.mean((x - mu) ** 2, axis=-1, keepdims=True)
    return (x - mu) * jax.lax.rsqrt(var + eps) * w + b


def _patchify(x, patch_size):
    # 'b c (nt pt) (nh ph) (nw pw) -> b (nt nh nw) (c pt ph pw)'
    pt, ph, pw = patch_size
    b, c, t, h, w = x.shape
    nt, nh, nw = t // pt, h // ph, w // pw
    x = x.reshape(b, c, nt, pt, nh, ph, nw, pw)
    x = x.transpose(0, 2, 4, 6, 1, 3, 5, 7)          # b nt nh nw c pt ph pw
    return x.reshape(b, nt * nh * nw, c * pt * ph * pw)


# ------------------------------ Pallas kernel --------------------------------

def vit_disc_kernel(
    # inputs
    patches_ref, bias_ref, pin_w_ref, pin_b_ref, pos_ref, lat_ref,
    ln1_w_ref, ln1_b_ref, wq_ref, bq_ref, wk_ref, bk_ref, wv_ref, bv_ref,
    ao_w_ref, ao_b_ref, ln2_w_ref, ln2_b_ref,
    m1_w_ref, m1_b_ref, m2_w_ref, m2_b_ref,
    lnf_w_ref, lnf_b_ref, po1v_ref, po1g_ref, po2_ref,
    # output
    out_ref,
    *, num_layers, num_heads, num_batch, num_patch, num_latent, width,
):
    f32, bf16 = jnp.float32, jnp.bfloat16
    B, N, T, W = num_batch, num_patch, num_latent, width
    H = num_heads

    # ---- patch embedding: whole batch at once, M = B*N rows on the MXU ----
    pe = jnp.dot(patches_ref[...].astype(bf16), pin_w_ref[...],
                 preferred_element_type=f32) + pin_b_ref[...]
    pe = pe + jnp.concatenate([pos_ref[...]] * B, axis=0)             # (B*N, W)

    # ---- token stream, in vregs (no scratch): [patch tokens | latent tokens] ----
    x = jnp.concatenate([pe] + [lat_ref[...]] * B, axis=0)            # (B*S, W) f32

    bias = bias_ref[...]                                              # (B*S, B*S)

    # ---- residual attention blocks (pre-LN) ----
    for l in range(num_layers):
        h1 = _layernorm(x, ln1_w_ref[l], ln1_b_ref[l]).astype(bf16)
        attn = ao_b_ref[l]                                            # (1, W) broadcasts
        for hh in range(H):
            # per-head weights -> no lane-misaligned slices of a fused QKV output
            qh = jnp.dot(h1, wq_ref[l, hh], preferred_element_type=f32) + bq_ref[l, hh]
            kh = jnp.dot(h1, wk_ref[l, hh], preferred_element_type=f32) + bk_ref[l, hh]
            vh = jnp.dot(h1, wv_ref[l, hh], preferred_element_type=f32) + bv_ref[l, hh]
            # scale already folded into wq/bq at prep time
            s = jax.lax.dot_general(qh.astype(bf16), kh.astype(bf16),
                                    (((1,), (1,)), ((), ())),
                                    preferred_element_type=f32)       # (B*S, B*S)
            s = s + bias                                              # block-diag batch mask
            m = jnp.max(s, axis=-1, keepdims=True)
            p = jnp.exp(s - m)
            denom = jnp.sum(p, axis=-1, keepdims=True)
            oh = jnp.dot(p.astype(bf16), vh.astype(bf16),
                         preferred_element_type=f32)                  # (B*S, hd)
            # deferred softmax normalization -> EUP reciprocal, hd mults not S*S divides
            oh = oh * pl.reciprocal(denom, approx=True)
            attn = attn + jnp.dot(oh.astype(bf16), ao_w_ref[l, hh],
                                  preferred_element_type=f32)
        x = x + attn

        h2 = _layernorm(x, ln2_w_ref[l], ln2_b_ref[l]).astype(bf16)
        mm = jnp.dot(h2, m1_w_ref[l], preferred_element_type=f32) + m1_b_ref[l]
        mm = _gelu_tanh(mm).astype(bf16)
        mm = jnp.dot(mm, m2_w_ref[l], preferred_element_type=f32) + m2_b_ref[l]
        x = x + mm

    # ---- proj_out on latent tokens: LN -> Linear (val/gate split) -> GEGLU ----
    t = x[B * N: B * N + B * T, :]                  # (B*T, W), starts at 8-aligned row
    t = _layernorm(t, lnf_w_ref[...], lnf_b_ref[...]).astype(bf16)
    a = jnp.dot(t, po1v_ref[...], preferred_element_type=f32)
    g = jnp.dot(t, po1g_ref[...], preferred_element_type=f32)
    gg = a * _gelu_tanh(g)
    # final (inner -> 1) projection as broadcast-multiply + lane reduce (avoid N=1 MXU matmul)
    out_ref[...] = jnp.sum(gg * po2_ref[...], axis=-1, keepdims=True)   # (B*T, 1)


# --------------------------- one-time weight prep -----------------------------

_PREP_ORDER = [
    "pin_w", "pin_b", "pos", "lat",
    "ln1_w", "ln1_b", "wq", "bq", "wk", "bk", "wv", "bv",
    "ao_w", "ao_b", "ln2_w", "ln2_b",
    "m1_w", "m1_b", "m2_w", "m2_b",
    "lnf_w", "lnf_b", "po1v_w", "po1g_w", "po2_w",
]


def prepare_params(params, cfg):
    """One-time weight transform (not per-call work): per-head Q/K/V/out splits,
    attention 1/sqrt(hd) folded into the Q projection, GEGLU value/gate split,
    bf16 matmul weights (biases / LN params stay f32)."""
    W, H, L = cfg["width"], cfg["num_heads"], cfg["num_layers"]
    hd = W // H
    scale = hd ** (-0.5)
    bf16 = jnp.bfloat16

    def heads_w(w):   # (L, W, W) -> (L, H, W, hd)
        return w.reshape(L, W, H, hd).transpose(0, 2, 1, 3)

    def heads_b(b):   # (L, 1, W) -> (L, H, 1, hd)
        return b.reshape(L, 1, H, hd).transpose(0, 2, 1, 3)

    qkv_w, qkv_b = params["qkv_w"], params["qkv_b"]
    inner = params["po2_w"].shape[0]

    return {
        "pin_w": params["proj_in_w"].astype(bf16),
        "pin_b": params["proj_in_b"],
        "pos": params["pos"],
        "lat": params["lat"],
        "ln1_w": params["ln1_w"], "ln1_b": params["ln1_b"],
        "wq": (heads_w(qkv_w[:, :, 0:W]) * scale).astype(bf16),
        "bq": heads_b(qkv_b[:, :, 0:W]) * scale,
        "wk": heads_w(qkv_w[:, :, W:2 * W]).astype(bf16),
        "bk": heads_b(qkv_b[:, :, W:2 * W]),
        "wv": heads_w(qkv_w[:, :, 2 * W:3 * W]).astype(bf16),
        "bv": heads_b(qkv_b[:, :, 2 * W:3 * W]),
        "ao_w": params["ao_w"].reshape(L, H, hd, W).astype(bf16),
        "ao_b": params["ao_b"],
        "ln2_w": params["ln2_w"], "ln2_b": params["ln2_b"],
        "m1_w": params["m1_w"].astype(bf16), "m1_b": params["m1_b"],
        "m2_w": params["m2_w"].astype(bf16), "m2_b": params["m2_b"],
        "lnf_w": params["lnf_w"], "lnf_b": params["lnf_b"],
        "po1v_w": params["po1_w"][:, :inner].astype(bf16),
        "po1g_w": params["po1_w"][:, inner:].astype(bf16),
        "po2_w": params["po2_w"].reshape(1, inner),
    }


# ------------------------------ wrapper --------------------------------------

def vit_discriminator(x, prepped, cfg):
    patches = _patchify(x, cfg["patch_size"])                         # (B, N, P)
    B, N, P = patches.shape
    W, H, L = cfg["width"], cfg["num_heads"], cfg["num_layers"]
    T = cfg["num_latent_tokens"]

    patches_flat = patches.reshape(B * N, P)

    # Block-diagonal additive attention bias: tokens only attend within their
    # own batch element (token layout: [patch tokens b0..bB-1 | latent b0..bB-1]).
    ids = jnp.concatenate([jnp.repeat(jnp.arange(B, dtype=jnp.int32), N),
                           jnp.repeat(jnp.arange(B, dtype=jnp.int32), T)])
    attn_bias = jnp.where(ids[:, None] == ids[None, :], 0.0, -1e30).astype(jnp.float32)

    operands = [patches_flat, attn_bias] + [prepped[k] for k in _PREP_ORDER]

    def full_spec(arr):
        nd = arr.ndim
        return pl.BlockSpec(arr.shape, lambda i, _n=nd: (0,) * _n)

    kernel = functools.partial(
        vit_disc_kernel,
        num_layers=L, num_heads=H, num_batch=B, num_patch=N,
        num_latent=T, width=W,
    )

    # Single invocation: the whole (B*S, W) problem runs in one grid step, so every
    # matmul sees M = B*S rows and there is no per-step pipeline overhead.
    # TODO(synk): on v7x (2 TensorCores) with larger B, split a leading "parallel"
    # batch-block grid axis across cores; and for larger models, tile the layer
    # loop / weights instead of keeping all layers resident in VMEM.
    out = pl.pallas_call(
        kernel,
        out_shape=jax.ShapeDtypeStruct((B * T, 1), jnp.float32),
        grid_spec=pltpu.PrefetchScalarGridSpec(
            num_scalar_prefetch=0,
            grid=(1,),
            in_specs=[full_spec(a) for a in operands],
            out_specs=pl.BlockSpec((B * T, 1), lambda i: (0, 0)),
        ),
        compiler_params=pltpu.CompilerParams(
            dimension_semantics=("arbitrary",),
        ),
    )(*operands)
    return out.reshape(B, T, 1)


# ------------------------- pure-JAX reference (f32) ---------------------------

def reference_forward(x, p, cfg):
    patches = _patchify(x, cfg["patch_size"])
    W = cfg["width"]
    H = cfg["num_heads"]
    hd = W // H
    scale = hd ** (-0.5)

    def one(pb):
        x0 = pb @ p["proj_in_w"] + p["proj_in_b"] + p["pos"]
        xx = jnp.concatenate([x0, p["lat"]], axis=0)
        for l in range(cfg["num_layers"]):
            h = _layernorm(xx, p["ln1_w"][l], p["ln1_b"][l])
            qkv = h @ p["qkv_w"][l] + p["qkv_b"][l]
            q, k, v = qkv[:, :W], qkv[:, W:2 * W], qkv[:, 2 * W:]
            outs = []
            for hh in range(H):
                lo, hi = hh * hd, (hh + 1) * hd
                s = (q[:, lo:hi] * scale) @ k[:, lo:hi].T
                pmat = jax.nn.softmax(s, axis=-1)
                outs.append(pmat @ v[:, lo:hi])
            attn = jnp.concatenate(outs, axis=-1) @ p["ao_w"][l] + p["ao_b"][l]
            xx = xx + attn
            h2 = _layernorm(xx, p["ln2_w"][l], p["ln2_b"][l])
            m = _gelu_tanh(h2 @ p["m1_w"][l] + p["m1_b"][l]) @ p["m2_w"][l] + p["m2_b"][l]
            xx = xx + m
        t = xx[-cfg["num_latent_tokens"]:, :]
        t = _layernorm(t, p["lnf_w"], p["lnf_b"])
        u = t @ p["po1_w"]
        inner = p["po2_w"].shape[0]
        gg = u[:, :inner] * _gelu_tanh(u[:, inner:2 * inner])
        return gg @ p["po2_w"]

    return jax.vmap(one)(patches)


# ------------------------------ setup / main ---------------------------------

def make_params(key, cfg):
    W = cfg["width"]
    L = cfg["num_layers"]
    P = cfg["patch_dim"]
    N = cfg["grid_size"]
    T_lat = cfg["num_latent_tokens"]
    mlp_hidden = int(cfg["mlp_ratio"] * W)
    inner = int(cfg["mlp_ratio"] * (2.0 / 3.0) * W)
    inner = 32 * ((inner + 31) // 32)
    scale = W ** (-0.5)

    ks = list(jax.random.split(key, 16))
    nrm = lambda k, s: (0.02 * jax.random.normal(k, s)).astype(jnp.float32)

    params = {
        "proj_in_w": nrm(ks[0], (P, W)),
        "proj_in_b": jnp.zeros((1, W), jnp.float32),
        "pos": (scale * jax.random.normal(ks[1], (N, W))).astype(jnp.float32),
        "lat": (scale * jax.random.normal(ks[2], (T_lat, W))).astype(jnp.float32),
        "ln1_w": jnp.ones((L, 1, W), jnp.float32),
        "ln1_b": jnp.zeros((L, 1, W), jnp.float32),
        "qkv_w": nrm(ks[3], (L, W, 3 * W)),
        "qkv_b": jnp.zeros((L, 1, 3 * W), jnp.float32),
        "ao_w": nrm(ks[4], (L, W, W)),
        "ao_b": jnp.zeros((L, 1, W), jnp.float32),
        "ln2_w": jnp.ones((L, 1, W), jnp.float32),
        "ln2_b": jnp.zeros((L, 1, W), jnp.float32),
        "m1_w": nrm(ks[5], (L, W, mlp_hidden)),
        "m1_b": jnp.zeros((L, 1, mlp_hidden), jnp.float32),
        "m2_w": nrm(ks[6], (L, mlp_hidden, W)),
        "m2_b": jnp.zeros((L, 1, W), jnp.float32),
        "lnf_w": jnp.ones((1, W), jnp.float32),
        "lnf_b": jnp.zeros((1, W), jnp.float32),
        "po1_w": nrm(ks[7], (W, 2 * inner)),
        "po2_w": nrm(ks[8], (inner, 1)),
    }
    return params


if __name__ == "__main__":
    # Small, module-consistent shapes.
    in_grid = (4, 8, 8)
    patch_size = (2, 4, 4)
    in_channels = 3
    out_tokens = 1
    width, num_layers, num_heads, mlp_ratio = get_model_dims("tiny")

    grid = [a // b for a, b in zip(in_grid, patch_size)]
    cfg = {
        "patch_size": patch_size,
        "grid_size": math.prod(grid),                       # 8 patch tokens
        "patch_dim": in_channels * math.prod(patch_size),   # 96
        "width": width,
        "num_layers": num_layers,
        "num_heads": num_heads,
        "mlp_ratio": mlp_ratio,
        "num_latent_tokens": out_tokens,
    }

    key = jax.random.PRNGKey(0)
    k_x, k_p = jax.random.split(key)
    x = jax.random.normal(k_x, (2, in_channels) + in_grid, jnp.float32)  # [B,C,T,H,W]
    params = make_params(k_p, cfg)
    prepped = prepare_params(params, cfg)        # one-time weight transform

    out = vit_discriminator(x, prepped, cfg)
    out = jax.block_until_ready(out)

    ref = jax.block_until_ready(reference_forward(x, params, cfg))
    assert out.shape == (2, out_tokens, 1), out.shape
    # bf16 matmul operands + approx reciprocal in the kernel vs. an f32 reference.
    assert jnp.allclose(out, ref, atol=2e-2, rtol=2e-2), (out, ref)

    print("KERNEL_OK")
</pallas_src>

<mosaic_0001>
module attributes {stable_mosaic.version = 11 : i64} {
  func.func @vit_disc_kernel(%arg0: i32, %arg1: memref<16x96xf32, #tpu.memory_space<vmem>>, %arg2: memref<18x18xf32, #tpu.memory_space<vmem>>, %arg3: memref<96x64xbf16, #tpu.memory_space<vmem>>, %arg4: memref<1x64xf32, #tpu.memory_space<vmem>>, %arg5: memref<8x64xf32, #tpu.memory_space<vmem>>, %arg6: memref<1x64xf32, #tpu.memory_space<vmem>>, %arg7: memref<2x1x64xf32, #tpu.memory_space<vmem>>, %arg8: memref<2x1x64xf32, #tpu.memory_space<vmem>>, %arg9: memref<2x2x64x32xbf16, #tpu.memory_space<vmem>>, %arg10: memref<2x2x1x32xf32, #tpu.memory_space<vmem>>, %arg11: memref<2x2x64x32xbf16, #tpu.memory_space<vmem>>, %arg12: memref<2x2x1x32xf32, #tpu.memory_space<vmem>>, %arg13: memref<2x2x64x32xbf16, #tpu.memory_space<vmem>>, %arg14: memref<2x2x1x32xf32, #tpu.memory_space<vmem>>, %arg15: memref<2x2x32x64xbf16, #tpu.memory_space<vmem>>, %arg16: memref<2x1x64xf32, #tpu.memory_space<vmem>>, %arg17: memref<2x1x64xf32, #tpu.memory_space<vmem>>, %arg18: memref<2x1x64xf32, #tpu.memory_space<vmem>>, %arg19: memref<2x64x256xbf16, #tpu.memory_space<vmem>>, %arg20: memref<2x1x256xf32, #tpu.memory_space<vmem>>, %arg21: memref<2x256x64xbf16, #tpu.memory_space<vmem>>, %arg22: memref<2x1x64xf32, #tpu.memory_space<vmem>>, %arg23: memref<1x64xf32, #tpu.memory_space<vmem>>, %arg24: memref<1x64xf32, #tpu.memory_space<vmem>>, %arg25: memref<64x192xbf16, #tpu.memory_space<vmem>>, %arg26: memref<64x192xbf16, #tpu.memory_space<vmem>>, %arg27: memref<1x192xf32, #tpu.memory_space<vmem>>, %arg28: memref<2x1xf32, #tpu.memory_space<vmem>>) attributes {dimension_semantics = [#tpu.dimension_semantics<arbitrary>], iteration_bounds = array<i64: 1>, scalar_prefetch = 0 : i64, scratch_operands = 0 : i64, tpu.core_type = #tpu.core_type<tc>, window_params = [{pipeline_mode = #tpu.pipeline_mode<synchronous>, transform_indices = @transform_0, window_bounds = array<i64: 16, 96>}, {pipeline_mode = #tpu.pipeline_mode<synchronous>, transform_indices = @transform_1, window_bounds = array<i64: 18, 18>}, {pipeline_mode = #tpu.pipeline_mode<synchronous>, transform_indices = @transform_2, window_bounds = array<i64: 96, 64>}, {pipeline_mode = #tpu.pipeline_mode<synchronous>, transform_indices = @transform_3, window_bounds = array<i64: 1, 64>}, {pipeline_mode = #tpu.pipeline_mode<synchronous>, transform_indices = @transform_4, window_bounds = array<i64: 8, 64>}, {pipeline_mode = #tpu.pipeline_mode<synchronous>, transform_indices = @transform_5, window_bounds = array<i64: 1, 64>}, {pipeline_mode = #tpu.pipeline_mode<synchronous>, transform_indices = @transform_6, window_bounds = array<i64: 2, 1, 64>}, {pipeline_mode = #tpu.pipeline_mode<synchronous>, transform_indices = @transform_7, window_bounds = array<i64: 2, 1, 64>}, {pipeline_mode = #tpu.pipeline_mode<synchronous>, transform_indices = @transform_8, window_bounds = array<i64: 2, 2, 64, 32>}, {pipeline_mode = #tpu.pipeline_mode<synchronous>, transform_indices = @transform_9, window_bounds = array<i64: 2, 2, 1, 32>}, {pipeline_mode = #tpu.pipeline_mode<synchronous>, transform_indices = @transform_10, window_bounds = array<i64: 2, 2, 64, 32>}, {pipeline_mode = #tpu.pipeline_mode<synchronous>, transform_indices = @transform_11, window_bounds = array<i64: 2, 2, 1, 32>}, {pipeline_mode = #tpu.pipeline_mode<synchronous>, transform_indices = @transform_12, window_bounds = array<i64: 2, 2, 64, 32>}, {pipeline_mode = #tpu.pipeline_mode<synchronous>, transform_indices = @transform_13, window_bounds = array<i64: 2, 2, 1, 32>}, {pipeline_mode = #tpu.pipeline_mode<synchronous>, transform_indices = @transform_14, window_bounds = array<i64: 2, 2, 32, 64>}, {pipeline_mode = #tpu.pipeline_mode<synchronous>, transform_indices = @transform_15, window_bounds = array<i64: 2, 1, 64>}, {pipeline_mode = #tpu.pipeline_mode<synchronous>, transform_indices = @transform_16, window_bounds = array<i64: 2, 1, 64>}, {pipeline_mode = #tpu.pipeline_mode<synchronous>, transform_indices = @transform_17, window_bounds = array<i64: 2, 1, 64>}, {pipeline_mode = #tpu.pipeline_mode<synchronous>, transform_indices = @transform_18, window_bounds = array<i64: 2, 64, 256>}, {pipeline_mode = #tpu.pipeline_mode<synchronous>, transform_indices = @transform_19, window_bounds = array<i64: 2, 1, 256>}, {pipeline_mode = #tpu.pipeline_mode<synchronous>, transform_indices = @transform_20, window_bounds = array<i64: 2, 256, 64>}, {pipeline_mode = #tpu.pipeline_mode<synchronous>, transform_indices = @transform_21, window_bounds = array<i64: 2, 1, 64>}, {pipeline_mode = #tpu.pipeline_mode<synchronous>, transform_indices = @transform_22, window_bounds = array<i64: 1, 64>}, {pipeline_mode = #tpu.pipeline_mode<synchronous>, transform_indices = @transform_23, window_bounds = array<i64: 1, 64>}, {pipeline_mode = #tpu.pipeline_mode<synchronous>, transform_indices = @transform_24, window_bounds = array<i64: 64, 192>}, {pipeline_mode = #tpu.pipeline_mode<synchronous>, transform_indices = @transform_25, window_bounds = array<i64: 64, 192>}, {pipeline_mode = #tpu.pipeline_mode<synchronous>, transform_indices = @transform_26, window_bounds = array<i64: 1, 192>}, {pipeline_mode = #tpu.pipeline_mode<synchronous>, transform_indices = @transform_27, window_bounds = array<i64: 2, 1>}]} {
    %c0 = arith.constant 0 : index
    %c0_0 = arith.constant 0 : index
    %0 = vector.load %arg1[%c0, %c0_0] : memref<16x96xf32, #tpu.memory_space<vmem>>, vector<16x96xf32>
    %1 = arith.truncf %0 : vector<16x96xf32> to vector<16x96xbf16>
    %c0_1 = arith.constant 0 : index
    %c0_2 = arith.constant 0 : index
    %2 = vector.load %arg3[%c0_1, %c0_2] : memref<96x64xbf16, #tpu.memory_space<vmem>>, vector<96x64xbf16>
    %cst = arith.constant dense<0.000000e+00> : vector<16x64xf32>
    %3 = tpu.matmul %1, %2, %cst {dimension_numbers = #tpu.dot_dimension_numbers<[1], [0], [0], [1], [0, 0, 1, 1], [], []>} : vector<16x96xbf16>, vector<96x64xbf16>, vector<16x64xf32> -> vector<16x64xf32>
    %c0_3 = arith.constant 0 : index
    %c0_4 = arith.constant 0 : index
    %4 = vector.load %arg4[%c0_3, %c0_4] : memref<1x64xf32, #tpu.memory_space<vmem>>, vector<1x64xf32>
    %5 = vector.broadcast %4 : vector<1x64xf32> to vector<16x64xf32>
    %6 = arith.addf %3, %5 : vector<16x64xf32>
    %c0_5 = arith.constant 0 : index
    %c0_6 = arith.constant 0 : index
    %7 = vector.load %arg5[%c0_5, %c0_6] : memref<8x64xf32, #tpu.memory_space<vmem>>, vector<8x64xf32>
    %8 = tpu.concatenate %7, %7 in 0 : vector<8x64xf32>, vector<8x64xf32> -> vector<16x64xf32>
    %9 = arith.addf %6, %8 : vector<16x64xf32>
    %c0_7 = arith.constant 0 : index
    %c0_8 = arith.constant 0 : index
    %10 = vector.load %arg6[%c0_7, %c0_8] : memref<1x64xf32, #tpu.memory_space<vmem>>, vector<1x64xf32>
    %11 = tpu.concatenate %9, %10, %10 in 0 : vector<16x64xf32>, vector<1x64xf32>, vector<1x64xf32> -> vector<18x64xf32>
    %c0_9 = arith.constant 0 : index
    %c0_10 = arith.constant 0 : index
    %12 = vector.load %arg2[%c0_9, %c0_10] : memref<18x18xf32, #tpu.memory_space<vmem>>, vector<18x18xf32>
    %c0_11 = arith.constant 0 : index
    %c0_12 = arith.constant 0 : index
    %c0_13 = arith.constant 0 : index
    %13 = vector.load %arg7[%c0_11, %c0_12, %c0_13] : memref<2x1x64xf32, #tpu.memory_space<vmem>>, vector<1x1x64xf32>
    %14 = vector.shape_cast %13 : vector<1x1x64xf32> to vector<1x64xf32>
    %c0_14 = arith.constant 0 : index
    %c0_15 = arith.constant 0 : index
    %c0_16 = arith.constant 0 : index
    %15 = vector.load %arg8[%c0_14, %c0_15, %c0_16] : memref<2x1x64xf32, #tpu.memory_space<vmem>>, vector<1x1x64xf32>
    %16 = vector.shape_cast %15 : vector<1x1x64xf32> to vector<1x64xf32>
    %cst_17 = arith.constant dense<0.000000e+00> : vector<18xf32>
    %17 = vector.multi_reduction <add>, %11, %cst_17 [1] : vector<18x64xf32> to vector<18xf32>
    %18 = vector.shape_cast %17 : vector<18xf32> to vector<18x1xf32>
    %cst_18 = arith.constant 6.400000e+01 : f32
    %19 = vector.broadcast %cst_18 : f32 to vector<18x1xf32>
    %20 = arith.divf %18, %19 : vector<18x1xf32>
    %21 = vector.broadcast %20 : vector<18x1xf32> to vector<18x64xf32>
    %22 = arith.subf %11, %21 : vector<18x64xf32>
    %23 = arith.mulf %22, %22 : vector<18x64xf32>
    %cst_19 = arith.constant dense<0.000000e+00> : vector<18xf32>
    %24 = vector.multi_reduction <add>, %23, %cst_19 [1] : vector<18x64xf32> to vector<18xf32>
    %25 = vector.shape_cast %24 : vector<18xf32> to vector<18x1xf32>
    %cst_20 = arith.constant 6.400000e+01 : f32
    %26 = vector.broadcast %cst_20 : f32 to vector<18x1xf32>
    %27 = arith.divf %25, %26 : vector<18x1xf32>
    %28 = vector.broadcast %20 : vector<18x1xf32> to vector<18x64xf32>
    %29 = arith.subf %11, %28 : vector<18x64xf32>
    %cst_21 = arith.constant 9.99999974E-6 : f32
    %30 = vector.broadcast %cst_21 : f32 to vector<18x1xf32>
    %31 = arith.addf %27, %30 : vector<18x1xf32>
    %32 = math.rsqrt %31 : vector<18x1xf32>
    %33 = vector.broadcast %32 : vector<18x1xf32> to vector<18x64xf32>
    %34 = arith.mulf %29, %33 : vector<18x64xf32>
    %35 = vector.broadcast %14 : vector<1x64xf32> to vector<18x64xf32>
    %36 = arith.mulf %34, %35 : vector<18x64xf32>
    %37 = vector.broadcast %16 : vector<1x64xf32> to vector<18x64xf32>
    %38 = arith.addf %36, %37 : vector<18x64xf32>
    %39 = arith.truncf %38 : vector<18x64xf32> to vector<18x64xbf16>
    %c0_22 = arith.constant 0 : index
    %c0_23 = arith.constant 0 : index
    %c0_24 = arith.constant 0 : index
    %40 = vector.load %arg16[%c0_22, %c0_23, %c0_24] : memref<2x1x64xf32, #tpu.memory_space<vmem>>, vector<1x1x64xf32>
    %41 = vector.shape_cast %40 : vector<1x1x64xf32> to vector<1x64xf32>
    %c0_25 = arith.constant 0 : index
    %c0_26 = arith.constant 0 : index
    %c0_27 = arith.constant 0 : index
    %c0_28 = arith.constant 0 : index
    %42 = vector.load %arg9[%c0_25, %c0_26, %c0_27, %c0_28] : memref<2x2x64x32xbf16, #tpu.memory_space<vmem>>, vector<1x1x64x32xbf16>
    %43 = vector.shape_cast %42 : vector<1x1x64x32xbf16> to vector<64x32xbf16>
    %cst_29 = arith.constant dense<0.000000e+00> : vector<18x32xf32>
    %44 = tpu.matmul %39, %43, %cst_29 {dimension_numbers = #tpu.dot_dimension_numbers<[1], [0], [0], [1], [0, 0, 1, 1], [], []>} : vector<18x64xbf16>, vector<64x32xbf16>, vector<18x32xf32> -> vector<18x32xf32>
    %c0_30 = arith.constant 0 : index
    %c0_31 = arith.constant 0 : index
    %c0_32 = arith.constant 0 : index
    %c0_33 = arith.constant 0 : index
    %45 = vector.load %arg10[%c0_30, %c0_31, %c0_32, %c0_33] : memref<2x2x1x32xf32, #tpu.memory_space<vmem>>, vector<1x1x1x32xf32>
    %46 = vector.shape_cast %45 : vector<1x1x1x32xf32> to vector<1x32xf32>
    %47 = vector.broadcast %46 : vector<1x32xf32> to vector<18x32xf32>
    %48 = arith.addf %44, %47 : vector<18x32xf32>
    %c0_34 = arith.constant 0 : index
    %c0_35 = arith.constant 0 : index
    %c0_36 = arith.constant 0 : index
    %c0_37 = arith.constant 0 : index
    %49 = vector.load %arg11[%c0_34, %c0_35, %c0_36, %c0_37] : memref<2x2x64x32xbf16, #tpu.memory_space<vmem>>, vector<1x1x64x32xbf16>
    %50 = vector.shape_cast %49 : vector<1x1x64x32xbf16> to vector<64x32xbf16>
    %cst_38 = arith.constant dense<0.000000e+00> : vector<18x32xf32>
    %51 = tpu.matmul %39, %50, %cst_38 {dimension_numbers = #tpu.dot_dimension_numbers<[1], [0], [0], [1], [0, 0, 1, 1], [], []>} : vector<18x64xbf16>, vector<64x32xbf16>, vector<18x32xf32> -> vector<18x32xf32>
    %c0_39 = arith.constant 0 : index
    %c0_40 = arith.constant 0 : index
    %c0_41 = arith.constant 0 : index
    %c0_42 = arith.constant 0 : index
    %52 = vector.load %arg12[%c0_39, %c0_40, %c0_41, %c0_42] : memref<2x2x1x32xf32, #tpu.memory_space<vmem>>, vector<1x1x1x32xf32>
    %53 = vector.shape_cast %52 : vector<1x1x1x32xf32> to vector<1x32xf32>
    %54 = vector.broadcast %53 : vector<1x32xf32> to vector<18x32xf32>
    %55 = arith.addf %51, %54 : vector<18x32xf32>
    %c0_43 = arith.constant 0 : index
    %c0_44 = arith.constant 0 : index
    %c0_45 = arith.constant 0 : index
    %c0_46 = arith.constant 0 : index
    %56 = vector.load %arg13[%c0_43, %c0_44, %c0_45, %c0_46] : memref<2x2x64x32xbf16, #tpu.memory_space<vmem>>, vector<1x1x64x32xbf16>
    %57 = vector.shape_cast %56 : vector<1x1x64x32xbf16> to vector<64x32xbf16>
    %cst_47 = arith.constant dense<0.000000e+00> : vector<18x32xf32>
    %58 = tpu.matmul %39, %57, %cst_47 {dimension_numbers = #tpu.dot_dimension_numbers<[1], [0], [0], [1], [0, 0, 1, 1], [], []>} : vector<18x64xbf16>, vector<64x32xbf16>, vector<18x32xf32> -> vector<18x32xf32>
    %c0_48 = arith.constant 0 : index
    %c0_49 = arith.constant 0 : index
    %c0_50 = arith.constant 0 : index
    %c0_51 = arith.constant 0 : index
    %59 = vector.load %arg14[%c0_48, %c0_49, %c0_50, %c0_51] : memref<2x2x1x32xf32, #tpu.memory_space<vmem>>, vector<1x1x1x32xf32>
    %60 = vector.shape_cast %59 : vector<1x1x1x32xf32> to vector<1x32xf32>
    %61 = vector.broadcast %60 : vector<1x32xf32> to vector<18x32xf32>
    %62 = arith.addf %58, %61 : vector<18x32xf32>
    %63 = arith.truncf %48 : vector<18x32xf32> to vector<18x32xbf16>
    %64 = arith.truncf %55 : vector<18x32xf32> to vector<18x32xbf16>
    %cst_52 = arith.constant dense<0.000000e+00> : vector<18x18xf32>
    %65 = tpu.matmul %63, %64, %cst_52 {dimension_numbers = #tpu.dot_dimension_numbers<[1], [1], [0], [0], [0, 0, 1, 0], [], []>} : vector<18x32xbf16>, vector<18x32xbf16>, vector<18x18xf32> -> vector<18x18xf32>
    %66 = arith.addf %65, %12 : vector<18x18xf32>
    %cst_53 = arith.constant dense<0xFF800000> : vector<18xf32>
    %67 = vector.multi_reduction <maximumf>, %66, %cst_53 [1] : vector<18x18xf32> to vector<18xf32>
    %68 = vector.shape_cast %67 : vector<18xf32> to vector<18x1xf32>
    %69 = vector.broadcast %68 : vector<18x1xf32> to vector<18x18xf32>
    %70 = arith.subf %66, %69 : vector<18x18xf32>
    %71 = math.exp %70 : vector<18x18xf32>
    %cst_54 = arith.constant dense<0.000000e+00> : vector<18xf32>
    %72 = vector.multi_reduction <add>, %71, %cst_54 [1] : vector<18x18xf32> to vector<18xf32>
    %73 = vector.shape_cast %72 : vector<18xf32> to vector<18x1xf32>
    %74 = arith.truncf %71 : vector<18x18xf32> to vector<18x18xbf16>
    %75 = arith.truncf %62 : vector<18x32xf32> to vector<18x32xbf16>
    %cst_55 = arith.constant dense<0.000000e+00> : vector<18x32xf32>
    %76 = tpu.matmul %74, %75, %cst_55 {dimension_numbers = #tpu.dot_dimension_numbers<[1], [0], [0], [1], [0, 0, 1, 1], [], []>} : vector<18x18xbf16>, vector<18x32xbf16>, vector<18x32xf32> -> vector<18x32xf32>
    %77 = tpu.reciprocal %73 {approx = true} : vector<18x1xf32> -> vector<18x1xf32>
    %78 = vector.broadcast %77 : vector<18x1xf32> to vector<18x32xf32>
    %79 = arith.mulf %76, %78 : vector<18x32xf32>
    %80 = arith.truncf %79 : vector<18x32xf32> to vector<18x32xbf16>
    %c0_56 = arith.constant 0 : index
    %c0_57 = arith.constant 0 : index
    %c0_58 = arith.constant 0 : index
    %c0_59 = arith.constant 0 : index
    %81 = vector.load %arg15[%c0_56, %c0_57, %c0_58, %c0_59] : memref<2x2x32x64xbf16, #tpu.memory_space<vmem>>, vector<1x1x32x64xbf16>
    %82 = vector.shape_cast %81 : vector<1x1x32x64xbf16> to vector<32x64xbf16>
    %cst_60 = arith.constant dense<0.000000e+00> : vector<18x64xf32>
    %83 = tpu.matmul %80, %82, %cst_60 {dimension_numbers = #tpu.dot_dimension_numbers<[1], [0], [0], [1], [0, 0, 1, 1], [], []>} : vector<18x32xbf16>, vector<32x64xbf16>, vector<18x64xf32> -> vector<18x64xf32>
    %84 = vector.broadcast %41 : vector<1x64xf32> to vector<18x64xf32>
    %85 = arith.addf %84, %83 : vector<18x64xf32>
    %c0_61 = arith.constant 0 : index
    %c1 = arith.constant 1 : index
    %c0_62 = arith.constant 0 : index
    %c0_63 = arith.constant 0 : index
    %86 = vector.load %arg9[%c0_61, %c1, %c0_62, %c0_63] : memref<2x2x64x32xbf16, #tpu.memory_space<vmem>>, vector<1x1x64x32xbf16>
    %87 = vector.shape_cast %86 : vector<1x1x64x32xbf16> to vector<64x32xbf16>
    %cst_64 = arith.constant dense<0.000000e+00> : vector<18x32xf32>
    %88 = tpu.matmul %39, %87, %cst_64 {dimension_numbers = #tpu.dot_dimension_numbers<[1], [0], [0], [1], [0, 0, 1, 1], [], []>} : vector<18x64xbf16>, vector<64x32xbf16>, vector<18x32xf32> -> vector<18x32xf32>
    %c0_65 = arith.constant 0 : index
    %c1_66 = arith.constant 1 : index
    %c0_67 = arith.constant 0 : index
    %c0_68 = arith.constant 0 : index
    %89 = vector.load %arg10[%c0_65, %c1_66, %c0_67, %c0_68] : memref<2x2x1x32xf32, #tpu.memory_space<vmem>>, vector<1x1x1x32xf32>
    %90 = vector.shape_cast %89 : vector<1x1x1x32xf32> to vector<1x32xf32>
    %91 = vector.broadcast %90 : vector<1x32xf32> to vector<18x32xf32>
    %92 = arith.addf %88, %91 : vector<18x32xf32>
    %c0_69 = arith.constant 0 : index
    %c1_70 = arith.constant 1 : index
    %c0_71 = arith.constant 0 : index
    %c0_72 = arith.constant 0 : index
    %93 = vector.load %arg11[%c0_69, %c1_70, %c0_71, %c0_72] : memref<2x2x64x32xbf16, #tpu.memory_space<vmem>>, vector<1x1x64x32xbf16>
    %94 = vector.shape_cast %93 : vector<1x1x64x32xbf16> to vector<64x32xbf16>
    %cst_73 = arith.constant dense<0.000000e+00> : vector<18x32xf32>
    %95 = tpu.matmul %39, %94, %cst_73 {dimension_numbers = #tpu.dot_dimension_numbers<[1], [0], [0], [1], [0, 0, 1, 1], [], []>} : vector<18x64xbf16>, vector<64x32xbf16>, vector<18x32xf32> -> vector<18x32xf32>
    %c0_74 = arith.constant 0 : index
    %c1_75 = arith.constant 1 : index
    %c0_76 = arith.constant 0 : index
    %c0_77 = arith.constant 0 : index
    %96 = vector.load %arg12[%c0_74, %c1_75, %c0_76, %c0_77] : memref<2x2x1x32xf32, #tpu.memory_space<vmem>>, vector<1x1x1x32xf32>
    %97 = vector.shape_cast %96 : vector<1x1x1x32xf32> to vector<1x32xf32>
    %98 = vector.broadcast %97 : vector<1x32xf32> to vector<18x32xf32>
    %99 = arith.addf %95, %98 : vector<18x32xf32>
    %c0_78 = arith.constant 0 : index
    %c1_79 = arith.constant 1 : index
    %c0_80 = arith.constant 0 : index
    %c0_81 = arith.constant 0 : index
    %100 = vector.load %arg13[%c0_78, %c1_79, %c0_80, %c0_81] : memref<2x2x64x32xbf16, #tpu.memory_space<vmem>>, vector<1x1x64x32xbf16>
    %101 = vector.shape_cast %100 : vector<1x1x64x32xbf16> to vector<64x32xbf16>
    %cst_82 = arith.constant dense<0.000000e+00> : vector<18x32xf32>
    %102 = tpu.matmul %39, %101, %cst_82 {dimension_numbers = #tpu.dot_dimension_numbers<[1], [0], [0], [1], [0, 0, 1, 1], [], []>} : vector<18x64xbf16>, vector<64x32xbf16>, vector<18x32xf32> -> vector<18x32xf32>
    %c0_83 = arith.constant 0 : index
    %c1_84 = arith.constant 1 : index
    %c0_85 = arith.constant 0 : index
    %c0_86 = arith.constant 0 : index
    %103 = vector.load %arg14[%c0_83, %c1_84, %c0_85, %c0_86] : memref<2x2x1x32xf32, #tpu.memory_space<vmem>>, vector<1x1x1x32xf32>
    %104 = vector.shape_cast %103 : vector<1x1x1x32xf32> to vector<1x32xf32>
    %105 = vector.broadcast %104 : vector<1x32xf32> to vector<18x32xf32>
    %106 = arith.addf %102, %105 : vector<18x32xf32>
    %107 = arith.truncf %92 : vector<18x32xf32> to vector<18x32xbf16>
    %108 = arith.truncf %99 : vector<18x32xf32> to vector<18x32xbf16>
    %cst_87 = arith.constant dense<0.000000e+00> : vector<18x18xf32>
    %109 = tpu.matmul %107, %108, %cst_87 {dimension_numbers = #tpu.dot_dimension_numbers<[1], [1], [0], [0], [0, 0, 1, 0], [], []>} : vector<18x32xbf16>, vector<18x32xbf16>, vector<18x18xf32> -> vector<18x18xf32>
    %110 = arith.addf %109, %12 : vector<18x18xf32>
    %cst_88 = arith.constant dense<0xFF800000> : vector<18xf32>
    %111 = vector.multi_reduction <maximumf>, %110, %cst_88 [1] : vector<18x18xf32> to vector<18xf32>
    %112 = vector.shape_cast %111 : vector<18xf32> to vector<18x1xf32>
    %113 = vector.broadcast %112 : vector<18x1xf32> to vector<18x18xf32>
    %114 = arith.subf %110, %113 : vector<18x18xf32>
    %115 = math.exp %114 : vector<18x18xf32>
    %cst_89 = arith.constant dense<0.000000e+00> : vector<18xf32>
    %116 = vector.multi_reduction <add>, %115, %cst_89 [1] : vector<18x18xf32> to vector<18xf32>
    %117 = vector.shape_cast %116 : vector<18xf32> to vector<18x1xf32>
    %118 = arith.truncf %115 : vector<18x18xf32> to vector<18x18xbf16>
    %119 = arith.truncf %106 : vector<18x32xf32> to vector<18x32xbf16>
    %cst_90 = arith.constant dense<0.000000e+00> : vector<18x32xf32>
    %120 = tpu.matmul %118, %119, %cst_90 {dimension_numbers = #tpu.dot_dimension_numbers<[1], [0], [0], [1], [0, 0, 1, 1], [], []>} : vector<18x18xbf16>, vector<18x32xbf16>, vector<18x32xf32> -> vector<18x32xf32>
    %121 = tpu.reciprocal %117 {approx = true} : vector<18x1xf32> -> vector<18x1xf32>
    %122 = vector.broadcast %121 : vector<18x1xf32> to vector<18x32xf32>
    %123 = arith.mulf %120, %122 : vector<18x32xf32>
    %124 = arith.truncf %123 : vector<18x32xf32> to vector<18x32xbf16>
    %c0_91 = arith.constant 0 : index
    %c1_92 = arith.constant 1 : index
    %c0_93 = arith.constant 0 : index
    %c0_94 = arith.constant 0 : index
    %125 = vector.load %arg15[%c0_91, %c1_92, %c0_93, %c0_94] : memref<2x2x32x64xbf16, #tpu.memory_space<vmem>>, vector<1x1x32x64xbf16>
    %126 = vector.shape_cast %125 : vector<1x1x32x64xbf16> to vector<32x64xbf16>
    %cst_95 = arith.constant dense<0.000000e+00> : vector<18x64xf32>
    %127 = tpu.matmul %124, %126, %cst_95 {dimension_numbers = #tpu.dot_dimension_numbers<[1], [0], [0], [1], [0, 0, 1, 1], [], []>} : vector<18x32xbf16>, vector<32x64xbf16>, vector<18x64xf32> -> vector<18x64xf32>
    %128 = arith.addf %85, %127 : vector<18x64xf32>
    %129 = arith.addf %11, %128 : vector<18x64xf32>
    %c0_96 = arith.constant 0 : index
    %c0_97 = arith.constant 0 : index
    %c0_98 = arith.constant 0 : index
    %130 = vector.load %arg17[%c0_96, %c0_97, %c0_98] : memref<2x1x64xf32, #tpu.memory_space<vmem>>, vector<1x1x64xf32>
    %131 = vector.shape_cast %130 : vector<1x1x64xf32> to vector<1x64xf32>
    %c0_99 = arith.constant 0 : index
    %c0_100 = arith.constant 0 : index
    %c0_101 = arith.constant 0 : index
    %132 = vector.load %arg18[%c0_99, %c0_100, %c0_101] : memref<2x1x64xf32, #tpu.memory_space<vmem>>, vector<1x1x64xf32>
    %133 = vector.shape_cast %132 : vector<1x1x64xf32> to vector<1x64xf32>
    %cst_102 = arith.constant dense<0.000000e+00> : vector<18xf32>
    %134 = vector.multi_reduction <add>, %129, %cst_102 [1] : vector<18x64xf32> to vector<18xf32>
    %135 = vector.shape_cast %134 : vector<18xf32> to vector<18x1xf32>
    %cst_103 = arith.constant 6.400000e+01 : f32
    %136 = vector.broadcast %cst_103 : f32 to vector<18x1xf32>
    %137 = arith.divf %135, %136 : vector<18x1xf32>
    %138 = vector.broadcast %137 : vector<18x1xf32> to vector<18x64xf32>
    %139 = arith.subf %129, %138 : vector<18x64xf32>
    %140 = arith.mulf %139, %139 : vector<18x64xf32>
    %cst_104 = arith.constant dense<0.000000e+00> : vector<18xf32>
    %141 = vector.multi_reduction <add>, %140, %cst_104 [1] : vector<18x64xf32> to vector<18xf32>
    %142 = vector.shape_cast %141 : vector<18xf32> to vector<18x1xf32>
    %cst_105 = arith.constant 6.400000e+01 : f32
    %143 = vector.broadcast %cst_105 : f32 to vector<18x1xf32>
    %144 = arith.divf %142, %143 : vector<18x1xf32>
    %145 = vector.broadcast %137 : vector<18x1xf32> to vector<18x64xf32>
    %146 = arith.subf %129, %145 : vector<18x64xf32>
    %cst_106 = arith.constant 9.99999974E-6 : f32
    %147 = vector.broadcast %cst_106 : f32 to vector<18x1xf32>
    %148 = arith.addf %144, %147 : vector<18x1xf32>
    %149 = math.rsqrt %148 : vector<18x1xf32>
    %150 = vector.broadcast %149 : vector<18x1xf32> to vector<18x64xf32>
    %151 = arith.mulf %146, %150 : vector<18x64xf32>
    %152 = vector.broadcast %131 : vector<1x64xf32> to vector<18x64xf32>
    %153 = arith.mulf %151, %152 : vector<18x64xf32>
    %154 = vector.broadcast %133 : vector<1x64xf32> to vector<18x64xf32>
    %155 = arith.addf %153, %154 : vector<18x64xf32>
    %156 = arith.truncf %155 : vector<18x64xf32> to vector<18x64xbf16>
    %c0_107 = arith.constant 0 : index
    %c0_108 = arith.constant 0 : index
    %c0_109 = arith.constant 0 : index
    %157 = vector.load %arg19[%c0_107, %c0_108, %c0_109] : memref<2x64x256xbf16, #tpu.memory_space<vmem>>, vector<1x64x256xbf16>
    %158 = vector.shape_cast %157 : vector<1x64x256xbf16> to vector<64x256xbf16>
    %cst_110 = arith.constant dense<0.000000e+00> : vector<18x256xf32>
    %159 = tpu.matmul %156, %158, %cst_110 {dimension_numbers = #tpu.dot_dimension_numbers<[1], [0], [0], [1], [0, 0, 1, 1], [], []>} : vector<18x64xbf16>, vector<64x256xbf16>, vector<18x256xf32> -> vector<18x256xf32>
    %c0_111 = arith.constant 0 : index
    %c0_112 = arith.constant 0 : index
    %c0_113 = arith.constant 0 : index
    %160 = vector.load %arg20[%c0_111, %c0_112, %c0_113] : memref<2x1x256xf32, #tpu.memory_space<vmem>>, vector<1x1x256xf32>
    %161 = vector.shape_cast %160 : vector<1x1x256xf32> to vector<1x256xf32>
    %162 = vector.broadcast %161 : vector<1x256xf32> to vector<18x256xf32>
    %163 = arith.addf %159, %162 : vector<18x256xf32>
    %cst_114 = arith.constant 5.000000e-01 : f32
    %164 = vector.broadcast %cst_114 : f32 to vector<18x256xf32>
    %165 = arith.mulf %164, %163 : vector<18x256xf32>
    %cst_115 = arith.constant 4.471500e-02 : f32
    %166 = vector.broadcast %cst_115 : f32 to vector<18x256xf32>
    %167 = arith.mulf %166, %163 : vector<18x256xf32>
    %168 = arith.mulf %167, %163 : vector<18x256xf32>
    %169 = arith.mulf %168, %163 : vector<18x256xf32>
    %170 = arith.addf %163, %169 : vector<18x256xf32>
    %cst_116 = arith.constant 0.797884583 : f32
    %171 = vector.broadcast %cst_116 : f32 to vector<18x256xf32>
    %172 = arith.mulf %171, %170 : vector<18x256xf32>
    %173 = math.tanh %172 : vector<18x256xf32>
    %cst_117 = arith.constant 1.000000e+00 : f32
    %174 = vector.broadcast %cst_117 : f32 to vector<18x256xf32>
    %175 = arith.addf %174, %173 : vector<18x256xf32>
    %176 = arith.mulf %165, %175 : vector<18x256xf32>
    %177 = arith.truncf %176 : vector<18x256xf32> to vector<18x256xbf16>
    %c0_118 = arith.constant 0 : index
    %c0_119 = arith.constant 0 : index
    %c0_120 = arith.constant 0 : index
    %178 = vector.load %arg21[%c0_118, %c0_119, %c0_120] : memref<2x256x64xbf16, #tpu.memory_space<vmem>>, vector<1x256x64xbf16>
    %179 = vector.shape_cast %178 : vector<1x256x64xbf16> to vector<256x64xbf16>
    %cst_121 = arith.constant dense<0.000000e+00> : vector<18x64xf32>
    %180 = tpu.matmul %177, %179, %cst_121 {dimension_numbers = #tpu.dot_dimension_numbers<[1], [0], [0], [1], [0, 0, 1, 1], [], []>} : vector<18x256xbf16>, vector<256x64xbf16>, vector<18x64xf32> -> vector<18x64xf32>
    %c0_122 = arith.constant 0 : index
    %c0_123 = arith.constant 0 : index
    %c0_124 = arith.constant 0 : index
    %181 = vector.load %arg22[%c0_122, %c0_123, %c0_124] : memref<2x1x64xf32, #tpu.memory_space<vmem>>, vector<1x1x64xf32>
    %182 = vector.shape_cast %181 : vector<1x1x64xf32> to vector<1x64xf32>
    %183 = vector.broadcast %182 : vector<1x64xf32> to vector<18x64xf32>
    %184 = arith.addf %180, %183 : vector<18x64xf32>
    %185 = arith.addf %129, %184 : vector<18x64xf32>
    %c1_125 = arith.constant 1 : index
    %c0_126 = arith.constant 0 : index
    %c0_127 = arith.constant 0 : index
    %186 = vector.load %arg7[%c1_125, %c0_126, %c0_127] : memref<2x1x64xf32, #tpu.memory_space<vmem>>, vector<1x1x64xf32>
    %187 = vector.shape_cast %186 : vector<1x1x64xf32> to vector<1x64xf32>
    %c1_128 = arith.constant 1 : index
    %c0_129 = arith.constant 0 : index
    %c0_130 = arith.constant 0 : index
    %188 = vector.load %arg8[%c1_128, %c0_129, %c0_130] : memref<2x1x64xf32, #tpu.memory_space<vmem>>, vector<1x1x64xf32>
    %189 = vector.shape_cast %188 : vector<1x1x64xf32> to vector<1x64xf32>
    %cst_131 = arith.constant dense<0.000000e+00> : vector<18xf32>
    %190 = vector.multi_reduction <add>, %185, %cst_131 [1] : vector<18x64xf32> to vector<18xf32>
    %191 = vector.shape_cast %190 : vector<18xf32> to vector<18x1xf32>
    %cst_132 = arith.constant 6.400000e+01 : f32
    %192 = vector.broadcast %cst_132 : f32 to vector<18x1xf32>
    %193 = arith.divf %191, %192 : vector<18x1xf32>
    %194 = vector.broadcast %193 : vector<18x1xf32> to vector<18x64xf32>
    %195 = arith.subf %185, %194 : vector<18x64xf32>
    %196 = arith.mulf %195, %195 : vector<18x64xf32>
    %cst_133 = arith.constant dense<0.000000e+00> : vector<18xf32>
    %197 = vector.multi_reduction <add>, %196, %cst_133 [1] : vector<18x64xf32> to vector<18xf32>
    %198 = vector.shape_cast %197 : vector<18xf32> to vector<18x1xf32>
    %cst_134 = arith.constant 6.400000e+01 : f32
    %199 = vector.broadcast %cst_134 : f32 to vector<18x1xf32>
    %200 = arith.divf %198, %199 : vector<18x1xf32>
    %201 = vector.broadcast %193 : vector<18x1xf32> to vector<18x64xf32>
    %202 = arith.subf %185, %201 : vector<18x64xf32>
    %cst_135 = arith.constant 9.99999974E-6 : f32
    %203 = vector.broadcast %cst_135 : f32 to vector<18x1xf32>
    %204 = arith.addf %200, %203 : vector<18x1xf32>
    %205 = math.rsqrt %204 : vector<18x1xf32>
    %206 = vector.broadcast %205 : vector<18x1xf32> to vector<18x64xf32>
    %207 = arith.mulf %202, %206 : vector<18x64xf32>
    %208 = vector.broadcast %187 : vector<1x64xf32> to vector<18x64xf32>
    %209 = arith.mulf %207, %208 : vector<18x64xf32>
    %210 = vector.broadcast %189 : vector<1x64xf32> to vector<18x64xf32>
    %211 = arith.addf %209, %210 : vector<18x64xf32>
    %212 = arith.truncf %211 : vector<18x64xf32> to vector<18x64xbf16>
    %c1_136 = arith.constant 1 : index
    %c0_137 = arith.constant 0 : index
    %c0_138 = arith.constant 0 : index
    %213 = vector.load %arg16[%c1_136, %c0_137, %c0_138] : memref<2x1x64xf32, #tpu.memory_space<vmem>>, vector<1x1x64xf32>
    %214 = vector.shape_cast %213 : vector<1x1x64xf32> to vector<1x64xf32>
    %c1_139 = arith.constant 1 : index
    %c0_140 = arith.constant 0 : index
    %c0_141 = arith.constant 0 : index
    %c0_142 = arith.constant 0 : index
    %215 = vector.load %arg9[%c1_139, %c0_140, %c0_141, %c0_142] : memref<2x2x64x32xbf16, #tpu.memory_space<vmem>>, vector<1x1x64x32xbf16>
    %216 = vector.shape_cast %215 : vector<1x1x64x32xbf16> to vector<64x32xbf16>
    %cst_143 = arith.constant dense<0.000000e+00> : vector<18x32xf32>
    %217 = tpu.matmul %212, %216, %cst_143 {dimension_numbers = #tpu.dot_dimension_numbers<[1], [0], [0], [1], [0, 0, 1, 1], [], []>} : vector<18x64xbf16>, vector<64x32xbf16>, vector<18x32xf32> -> vector<18x32xf32>
    %c1_144 = arith.constant 1 : index
    %c0_145 = arith.constant 0 : index
    %c0_146 = arith.constant 0 : index
    %c0_147 = arith.constant 0 : index
    %218 = vector.load %arg10[%c1_144, %c0_145, %c0_146, %c0_147] : memref<2x2x1x32xf32, #tpu.memory_space<vmem>>, vector<1x1x1x32xf32>
    %219 = vector.shape_cast %218 : vector<1x1x1x32xf32> to vector<1x32xf32>
    %220 = vector.broadcast %219 : vector<1x32xf32> to vector<18x32xf32>
    %221 = arith.addf %217, %220 : vector<18x32xf32>
    %c1_148 = arith.constant 1 : index
    %c0_149 = arith.constant 0 : index
    %c0_150 = arith.constant 0 : index
    %c0_151 = arith.constant 0 : index
    %222 = vector.load %arg11[%c1_148, %c0_149, %c0_150, %c0_151] : memref<2x2x64x32xbf16, #tpu.memory_space<vmem>>, vector<1x1x64x32xbf16>
    %223 = vector.shape_cast %222 : vector<1x1x64x32xbf16> to vector<64x32xbf16>
    %cst_152 = arith.constant dense<0.000000e+00> : vector<18x32xf32>
    %224 = tpu.matmul %212, %223, %cst_152 {dimension_numbers = #tpu.dot_dimension_numbers<[1], [0], [0], [1], [0, 0, 1, 1], [], []>} : vector<18x64xbf16>, vector<64x32xbf16>, vector<18x32xf32> -> vector<18x32xf32>
    %c1_153 = arith.constant 1 : index
    %c0_154 = arith.constant 0 : index
    %c0_155 = arith.constant 0 : index
    %c0_156 = arith.constant 0 : index
    %225 = vector.load %arg12[%c1_153, %c0_154, %c0_155, %c0_156] : memref<2x2x1x32xf32, #tpu.memory_space<vmem>>, vector<1x1x1x32xf32>
    %226 = vector.shape_cast %225 : vector<1x1x1x32xf32> to vector<1x32xf32>
    %227 = vector.broadcast %226 : vector<1x32xf32> to vector<18x32xf32>
    %228 = arith.addf %224, %227 : vector<18x32xf32>
    %c1_157 = arith.constant 1 : index
    %c0_158 = arith.constant 0 : index
    %c0_159 = arith.constant 0 : index
    %c0_160 = arith.constant 0 : index
    %229 = vector.load %arg13[%c1_157, %c0_158, %c0_159, %c0_160] : memref<2x2x64x32xbf16, #tpu.memory_space<vmem>>, vector<1x1x64x32xbf16>
    %230 = vector.shape_cast %229 : vector<1x1x64x32xbf16> to vector<64x32xbf16>
    %cst_161 = arith.constant dense<0.000000e+00> : vector<18x32xf32>
    %231 = tpu.matmul %212, %230, %cst_161 {dimension_numbers = #tpu.dot_dimension_numbers<[1], [0], [0], [1], [0, 0, 1, 1], [], []>} : vector<18x64xbf16>, vector<64x32xbf16>, vector<18x32xf32> -> vector<18x32xf32>
    %c1_162 = arith.constant 1 : index
    %c0_163 = arith.constant 0 : index
    %c0_164 = arith.constant 0 : index
    %c0_165 = arith.constant 0 : index
    %232 = vector.load %arg14[%c1_162, %c0_163, %c0_164, %c0_165] : memref<2x2x1x32xf32, #tpu.memory_space<vmem>>, vector<1x1x1x32xf32>
    %233 = vector.shape_cast %232 : vector<1x1x1x32xf32> to vector<1x32xf32>
    %234 = vector.broadcast %233 : vector<1x32xf32> to vector<18x32xf32>
    %235 = arith.addf %231, %234 : vector<18x32xf32>
    %236 = arith.truncf %221 : vector<18x32xf32> to vector<18x32xbf16>
    %237 = arith.truncf %228 : vector<18x32xf32> to vector<18x32xbf16>
    %cst_166 = arith.constant dense<0.000000e+00> : vector<18x18xf32>
    %238 = tpu.matmul %236, %237, %cst_166 {dimension_numbers = #tpu.dot_dimension_numbers<[1], [1], [0], [0], [0, 0, 1, 0], [], []>} : vector<18x32xbf16>, vector<18x32xbf16>, vector<18x18xf32> -> vector<18x18xf32>
    %239 = arith.addf %238, %12 : vector<18x18xf32>
    %cst_167 = arith.constant dense<0xFF800000> : vector<18xf32>
    %240 = vector.multi_reduction <maximumf>, %239, %cst_167 [1] : vector<18x18xf32> to vector<18xf32>
    %241 = vector.shape_cast %240 : vector<18xf32> to vector<18x1xf32>
    %242 = vector.broadcast %241 : vector<18x1xf32> to vector<18x18xf32>
    %243 = arith.subf %239, %242 : vector<18x18xf32>
    %244 = math.exp %243 : vector<18x18xf32>
    %cst_168 = arith.constant dense<0.000000e+00> : vector<18xf32>
    %245 = vector.multi_reduction <add>, %244, %cst_168 [1] : vector<18x18xf32> to vector<18xf32>
    %246 = vector.shape_cast %245 : vector<18xf32> to vector<18x1xf32>
    %247 = arith.truncf %244 : vector<18x18xf32> to vector<18x18xbf16>
    %248 = arith.truncf %235 : vector<18x32xf32> to vector<18x32xbf16>
    %cst_169 = arith.constant dense<0.000000e+00> : vector<18x32xf32>
    %249 = tpu.matmul %247, %248, %cst_169 {dimension_numbers = #tpu.dot_dimension_numbers<[1], [0], [0], [1], [0, 0, 1, 1], [], []>} : vector<18x18xbf16>, vector<18x32xbf16>, vector<18x32xf32> -> vector<18x32xf32>
    %250 = tpu.reciprocal %246 {approx = true} : vector<18x1xf32> -> vector<18x1xf32>
    %251 = vector.broadcast %250 : vector<18x1xf32> to vector<18x32xf32>
    %252 = arith.mulf %249, %251 : vector<18x32xf32>
    %253 = arith.truncf %252 : vector<18x32xf32> to vector<18x32xbf16>
    %c1_170 = arith.constant 1 : index
    %c0_171 = arith.constant 0 : index
    %c0_172 = arith.constant 0 : index
    %c0_173 = arith.constant 0 : index
    %254 = vector.load %arg15[%c1_170, %c0_171, %c0_172, %c0_173] : memref<2x2x32x64xbf16, #tpu.memory_space<vmem>>, vector<1x1x32x64xbf16>
    %255 = vector.shape_cast %254 : vector<1x1x32x64xbf16> to vector<32x64xbf16>
    %cst_174 = arith.constant dense<0.000000e+00> : vector<18x64xf32>
    %256 = tpu.matmul %253, %255, %cst_174 {dimension_numbers = #tpu.dot_dimension_numbers<[1], [0], [0], [1], [0, 0, 1, 1], [], []>} : vector<18x32xbf16>, vector<32x64xbf16>, vector<18x64xf32> -> vector<18x64xf32>
    %257 = vector.broadcast %214 : vector<1x64xf32> to vector<18x64xf32>
    %258 = arith.addf %257, %256 : vector<18x64xf32>
    %c1_175 = arith.constant 1 : index
    %c1_176 = arith.constant 1 : index
    %c0_177 = arith.constant 0 : index
    %c0_178 = arith.constant 0 : index
    %259 = vector.load %arg9[%c1_175, %c1_176, %c0_177, %c0_178] : memref<2x2x64x32xbf16, #tpu.memory_space<vmem>>, vector<1x1x64x32xbf16>
    %260 = vector.shape_cast %259 : vector<1x1x64x32xbf16> to vector<64x32xbf16>
    %cst_179 = arith.constant dense<0.000000e+00> : vector<18x32xf32>
    %261 = tpu.matmul %212, %260, %cst_179 {dimension_numbers = #tpu.dot_dimension_numbers<[1], [0], [0], [1], [0, 0, 1, 1], [], []>} : vector<18x64xbf16>, vector<64x32xbf16>, vector<18x32xf32> -> vector<18x32xf32>
    %c1_180 = arith.constant 1 : index
    %c1_181 = arith.constant 1 : index
    %c0_182 = arith.constant 0 : index
    %c0_183 = arith.constant 0 : index
    %262 = vector.load %arg10[%c1_180, %c1_181, %c0_182, %c0_183] : memref<2x2x1x32xf32, #tpu.memory_space<vmem>>, vector<1x1x1x32xf32>
    %263 = vector.shape_cast %262 : vector<1x1x1x32xf32> to vector<1x32xf32>
    %264 = vector.broadcast %263 : vector<1x32xf32> to vector<18x32xf32>
    %265 = arith.addf %261, %264 : vector<18x32xf32>
    %c1_184 = arith.constant 1 : index
    %c1_185 = arith.constant 1 : index
    %c0_186 = arith.constant 0 : index
    %c0_187 = arith.constant 0 : index
    %266 = vector.load %arg11[%c1_184, %c1_185, %c0_186, %c0_187] : memref<2x2x64x32xbf16, #tpu.memory_space<vmem>>, vector<1x1x64x32xbf16>
    %267 = vector.shape_cast %266 : vector<1x1x64x32xbf16> to vector<64x32xbf16>
    %cst_188 = arith.constant dense<0.000000e+00> : vector<18x32xf32>
    %268 = tpu.matmul %212, %267, %cst_188 {dimension_numbers = #tpu.dot_dimension_numbers<[1], [0], [0], [1], [0, 0, 1, 1], [], []>} : vector<18x64xbf16>, vector<64x32xbf16>, vector<18x32xf32> -> vector<18x32xf32>
    %c1_189 = arith.constant 1 : index
    %c1_190 = arith.constant 1 : index
    %c0_191 = arith.constant 0 : index
    %c0_192 = arith.constant 0 : index
    %269 = vector.load %arg12[%c1_189, %c1_190, %c0_191, %c0_192] : memref<2x2x1x32xf32, #tpu.memory_space<vmem>>, vector<1x1x1x32xf32>
    %270 = vector.shape_cast %269 : vector<1x1x1x32xf32> to vector<1x32xf32>
    %271 = vector.broadcast %270 : vector<1x32xf32> to vector<18x32xf32>
    %272 = arith.addf %268, %271 : vector<18x32xf32>
    %c1_193 = arith.constant 1 : index
    %c1_194 = arith.constant 1 : index
    %c0_195 = arith.constant 0 : index
    %c0_196 = arith.constant 0 : index
    %273 = vector.load %arg13[%c1_193, %c1_194, %c0_195, %c0_196] : memref<2x2x64x32xbf16, #tpu.memory_space<vmem>>, vector<1x1x64x32xbf16>
    %274 = vector.shape_cast %273 : vector<1x1x64x32xbf16> to vector<64x32xbf16>
    %cst_197 = arith.constant dense<0.000000e+00> : vector<18x32xf32>
    %275 = tpu.matmul %212, %274, %cst_197 {dimension_numbers = #tpu.dot_dimension_numbers<[1], [0], [0], [1], [0, 0, 1, 1], [], []>} : vector<18x64xbf16>, vector<64x32xbf16>, vector<18x32xf32> -> vector<18x32xf32>
    %c1_198 = arith.constant 1 : index
    %c1_199 = arith.constant 1 : index
    %c0_200 = arith.constant 0 : index
    %c0_201 = arith.constant 0 : index
    %276 = vector.load %arg14[%c1_198, %c1_199, %c0_200, %c0_201] : memref<2x2x1x32xf32, #tpu.memory_space<vmem>>, vector<1x1x1x32xf32>
    %277 = vector.shape_cast %276 : vector<1x1x1x32xf32> to vector<1x32xf32>
    %278 = vector.broadcast %277 : vector<1x32xf32> to vector<18x32xf32>
    %279 = arith.addf %275, %278 : vector<18x32xf32>
    %280 = arith.truncf %265 : vector<18x32xf32> to vector<18x32xbf16>
    %281 = arith.truncf %272 : vector<18x32xf32> to vector<18x32xbf16>
    %cst_202 = arith.constant dense<0.000000e+00> : vector<18x18xf32>
    %282 = tpu.matmul %280, %281, %cst_202 {dimension_numbers = #tpu.dot_dimension_numbers<[1], [1], [0], [0], [0, 0, 1, 0], [], []>} : vector<18x32xbf16>, vector<18x32xbf16>, vector<18x18xf32> -> vector<18x18xf32>
    %283 = arith.addf %282, %12 : vector<18x18xf32>
    %cst_203 = arith.constant dense<0xFF800000> : vector<18xf32>
    %284 = vector.multi_reduction <maximumf>, %283, %cst_203 [1] : vector<18x18xf32> to vector<18xf32>
    %285 = vector.shape_cast %284 : vector<18xf32> to vector<18x1xf32>
    %286 = vector.broadcast %285 : vector<18x1xf32> to vector<18x18xf32>
    %287 = arith.subf %283, %286 : vector<18x18xf32>
    %288 = math.exp %287 : vector<18x18xf32>
    %cst_204 = arith.constant dense<0.000000e+00> : vector<18xf32>
    %289 = vector.multi_reduction <add>, %288, %cst_204 [1] : vector<18x18xf32> to vector<18xf32>
    %290 = vector.shape_cast %289 : vector<18xf32> to vector<18x1xf32>
    %291 = arith.truncf %288 : vector<18x18xf32> to vector<18x18xbf16>
    %292 = arith.truncf %279 : vector<18x32xf32> to vector<18x32xbf16>
    %cst_205 = arith.constant dense<0.000000e+00> : vector<18x32xf32>
    %293 = tpu.matmul %291, %292, %cst_205 {dimension_numbers = #tpu.dot_dimension_numbers<[1], [0], [0], [1], [0, 0, 1, 1], [], []>} : vector<18x18xbf16>, vector<18x32xbf16>, vector<18x32xf32> -> vector<18x32xf32>
    %294 = tpu.reciprocal %290 {approx = true} : vector<18x1xf32> -> vector<18x1xf32>
    %295 = vector.broadcast %294 : vector<18x1xf32> to vector<18x32xf32>
    %296 = arith.mulf %293, %295 : vector<18x32xf32>
    %297 = arith.truncf %296 : vector<18x32xf32> to vector<18x32xbf16>
    %c1_206 = arith.constant 1 : index
    %c1_207 = arith.constant 1 : index
    %c0_208 = arith.constant 0 : index
    %c0_209 = arith.constant 0 : index
    %298 = vector.load %arg15[%c1_206, %c1_207, %c0_208, %c0_209] : memref<2x2x32x64xbf16, #tpu.memory_space<vmem>>, vector<1x1x32x64xbf16>
    %299 = vector.shape_cast %298 : vector<1x1x32x64xbf16> to vector<32x64xbf16>
    %cst_210 = arith.constant dense<0.000000e+00> : vector<18x64xf32>
    %300 = tpu.matmul %297, %299, %cst_210 {dimension_numbers = #tpu.dot_dimension_numbers<[1], [0], [0], [1], [0, 0, 1, 1], [], []>} : vector<18x32xbf16>, vector<32x64xbf16>, vector<18x64xf32> -> vector<18x64xf32>
    %301 = arith.addf %258, %300 : vector<18x64xf32>
    %302 = arith.addf %185, %301 : vector<18x64xf32>
    %c1_211 = arith.constant 1 : index
    %c0_212 = arith.constant 0 : index
    %c0_213 = arith.constant 0 : index
    %303 = vector.load %arg17[%c1_211, %c0_212, %c0_213] : memref<2x1x64xf32, #tpu.memory_space<vmem>>, vector<1x1x64xf32>
    %304 = vector.shape_cast %303 : vector<1x1x64xf32> to vector<1x64xf32>
    %c1_214 = arith.constant 1 : index
    %c0_215 = arith.constant 0 : index
    %c0_216 = arith.constant 0 : index
    %305 = vector.load %arg18[%c1_214, %c0_215, %c0_216] : memref<2x1x64xf32, #tpu.memory_space<vmem>>, vector<1x1x64xf32>
    %306 = vector.shape_cast %305 : vector<1x1x64xf32> to vector<1x64xf32>
    %cst_217 = arith.constant dense<0.000000e+00> : vector<18xf32>
    %307 = vector.multi_reduction <add>, %302, %cst_217 [1] : vector<18x64xf32> to vector<18xf32>
    %308 = vector.shape_cast %307 : vector<18xf32> to vector<18x1xf32>
    %cst_218 = arith.constant 6.400000e+01 : f32
    %309 = vector.broadcast %cst_218 : f32 to vector<18x1xf32>
    %310 = arith.divf %308, %309 : vector<18x1xf32>
    %311 = vector.broadcast %310 : vector<18x1xf32> to vector<18x64xf32>
    %312 = arith.subf %302, %311 : vector<18x64xf32>
    %313 = arith.mulf %312, %312 : vector<18x64xf32>
    %cst_219 = arith.constant dense<0.000000e+00> : vector<18xf32>
    %314 = vector.multi_reduction <add>, %313, %cst_219 [1] : vector<18x64xf32> to vector<18xf32>
    %315 = vector.shape_cast %314 : vector<18xf32> to vector<18x1xf32>
    %cst_220 = arith.constant 6.400000e+01 : f32
    %316 = vector.broadcast %cst_220 : f32 to vector<18x1xf32>
    %317 = arith.divf %315, %316 : vector<18x1xf32>
    %318 = vector.broadcast %310 : vector<18x1xf32> to vector<18x64xf32>
    %319 = arith.subf %302, %318 : vector<18x64xf32>
    %cst_221 = arith.constant 9.99999974E-6 : f32
    %320 = vector.broadcast %cst_221 : f32 to vector<18x1xf32>
    %321 = arith.addf %317, %320 : vector<18x1xf32>
    %322 = math.rsqrt %321 : vector<18x1xf32>
    %323 = vector.broadcast %322 : vector<18x1xf32> to vector<18x64xf32>
    %324 = arith.mulf %319, %323 : vector<18x64xf32>
    %325 = vector.broadcast %304 : vector<1x64xf32> to vector<18x64xf32>
    %326 = arith.mulf %324, %325 : vector<18x64xf32>
    %327 = vector.broadcast %306 : vector<1x64xf32> to vector<18x64xf32>
    %328 = arith.addf %326, %327 : vector<18x64xf32>
    %329 = arith.truncf %328 : vector<18x64xf32> to vector<18x64xbf16>
    %c1_222 = arith.constant 1 : index
    %c0_223 = arith.constant 0 : index
    %c0_224 = arith.constant 0 : index
    %330 = vector.load %arg19[%c1_222, %c0_223, %c0_224] : memref<2x64x256xbf16, #tpu.memory_space<vmem>>, vector<1x64x256xbf16>
    %331 = vector.shape_cast %330 : vector<1x64x256xbf16> to vector<64x256xbf16>
    %cst_225 = arith.constant dense<0.000000e+00> : vector<18x256xf32>
    %332 = tpu.matmul %329, %331, %cst_225 {dimension_numbers = #tpu.dot_dimension_numbers<[1], [0], [0], [1], [0, 0, 1, 1], [], []>} : vector<18x64xbf16>, vector<64x256xbf16>, vector<18x256xf32> -> vector<18x256xf32>
    %c1_226 = arith.constant 1 : index
    %c0_227 = arith.constant 0 : index
    %c0_228 = arith.constant 0 : index
    %333 = vector.load %arg20[%c1_226, %c0_227, %c0_228] : memref<2x1x256xf32, #tpu.memory_space<vmem>>, vector<1x1x256xf32>
    %334 = vector.shape_cast %333 : vector<1x1x256xf32> to vector<1x256xf32>
    %335 = vector.broadcast %334 : vector<1x256xf32> to vector<18x256xf32>
    %336 = arith.addf %332, %335 : vector<18x256xf32>
    %cst_229 = arith.constant 5.000000e-01 : f32
    %337 = vector.broadcast %cst_229 : f32 to vector<18x256xf32>
    %338 = arith.mulf %337, %336 : vector<18x256xf32>
    %cst_230 = arith.constant 4.471500e-02 : f32
    %339 = vector.broadcast %cst_230 : f32 to vector<18x256xf32>
    %340 = arith.mulf %339, %336 : vector<18x256xf32>
    %341 = arith.mulf %340, %336 : vector<18x256xf32>
    %342 = arith.mulf %341, %336 : vector<18x256xf32>
    %343 = arith.addf %336, %342 : vector<18x256xf32>
    %cst_231 = arith.constant 0.797884583 : f32
    %344 = vector.broadcast %cst_231 : f32 to vector<18x256xf32>
    %345 = arith.mulf %344, %343 : vector<18x256xf32>
    %346 = math.tanh %345 : vector<18x256xf32>
    %cst_232 = arith.constant 1.000000e+00 : f32
    %347 = vector.broadcast %cst_232 : f32 to vector<18x256xf32>
    %348 = arith.addf %347, %346 : vector<18x256xf32>
    %349 = arith.mulf %338, %348 : vector<18x256xf32>
    %350 = arith.truncf %349 : vector<18x256xf32> to vector<18x256xbf16>
    %c1_233 = arith.constant 1 : index
    %c0_234 = arith.constant 0 : index
    %c0_235 = arith.constant 0 : index
    %351 = vector.load %arg21[%c1_233, %c0_234, %c0_235] : memref<2x256x64xbf16, #tpu.memory_space<vmem>>, vector<1x256x64xbf16>
    %352 = vector.shape_cast %351 : vector<1x256x64xbf16> to vector<256x64xbf16>
    %cst_236 = arith.constant dense<0.000000e+00> : vector<18x64xf32>
    %353 = tpu.matmul %350, %352, %cst_236 {dimension_numbers = #tpu.dot_dimension_numbers<[1], [0], [0], [1], [0, 0, 1, 1], [], []>} : vector<18x256xbf16>, vector<256x64xbf16>, vector<18x64xf32> -> vector<18x64xf32>
    %c1_237 = arith.constant 1 : index
    %c0_238 = arith.constant 0 : index
    %c0_239 = arith.constant 0 : index
    %354 = vector.load %arg22[%c1_237, %c0_238, %c0_239] : memref<2x1x64xf32, #tpu.memory_space<vmem>>, vector<1x1x64xf32>
    %355 = vector.shape_cast %354 : vector<1x1x64xf32> to vector<1x64xf32>
    %356 = vector.broadcast %355 : vector<1x64xf32> to vector<18x64xf32>
    %357 = arith.addf %353, %356 : vector<18x64xf32>
    %358 = arith.addf %302, %357 : vector<18x64xf32>
    %359 = vector.extract_strided_slice %358 {offsets = [16, 0], sizes = [2, 64], strides = [1, 1]} : vector<18x64xf32> to vector<2x64xf32>
    %c0_240 = arith.constant 0 : index
    %c0_241 = arith.constant 0 : index
    %360 = vector.load %arg23[%c0_240, %c0_241] : memref<1x64xf32, #tpu.memory_space<vmem>>, vector<1x64xf32>
    %c0_242 = arith.constant 0 : index
    %c0_243 = arith.constant 0 : index
    %361 = vector.load %arg24[%c0_242, %c0_243] : memref<1x64xf32, #tpu.memory_space<vmem>>, vector<1x64xf32>
    %cst_244 = arith.constant dense<0.000000e+00> : vector<2xf32>
    %362 = vector.multi_reduction <add>, %359, %cst_244 [1] : vector<2x64xf32> to vector<2xf32>
    %363 = vector.shape_cast %362 : vector<2xf32> to vector<2x1xf32>
    %cst_245 = arith.constant 6.400000e+01 : f32
    %364 = vector.broadcast %cst_245 : f32 to vector<2x1xf32>
    %365 = arith.divf %363, %364 : vector<2x1xf32>
    %366 = vector.broadcast %365 : vector<2x1xf32> to vector<2x64xf32>
    %367 = arith.subf %359, %366 : vector<2x64xf32>
    %368 = arith.mulf %367, %367 : vector<2x64xf32>
    %cst_246 = arith.constant dense<0.000000e+00> : vector<2xf32>
    %369 = vector.multi_reduction <add>, %368, %cst_246 [1] : vector<2x64xf32> to vector<2xf32>
    %370 = vector.shape_cast %369 : vector<2xf32> to vector<2x1xf32>
    %cst_247 = arith.constant 6.400000e+01 : f32
    %371 = vector.broadcast %cst_247 : f32 to vector<2x1xf32>
    %372 = arith.divf %370, %371 : vector<2x1xf32>
    %373 = vector.broadcast %365 : vector<2x1xf32> to vector<2x64xf32>
    %374 = arith.subf %359, %373 : vector<2x64xf32>
    %cst_248 = arith.constant 9.99999974E-6 : f32
    %375 = vector.broadcast %cst_248 : f32 to vector<2x1xf32>
    %376 = arith.addf %372, %375 : vector<2x1xf32>
    %377 = math.rsqrt %376 : vector<2x1xf32>
    %378 = vector.broadcast %377 : vector<2x1xf32> to vector<2x64xf32>
    %379 = arith.mulf %374, %378 : vector<2x64xf32>
    %380 = vector.broadcast %360 : vector<1x64xf32> to vector<2x64xf32>
    %381 = arith.mulf %379, %380 : vector<2x64xf32>
    %382 = vector.broadcast %361 : vector<1x64xf32> to vector<2x64xf32>
    %383 = arith.addf %381, %382 : vector<2x64xf32>
    %384 = arith.truncf %383 : vector<2x64xf32> to vector<2x64xbf16>
    %c0_249 = arith.constant 0 : index
    %c0_250 = arith.constant 0 : index
    %385 = vector.load %arg25[%c0_249, %c0_250] : memref<64x192xbf16, #tpu.memory_space<vmem>>, vector<64x192xbf16>
    %cst_251 = arith.constant dense<0.000000e+00> : vector<2x192xf32>
    %386 = tpu.matmul %384, %385, %cst_251 {dimension_numbers = #tpu.dot_dimension_numbers<[1], [0], [0], [1], [0, 0, 1, 1], [], []>} : vector<2x64xbf16>, vector<64x192xbf16>, vector<2x192xf32> -> vector<2x192xf32>
    %c0_252 = arith.constant 0 : index
    %c0_253 = arith.constant 0 : index
    %387 = vector.load %arg26[%c0_252, %c0_253] : memref<64x192xbf16, #tpu.memory_space<vmem>>, vector<64x192xbf16>
    %cst_254 = arith.constant dense<0.000000e+00> : vector<2x192xf32>
    %388 = tpu.matmul %384, %387, %cst_254 {dimension_numbers = #tpu.dot_dimension_numbers<[1], [0], [0], [1], [0, 0, 1, 1], [], []>} : vector<2x64xbf16>, vector<64x192xbf16>, vector<2x192xf32> -> vector<2x192xf32>
    %cst_255 = arith.constant 5.000000e-01 : f32
    %389 = vector.broadcast %cst_255 : f32 to vector<2x192xf32>
    %390 = arith.mulf %389, %388 : vector<2x192xf32>
    %cst_256 = arith.constant 4.471500e-02 : f32
    %391 = vector.broadcast %cst_256 : f32 to vector<2x192xf32>
    %392 = arith.mulf %391, %388 : vector<2x192xf32>
    %393 = arith.mulf %392, %388 : vector<2x192xf32>
    %394 = arith.mulf %393, %388 : vector<2x192xf32>
    %395 = arith.addf %388, %394 : vector<2x192xf32>
    %cst_257 = arith.constant 0.797884583 : f32
    %396 = vector.broadcast %cst_257 : f32 to vector<2x192xf32>
    %397 = arith.mulf %396, %395 : vector<2x192xf32>
    %398 = math.tanh %397 : vector<2x192xf32>
    %cst_258 = arith.constant 1.000000e+00 : f32
    %399 = vector.broadcast %cst_258 : f32 to vector<2x192xf32>
    %400 = arith.addf %399, %398 : vector<2x192xf32>
    %401 = arith.mulf %390, %400 : vector<2x192xf32>
    %402 = arith.mulf %386, %401 : vector<2x192xf32>
    %c0_259 = arith.constant 0 : index
    %c0_260 = arith.constant 0 : index
    %403 = vector.load %arg27[%c0_259, %c0_260] : memref<1x192xf32, #tpu.memory_space<vmem>>, vector<1x192xf32>
    %404 = vector.broadcast %403 : vector<1x192xf32> to vector<2x192xf32>
    %405 = arith.mulf %402, %404 : vector<2x192xf32>
    %cst_261 = arith.constant dense<0.000000e+00> : vector<2xf32>
    %406 = vector.multi_reduction <add>, %405, %cst_261 [1] : vector<2x192xf32> to vector<2xf32>
    %407 = vector.shape_cast %406 : vector<2xf32> to vector<2x1xf32>
    %c0_262 = arith.constant 0 : index
    %c0_263 = arith.constant 0 : index
    %408 = vector.load %arg28[%c0_262, %c0_263] : memref<2x1xf32, #tpu.memory_space<vmem>>, vector<2x1xf32>
    tpu.vector_store %arg28[%c0_262, %c0_263], %407 {strides = array<i32>} : memref<2x1xf32, #tpu.memory_space<vmem>>, vector<2x1xf32>,
    return
  }
  func.func @transform_0(%arg0: i32) -> (i32, i32) {
    %c0_i32 = arith.constant 0 : i32
    %c0_i32_0 = arith.constant 0 : i32
    %c0_i32_1 = arith.constant 0 : i32
    return %c0_i32, %c0_i32_0 : i32, i32
  }
  func.func @transform_1(%arg0: i32) -> (i32, i32) {
    %c0_i32 = arith.constant 0 : i32
    %c0_i32_0 = arith.constant 0 : i32
    %c0_i32_1 = arith.constant 0 : i32
    return %c0_i32, %c0_i32_0 : i32, i32
  }
  func.func @transform_2(%arg0: i32) -> (i32, i32) {
    %c0_i32 = arith.constant 0 : i32
    %c0_i32_0 = arith.constant 0 : i32
    %c0_i32_1 = arith.constant 0 : i32
    return %c0_i32, %c0_i32_0 : i32, i32
  }
  func.func @transform_3(%arg0: i32) -> (i32, i32) {
    %c0_i32 = arith.constant 0 : i32
    %c0_i32_0 = arith.constant 0 : i32
    %c0_i32_1 = arith.constant 0 : i32
    return %c0_i32, %c0_i32_0 : i32, i32
  }
  func.func @transform_4(%arg0: i32) -> (i32, i32) {
    %c0_i32 = arith.constant 0 : i32
    %c0_i32_0 = arith.constant 0 : i32
    %c0_i32_1 = arith.constant 0 : i32
    return %c0_i32, %c0_i32_0 : i32, i32
  }
  func.func @transform_5(%arg0: i32) -> (i32, i32) {
    %c0_i32 = arith.constant 0 : i32
    %c0_i32_0 = arith.constant 0 : i32
    %c0_i32_1 = arith.constant 0 : i32
    return %c0_i32, %c0_i32_0 : i32, i32
  }
  func.func @transform_6(%arg0: i32) -> (i32, i32, i32) {
    %c0_i32 = arith.constant 0 : i32
    %c0_i32_0 = arith.constant 0 : i32
    %c0_i32_1 = arith.constant 0 : i32
    %c0_i32_2 = arith.constant 0 : i32
    return %c0_i32, %c0_i32_0, %c0_i32_1 : i32, i32, i32
  }
  func.func @transform_7(%arg0: i32) -> (i32, i32, i32) {
    %c0_i32 = arith.constant 0 : i32
    %c0_i32_0 = arith.constant 0 : i32
    %c0_i32_1 = arith.constant 0 : i32
    %c0_i32_2 = arith.constant 0 : i32
    return %c0_i32, %c0_i32_0, %c0_i32_1 : i32, i32, i32
  }
  func.func @transform_8(%arg0: i32) -> (i32, i32, i32, i32) {
    %c0_i32 = arith.constant 0 : i32
    %c0_i32_0 = arith.constant 0 : i32
    %c0_i32_1 = arith.constant 0 : i32
    %c0_i32_2 = arith.constant 0 : i32
    %c0_i32_3 = arith.constant 0 : i32
    return %c0_i32, %c0_i32_0, %c0_i32_1, %c0_i32_2 : i32, i32, i32, i32
  }
  func.func @transform_9(%arg0: i32) -> (i32, i32, i32, i32) {
    %c0_i32 = arith.constant 0 : i32
    %c0_i32_0 = arith.constant 0 : i32
    %c0_i32_1 = arith.constant 0 : i32
    %c0_i32_2 = arith.constant 0 : i32
    %c0_i32_3 = arith.constant 0 : i32
    return %c0_i32, %c0_i32_0, %c0_i32_1, %c0_i32_2 : i32, i32, i32, i32
  }
  func.func @transform_10(%arg0: i32) -> (i32, i32, i32, i32) {
    %c0_i32 = arith.constant 0 : i32
    %c0_i32_0 = arith.constant 0 : i32
    %c0_i32_1 = arith.constant 0 : i32
    %c0_i32_2 = arith.constant 0 : i32
    %c0_i32_3 = arith.constant 0 : i32
    return %c0_i32, %c0_i32_0, %c0_i32_1, %c0_i32_2 : i32, i32, i32, i32
  }
  func.func @transform_11(%arg0: i32) -> (i32, i32, i32, i32) {
    %c0_i32 = arith.constant 0 : i32
    %c0_i32_0 = arith.constant 0 : i32
    %c0_i32_1 = arith.constant 0 : i32
    %c0_i32_2 = arith.constant 0 : i32
    %c0_i32_3 = arith.constant 0 : i32
    return %c0_i32, %c0_i32_0, %c0_i32_1, %c0_i32_2 : i32, i32, i32, i32
  }
  func.func @transform_12(%arg0: i32) -> (i32, i32, i32, i32) {
    %c0_i32 = arith.constant 0 : i32
    %c0_i32_0 = arith.constant 0 : i32
    %c0_i32_1 = arith.constant 0 : i32
    %c0_i32_2 = arith.constant 0 : i32
    %c0_i32_3 = arith.constant 0 : i32
    return %c0_i32, %c0_i32_0, %c0_i32_1, %c0_i32_2 : i32, i32, i32, i32
  }
  func.func @transform_13(%arg0: i32) -> (i32, i32, i32, i32) {
    %c0_i32 = arith.constant 0 : i32
    %c0_i32_0 = arith.constant 0 : i32
    %c0_i32_1 = arith.constant 0 : i32
    %c0_i32_2 = arith.constant 0 : i32
    %c0_i32_3 = arith.constant 0 : i32
    return %c0_i32, %c0_i32_0, %c0_i32_1, %c0_i32_2 : i32, i32, i32, i32
  }
  func.func @transform_14(%arg0: i32) -> (i32, i32, i32, i32) {
    %c0_i32 = arith.constant 0 : i32
    %c0_i32_0 = arith.constant 0 : i32
    %c0_i32_1 = arith.constant 0 : i32
    %c0_i32_2 = arith.constant 0 : i32
    %c0_i32_3 = arith.constant 0 : i32
    return %c0_i32, %c0_i32_0, %c0_i32_1, %c0_i32_2 : i32, i32, i32, i32
  }
  func.func @transform_15(%arg0: i32) -> (i32, i32, i32) {
    %c0_i32 = arith.constant 0 : i32
    %c0_i32_0 = arith.constant 0 : i32
    %c0_i32_1 = arith.constant 0 : i32
    %c0_i32_2 = arith.constant 0 : i32
    return %c0_i32, %c0_i32_0, %c0_i32_1 : i32, i32, i32
  }
  func.func @transform_16(%arg0: i32) -> (i32, i32, i32) {
    %c0_i32 = arith.constant 0 : i32
    %c0_i32_0 = arith.constant 0 : i32
    %c0_i32_1 = arith.constant 0 : i32
    %c0_i32_2 = arith.constant 0 : i32
    return %c0_i32, %c0_i32_0, %c0_i32_1 : i32, i32, i32
  }
  func.func @transform_17(%arg0: i32) -> (i32, i32, i32) {
    %c0_i32 = arith.constant 0 : i32
    %c0_i32_0 = arith.constant 0 : i32
    %c0_i32_1 = arith.constant 0 : i32
    %c0_i32_2 = arith.constant 0 : i32
    return %c0_i32, %c0_i32_0, %c0_i32_1 : i32, i32, i32
  }
  func.func @transform_18(%arg0: i32) -> (i32, i32, i32) {
    %c0_i32 = arith.constant 0 : i32
    %c0_i32_0 = arith.constant 0 : i32
    %c0_i32_1 = arith.constant 0 : i32
    %c0_i32_2 = arith.constant 0 : i32
    return %c0_i32, %c0_i32_0, %c0_i32_1 : i32, i32, i32
  }
  func.func @transform_19(%arg0: i32) -> (i32, i32, i32) {
    %c0_i32 = arith.constant 0 : i32
    %c0_i32_0 = arith.constant 0 : i32
    %c0_i32_1 = arith.constant 0 : i32
    %c0_i32_2 = arith.constant 0 : i32
    return %c0_i32, %c0_i32_0, %c0_i32_1 : i32, i32, i32
  }
  func.func @transform_20(%arg0: i32) -> (i32, i32, i32) {
    %c0_i32 = arith.constant 0 : i32
    %c0_i32_0 = arith.constant 0 : i32
    %c0_i32_1 = arith.constant 0 : i32
    %c0_i32_2 = arith.constant 0 : i32
    return %c0_i32, %c0_i32_0, %c0_i32_1 : i32, i32, i32
  }
  func.func @transform_21(%arg0: i32) -> (i32, i32, i32) {
    %c0_i32 = arith.constant 0 : i32
    %c0_i32_0 = arith.constant 0 : i32
    %c0_i32_1 = arith.constant 0 : i32
    %c0_i32_2 = arith.constant 0 : i32
    return %c0_i32, %c0_i32_0, %c0_i32_1 : i32, i32, i32
  }
  func.func @transform_22(%arg0: i32) -> (i32, i32) {
    %c0_i32 = arith.constant 0 : i32
    %c0_i32_0 = arith.constant 0 : i32
    %c0_i32_1 = arith.constant 0 : i32
    return %c0_i32, %c0_i32_0 : i32, i32
  }
  func.func @transform_23(%arg0: i32) -> (i32, i32) {
    %c0_i32 = arith.constant 0 : i32
    %c0_i32_0 = arith.constant 0 : i32
    %c0_i32_1 = arith.constant 0 : i32
    return %c0_i32, %c0_i32_0 : i32, i32
  }
  func.func @transform_24(%arg0: i32) -> (i32, i32) {
    %c0_i32 = arith.constant 0 : i32
    %c0_i32_0 = arith.constant 0 : i32
    %c0_i32_1 = arith.constant 0 : i32
    return %c0_i32, %c0_i32_0 : i32, i32
  }
  func.func @transform_25(%arg0: i32) -> (i32, i32) {
    %c0_i32 = arith.constant 0 : i32
    %c0_i32_0 = arith.constant 0 : i32
    %c0_i32_1 = arith.constant 0 : i32
    return %c0_i32, %c0_i32_0 : i32, i32
  }
  func.func @transform_26(%arg0: i32) -> (i32, i32) {
    %c0_i32 = arith.constant 0 : i32
    %c0_i32_0 = arith.constant 0 : i32
    %c0_i32_1 = arith.constant 0 : i32
    return %c0_i32, %c0_i32_0 : i32, i32
  }
  func.func @transform_27(%arg0: i32) -> (i32, i32) {
    %c0_i32 = arith.constant 0 : i32
    %c0_i32_0 = arith.constant 0 : i32
    %c0_i32_1 = arith.constant 0 : i32
    return %c0_i32, %c0_i32_0 : i32, i32
  }
}

</mosaic_0001>

<llo_original>
// kernel: tpu_custom_call.1
$region0: #{tpu_custom_call.1}
  #allocation0 [shape = 'u32[]', space=smem, size = 0x4, offset = 0x4, fixed_abs, tag = 'smem constant byte address 0x4 - core index']
  #allocation1 [shape = 'u32[144,128]{1,0:T(1,128)}', space=vmem, size = 0x12000, scoped, tag = 'internal scratch']
  %s0 = inlined_call_operand.vmem [shape: f32[16,96], index: 0, kind: input, shape index: {}]
  %s1 = inlined_call_operand.vmem [shape: f32[18,18], index: 1, kind: input, shape index: {}]
  %s2 = inlined_call_operand.vmem [shape: bf16[96,64], index: 2, kind: input, shape index: {}]
  %s3 = inlined_call_operand.vmem [shape: f32[1,64], index: 3, kind: input, shape index: {}]
  %s4 = inlined_call_operand.vmem [shape: f32[8,64], index: 4, kind: input, shape index: {}]
  %s5 = inlined_call_operand.vmem [shape: f32[1,64], index: 5, kind: input, shape index: {}]
  %s6 = inlined_call_operand.vmem [shape: f32[2,1,64], index: 6, kind: input, shape index: {}]
  %s7 = inlined_call_operand.vmem [shape: f32[2,1,64], index: 7, kind: input, shape index: {}]
  %s8 = inlined_call_operand.vmem [shape: bf16[2,2,64,32], index: 8, kind: input, shape index: {}]
  %s9 = inlined_call_operand.vmem [shape: f32[2,2,1,32], index: 9, kind: input, shape index: {}]
  %s10 = inlined_call_operand.vmem [shape: bf16[2,2,64,32], index: 10, kind: input, shape index: {}]
  %s11 = inlined_call_operand.vmem [shape: f32[2,2,1,32], index: 11, kind: input, shape index: {}]
  %s12 = inlined_call_operand.vmem [shape: bf16[2,2,64,32], index: 12, kind: input, shape index: {}]
  %s13 = inlined_call_operand.vmem [shape: f32[2,2,1,32], index: 13, kind: input, shape index: {}]
  %s14 = inlined_call_operand.vmem [shape: bf16[2,2,32,64], index: 14, kind: input, shape index: {}]
  %s15 = inlined_call_operand.vmem [shape: f32[2,1,64], index: 15, kind: input, shape index: {}]
  %s16 = inlined_call_operand.vmem [shape: f32[2,1,64], index: 16, kind: input, shape index: {}]
  %s17 = inlined_call_operand.vmem [shape: f32[2,1,64], index: 17, kind: input, shape index: {}]
  %s18 = inlined_call_operand.vmem [shape: bf16[2,64,256], index: 18, kind: input, shape index: {}]
  %s19 = inlined_call_operand.vmem [shape: f32[2,1,256], index: 19, kind: input, shape index: {}]
  %s20 = inlined_call_operand.vmem [shape: bf16[2,256,64], index: 20, kind: input, shape index: {}]
  %s21 = inlined_call_operand.vmem [shape: f32[2,1,64], index: 21, kind: input, shape index: {}]
  %s22 = inlined_call_operand.vmem [shape: f32[1,64], index: 22, kind: input, shape index: {}]
  %s23 = inlined_call_operand.vmem [shape: f32[1,64], index: 23, kind: input, shape index: {}]
  %s24 = inlined_call_operand.vmem [shape: bf16[64,192], index: 24, kind: input, shape index: {}]
  %s25 = inlined_call_operand.vmem [shape: bf16[64,192], index: 25, kind: input, shape index: {}]
  %s26 = inlined_call_operand.vmem [shape: f32[1,192], index: 26, kind: input, shape index: {}]
  %s27 = inlined_call_operand.vmem [shape: f32[2,1], index: 27, kind: output, shape index: {}]
  %s28 = sld [smem:[#allocation0]]
  $region118: #{tpu_custom_call.1} parent=0
    _
  %s30 = ssub.s32 1, %s28
  %s31 = scalar_select 0, %s30, %s28
  // Predicated region
  $region2: #{tpu_custom_call.1} parent=0 // pred_check
    _
  $region3: #{tpu_custom_call.1} parent=0 // pred_check_branch
    %33 = sbr.rel (0) target = $region5
  $region4: #{tpu_custom_call.1} parent=0 // pred_region
    _
  $region5: #{tpu_custom_call.1} parent=0 // pred_fallthru
    _
  // Predicated region
  $region6: #{tpu_custom_call.1} parent=0 // pred_check
    _
  $region7: #{tpu_custom_call.1} parent=0 // pred_check_branch
    %35 = sbr.rel (0) target = $region9
  $region8: #{tpu_custom_call.1} parent=0 // pred_region
    _
  $region9: #{tpu_custom_call.1} parent=0 // pred_fallthru
    _
  // Predicated region
  $region10: #{tpu_custom_call.1} parent=0 // pred_check
    _
  $region11: #{tpu_custom_call.1} parent=0 // pred_check_branch
    %37 = sbr.rel (0) target = $region13
  $region12: #{tpu_custom_call.1} parent=0 // pred_region
    _
  $region13: #{tpu_custom_call.1} parent=0 // pred_fallthru
    _
  // Predicated region
  $region14: #{tpu_custom_call.1} parent=0 // pred_check
    _
  $region15: #{tpu_custom_call.1} parent=0 // pred_check_branch
    %39 = sbr.rel (0) target = $region17
  $region16: #{tpu_custom_call.1} parent=0 // pred_region
    _
  $region17: #{tpu_custom_call.1} parent=0 // pred_fallthru
    _
  // Predicated region
  $region18: #{tpu_custom_call.1} parent=0 // pred_check
    _
  $region19: #{tpu_custom_call.1} parent=0 // pred_check_branch
    %41 = sbr.rel (0) target = $region21
  $region20: #{tpu_custom_call.1} parent=0 // pred_region
    _
  $region21: #{tpu_custom_call.1} parent=0 // pred_fallthru
    _
  // Predicated region
  $region22: #{tpu_custom_call.1} parent=0 // pred_check
    _
  $region23: #{tpu_custom_call.1} parent=0 // pred_check_branch
    %43 = sbr.rel (0) target = $region25
  $region24: #{tpu_custom_call.1} parent=0 // pred_region
    _
  $region25: #{tpu_custom_call.1} parent=0 // pred_fallthru
    _
  // Predicated region
  $region26: #{tpu_custom_call.1} parent=0 // pred_check
    _
  $region27: #{tpu_custom_call.1} parent=0 // pred_check_branch
    %45 = sbr.rel (0) target = $region29
  $region28: #{tpu_custom_call.1} parent=0 // pred_region
    _
  $region29: #{tpu_custom_call.1} parent=0 // pred_fallthru
    _
  // Predicated region
  $region30: #{tpu_custom_call.1} parent=0 // pred_check
    _
  $region31: #{tpu_custom_call.1} parent=0 // pred_check_branch
    %47 = sbr.rel (0) target = $region33
  $region32: #{tpu_custom_call.1} parent=0 // pred_region
    _
  $region33: #{tpu_custom_call.1} parent=0 // pred_fallthru
    _
  // Predicated region
  $region34: #{tpu_custom_call.1} parent=0 // pred_check
    _
  $region35: #{tpu_custom_call.1} parent=0 // pred_check_branch
    %49 = sbr.rel (0) target = $region37
  $region36: #{tpu_custom_call.1} parent=0 // pred_region
    _
  $region37: #{tpu_custom_call.1} parent=0 // pred_fallthru
    _
  // Predicated region
  $region38: #{tpu_custom_call.1} parent=0 // pred_check
    _
  $region39: #{tpu_custom_call.1} parent=0 // pred_check_branch
    %51 = sbr.rel (0) target = $region41
  $region40: #{tpu_custom_call.1} parent=0 // pred_region
    _
  $region41: #{tpu_custom_call.1} parent=0 // pred_fallthru
    _
  // Predicated region
  $region42: #{tpu_custom_call.1} parent=0 // pred_check
    _
  $region43: #{tpu_custom_call.1} parent=0 // pred_check_branch
    %53 = sbr.rel (0) target = $region45
  $region44: #{tpu_custom_call.1} parent=0 // pred_region
    _
  $region45: #{tpu_custom_call.1} parent=0 // pred_fallthru
    _
  // Predicated region
  $region46: #{tpu_custom_call.1} parent=0 // pred_check
    _
  $region47: #{tpu_custom_call.1} parent=0 // pred_check_branch
    %55 = sbr.rel (0) target = $region49
  $region48: #{tpu_custom_call.1} parent=0 // pred_region
    _
  $region49: #{tpu_custom_call.1} parent=0 // pred_fallthru
    _
  // Predicated region
  $region50: #{tpu_custom_call.1} parent=0 // pred_check
    _
  $region51: #{tpu_custom_call.1} parent=0 // pred_check_branch
    %57 = sbr.rel (0) target = $region53
  $region52: #{tpu_custom_call.1} parent=0 // pred_region
    _
  $region53: #{tpu_custom_call.1} parent=0 // pred_fallthru
    _
  // Predicated region
  $region54: #{tpu_custom_call.1} parent=0 // pred_check
    _
  $region55: #{tpu_custom_call.1} parent=0 // pred_check_branch
    %59 = sbr.rel (0) target = $region57
  $region56: #{tpu_custom_call.1} parent=0 // pred_region
    _
  $region57: #{tpu_custom_call.1} parent=0 // pred_fallthru
    _
  // Predicated region
  $region58: #{tpu_custom_call.1} parent=0 // pred_check
    _
  $region59: #{tpu_custom_call.1} parent=0 // pred_check_branch
    %61 = sbr.rel (0) target = $region61
  $region60: #{tpu_custom_call.1} parent=0 // pred_region
    _
  $region61: #{tpu_custom_call.1} parent=0 // pred_fallthru
    _
  // Predicated region
  $region62: #{tpu_custom_call.1} parent=0 // pred_check
    _
  $region63: #{tpu_custom_call.1} parent=0 // pred_check_branch
    %63 = sbr.rel (0) target = $region65
  $region64: #{tpu_custom_call.1} parent=0 // pred_region
    _
  $region65: #{tpu_custom_call.1} parent=0 // pred_fallthru
    _
  // Predicated region
  $region66: #{tpu_custom_call.1} parent=0 // pred_check
    _
  $region67: #{tpu_custom_call.1} parent=0 // pred_check_branch
    %65 = sbr.rel (0) target = $region69
  $region68: #{tpu_custom_call.1} parent=0 // pred_region
    _
  $region69: #{tpu_custom_call.1} parent=0 // pred_fallthru
    _
  // Predicated region
  $region70: #{tpu_custom_call.1} parent=0 // pred_check
    _
  $region71: #{tpu_custom_call.1} parent=0 // pred_check_branch
    %67 = sbr.rel (0) target = $region73
  $region72: #{tpu_custom_call.1} parent=0 // pred_region
    _
  $region73: #{tpu_custom_call.1} parent=0 // pred_fallthru
    _
  // Predicated region
  $region74: #{tpu_custom_call.1} parent=0 // pred_check
    _
  $region75: #{tpu_custom_call.1} parent=0 // pred_check_branch
    %69 = sbr.rel (0) target = $region77
  $region76: #{tpu_custom_call.1} parent=0 // pred_region
    _
  $region77: #{tpu_custom_call.1} parent=0 // pred_fallthru
    _
  // Predicated region
  $region78: #{tpu_custom_call.1} parent=0 // pred_check
    _
  $region79: #{tpu_custom_call.1} parent=0 // pred_check_branch
    %71 = sbr.rel (0) target = $region81
  $region80: #{tpu_custom_call.1} parent=0 // pred_region
    _
  $region81: #{tpu_custom_call.1} parent=0 // pred_fallthru
    _
  // Predicated region
  $region82: #{tpu_custom_call.1} parent=0 // pred_check
    _
  $region83: #{tpu_custom_call.1} parent=0 // pred_check_branch
    %73 = sbr.rel (0) target = $region85
  $region84: #{tpu_custom_call.1} parent=0 // pred_region
    _
  $region85: #{tpu_custom_call.1} parent=0 // pred_fallthru
    _
  // Predicated region
  $region86: #{tpu_custom_call.1} parent=0 // pred_check
    _
  $region87: #{tpu_custom_call.1} parent=0 // pred_check_branch
    %75 = sbr.rel (0) target = $region89
  $region88: #{tpu_custom_call.1} parent=0 // pred_region
    _
  $region89: #{tpu_custom_call.1} parent=0 // pred_fallthru
    _
  // Predicated region
  $region90: #{tpu_custom_call.1} parent=0 // pred_check
    _
  $region91: #{tpu_custom_call.1} parent=0 // pred_check_branch
    %77 = sbr.rel (0) target = $region93
  $region92: #{tpu_custom_call.1} parent=0 // pred_region
    _
  $region93: #{tpu_custom_call.1} parent=0 // pred_fallthru
    _
  // Predicated region
  $region94: #{tpu_custom_call.1} parent=0 // pred_check
    _
  $region95: #{tpu_custom_call.1} parent=0 // pred_check_branch
    %79 = sbr.rel (0) target = $region97
  $region96: #{tpu_custom_call.1} parent=0 // pred_region
    _
  $region97: #{tpu_custom_call.1} parent=0 // pred_fallthru
    _
  // Predicated region
  $region98: #{tpu_custom_call.1} parent=0 // pred_check
    _
  $region99: #{tpu_custom_call.1} parent=0 // pred_check_branch
    %81 = sbr.rel (0) target = $region101
  $region100: #{tpu_custom_call.1} parent=0 // pred_region
    _
  $region101: #{tpu_custom_call.1} parent=0 // pred_fallthru
    _
  // Predicated region
  $region102: #{tpu_custom_call.1} parent=0 // pred_check
    _
  $region103: #{tpu_custom_call.1} parent=0 // pred_check_branch
    %83 = sbr.rel (0) target = $region105
  $region104: #{tpu_custom_call.1} parent=0 // pred_region
    _
  $region105: #{tpu_custom_call.1} parent=0 // pred_fallthru
    _
  // Predicated region
  $region106: #{tpu_custom_call.1} parent=0 // pred_check
    _
  $region107: #{tpu_custom_call.1} parent=0 // pred_check_branch
    %85 = sbr.rel (0) target = $region109
  $region108: #{tpu_custom_call.1} parent=0 // pred_region
    _
  $region109: #{tpu_custom_call.1} parent=0 // pred_fallthru
    _
  %v87 = vld [vmem:[%s0] sm:$0xff]
  %v88 = vld [vmem:[%s0 + $0x8] sm:$0xff]
  %v89 = vpack.c.bf16 %v88, %v87
  %v90 = vld [vmem:[%s2] sm:$0xf]
  %v91 = vld [vmem:[%s2 + $0x4] sm:$0xf]
  %v92 = vld [vmem:[%s2 + $0x8] sm:$0xf]
  %v93 = vld [vmem:[%s2 + $0xc] sm:$0xf]
  %v94 = vld [vmem:[%s2 + $0x10] sm:$0xf]
  %v95 = vld [vmem:[%s2 + $0x14] sm:$0xf]
  %v96 = vld [vmem:[%s2 + $0x18] sm:$0xf]
  %v97 = vld [vmem:[%s2 + $0x1c] sm:$0xf]
  %v98 = vld [vmem:[%s2 + $0x20] sm:$0xf]
  %v99 = vld [vmem:[%s2 + $0x24] sm:$0xf]
  %v100 = vld [vmem:[%s2 + $0x28] sm:$0xf]
  %v101 = vld [vmem:[%s2 + $0x2c] sm:$0xf]
  %v102 = vld [vmem:[%s3] sm:$0x1]
  %v104 = vlaneseq
  %v105 = vshrl.u32 %v104, 7
  %v106 = vsub.s32 0, %v105
  %v107 = vrot.slane %v102, %v106
  %v121 = vunpack.c.l.b16 %v90
  %v122 = vunpack.c.l.b16 %v91
  %v123 = vunpack.c.l.b16 %v92
  %v124 = vunpack.c.l.b16 %v93
  %v125 = vunpack.c.l.b16 %v94
  %v126 = vunpack.c.l.b16 %v95
  %v127 = vunpack.c.l.b16 %v96
  %v128 = vunpack.c.l.b16 %v97
  %v129 = vunpack.c.l.b16 %v98
  %v130 = vunpack.c.l.b16 %v99
  %v131 = vunpack.c.l.b16 %v100
  %v132 = vunpack.c.l.b16 %v101
  %v133 = vpack.c.b16 %v122, %v121
  %v134 = vpack.c.b16 %v124, %v123
  %v135 = vpack.c.b16 %v126, %v125
  %v136 = vpack.c.b16 %v128, %v127
  %v137 = vpack.c.b16 %v130, %v129
  %v138 = vpack.c.b16 %v132, %v131
  %vm145 = vcmask 785408
  %v147 = vsel %vm145, %v89, 0
  %149 = vmatprep.subr.bf16.mxu0 0
  %150 = vmatpush1.bf16.msra.mxu0 %v133
  %151 = vmatprep.subr.bf16.mxu0 0
  %152 = vmatpush1.bf16.msra.mxu0 %v134
  %153 = vmatprep.subr.bf16.mxu0 0
  %154 = vmatpush1.bf16.msra.mxu0 %v135
  %155 = vmatprep.subr.bf16.mxu0 0
  %156 = vmatpush1.bf16.msra.mxu0 %v136
  %157 = vmatprep.subr.bf16.mxu0 0
  %158 = vmatpush1.bf16.msra.mxu0 %v137
  %159 = vmatprep.subr.bf16.mxu0 0
  %160 = vmatpush1.bf16.msra.mxu0 %v138
  %161 = vmatprep.subr.bf16.mxu0 0
  %162 = vmatpush1.bf16.msra.mxu0 0
  %163 = vmatprep.subr.bf16.mxu0 0
  %164 = vmatpush1.bf16.msra.mxu0 0
  %165 = vmatprep.subr.bf16.mxu0 0
  %166 = vmatpush1.bf16.msra.mxu0 0
  %167 = vmatprep.subr.bf16.mxu0 0
  %168 = vmatpush1.bf16.msra.mxu0 0
  %169 = vmatprep.subr.bf16.mxu0 0
  %170 = vmatpush1.bf16.msra.mxu0 0
  %171 = vmatprep.subr.bf16.mxu0 0
  %172 = vmatpush1.bf16.msra.mxu0 0
  %173 = vmatprep.subr.bf16.mxu0 0
  %174 = vmatpush1.bf16.msra.mxu0 0
  %175 = vmatprep.subr.bf16.mxu0 0
  %176 = vmatpush1.bf16.msra.mxu0 0
  %177 = vmatprep.subr.bf16.mxu0 0
  %178 = vmatpush1.bf16.msra.mxu0 0
  %179 = vmatprep.subr.bf16.mxu0 0
  %180 = vmatpush1.bf16.msra.mxu0 0
  %181 = vmatprep.mubr.bf16.mxu0 0
  %182 = vmatmul.mubr.bf16.gmra.mrb[0].mxu0 %v147
  %v183 = vpop.f32.mrb[0].mxu0
  %v184 = vadd.f32 %v107, %v183
  %v185 = vpop.f32.mrb[0].mxu0
  %v186 = vpop.f32.mrb[0].mxu0
  %v187 = vadd.f32 %v107, %v186
  %v188 = vpop.f32.mrb[0].mxu0
  %189 = vdwg.mxu0
  %v190 = vld [vmem:[%s4] sm:$0xff]
  %v191 = vadd.f32 %v184, %v190
  %v192 = vadd.f32 %v187, %v190
  %v193 = vld [vmem:[%s5] sm:$0x1]
  %v195 = vlaneseq
  %v196 = vshrl.u32 %v195, 7
  %v197 = vsub.s32 0, %v196
  %v198 = vrot.slane %v193, %v197
  %vm200 = vcmask 1040384
  %v201 = vsel %vm200, %v193, %v198
  %v202 = vld [vmem:[%s1] sm:$0xff]
  %v203 = vld [vmem:[%s1 + $0x8] sm:$0xff]
  %v204 = vld [vmem:[%s1 + $0x10] sm:$0x3]
  %v205 = vld [vmem:[%s6] sm:$0x1]
  %v206 = vld [vmem:[%s7] sm:$0x1]
  %vm207 = vcmask 523264
  %v208 = vsel %vm207, %v191, 0.0
  %209 = vadd.xlane.f32.xlu0 %v208
  %v210 = vpop.xlane.xlu0 %209
  %v211 = vsel %vm207, %v192, 0.0
  %212 = vadd.xlane.f32.xlu0 %v211
  %v213 = vpop.xlane.xlu0 %212
  %vm214 = vcmask 517120
  %v215 = vsel %vm214, %v201, 0.0
  %216 = vadd.xlane.f32.xlu0 %v215
  %v217 = vpop.xlane.xlu0 %216
  %v218 = vrcp.pop 64.0
  %v219 = vmul.f32 %v210, %v218
  %v220 = vmul.f32 %v213, %v218
  %v221 = vmul.f32 %v217, %v218
  %v222 = vsub.f32 %v191, %v219
  %v223 = vsub.f32 %v192, %v220
  %v224 = vsub.f32 %v201, %v221
  %v225 = vmul.f32 %v222, %v222
  %v226 = vmul.f32 %v223, %v223
  %v227 = vmul.f32 %v224, %v224
  %v228 = vsel %vm207, %v225, 0.0
  %229 = vadd.xlane.f32.xlu0 %v228
  %v230 = vpop.xlane.xlu0 %229
  %v231 = vsel %vm207, %v226, 0.0
  %232 = vadd.xlane.f32.xlu0 %v231
  %v233 = vpop.xlane.xlu0 %232
  %v234 = vsel %vm214, %v227, 0.0
  %235 = vadd.xlane.f32.xlu0 %v234
  %v236 = vpop.xlane.xlu0 %235
  %v237 = vmul.f32 %v230, %v218
  %v238 = vmul.f32 %v233, %v218
  %v239 = vmul.f32 %v236, %v218
  %v240 = vadd.f32 %v237, 1e-05
  %v241 = vadd.f32 %v238, 1e-05
  %v242 = vadd.f32 %v239, 1e-05
  %v243 = vrsqrt.pop %v240
  %v244 = vrsqrt.pop %v241
  %v245 = vrsqrt.pop %v242
  %v246 = vmul.f32 %v222, %v243
  %v247 = vmul.f32 %v223, %v244
  %v248 = vmul.f32 %v224, %v245
  %v250 = vlaneseq
  %v251 = vshrl.u32 %v250, 7
  %v252 = vsub.s32 0, %v251
  %v253 = vrot.slane %v205, %v252
  %v255 = vmul.f32 %v246, %v253
  %v256 = vmul.f32 %v247, %v253
  %v257 = vmul.f32 %v248, %v253
  %v259 = vlaneseq
  %v260 = vshrl.u32 %v259, 7
  %v261 = vsub.s32 0, %v260
  %v262 = vrot.slane %v206, %v261
  %v264 = vadd.f32 %v255, %v262
  %v265 = vadd.f32 %v256, %v262
  %v266 = vadd.f32 %v257, %v262
  %v267 = vpack.c.bf16 %v265, %v264
  %v268 = vpack.c.bf16 %v266, %v266
  %v269 = vld [vmem:[%s15] sm:$0x1]
  %v270 = vld [vmem:[%s8] sm:$0xf]
  %v271 = vld [vmem:[%s8 + $0x4] sm:$0xf]
  %v272 = vld [vmem:[%s8 + $0x8] sm:$0xf]
  %v273 = vld [vmem:[%s8 + $0xc] sm:$0xf]
  %v274 = vld [vmem:[%s8 + $0x10] sm:$0xf]
  %v275 = vld [vmem:[%s8 + $0x14] sm:$0xf]
  %v276 = vld [vmem:[%s8 + $0x18] sm:$0xf]
  %v277 = vld [vmem:[%s8 + $0x1c] sm:$0xf]
  %v278 = vld [vmem:[%s9] sm:$0x1]
  %v280 = vlaneseq
  %v281 = vshrl.u32 %v280, 7
  %v282 = vsub.s32 0, %v281
  %v283 = vrot.slane %v278, %v282
  %v293 = vunpack.c.l.b16 %v270
  %v294 = vunpack.c.l.b16 %v271
  %v295 = vunpack.c.l.b16 %v272
  %v296 = vunpack.c.l.b16 %v273
  %v297 = vunpack.c.l.b16 %v274
  %v298 = vunpack.c.l.b16 %v275
  %v299 = vunpack.c.l.b16 %v276
  %v300 = vunpack.c.l.b16 %v277
  %v301 = vpack.c.b16 %v294, %v293
  %v302 = vpack.c.b16 %v296, %v295
  %v303 = vpack.c.b16 %v298, %v297
  %v304 = vpack.c.b16 %v300, %v299
  %v310 = vsel %vm207, %v267, 0
  %v313 = vsel %vm207, %v268, 0
  %315 = vmatprep.subr.bf16.mxu0 0
  %316 = vmatpush1.bf16.msra.mxu0 %v301
  %317 = vmatprep.subr.bf16.mxu0 0
  %318 = vmatpush1.bf16.msra.mxu0 %v302
  %319 = vmatprep.subr.bf16.mxu0 0
  %320 = vmatpush1.bf16.msra.mxu0 %v303
  %321 = vmatprep.subr.bf16.mxu0 0
  %322 = vmatpush1.bf16.msra.mxu0 %v304
  %323 = vmatprep.subr.bf16.mxu0 0
  %324 = vmatpush1.bf16.msra.mxu0 0
  %325 = vmatprep.subr.bf16.mxu0 0
  %326 = vmatpush1.bf16.msra.mxu0 0
  %327 = vmatprep.subr.bf16.mxu0 0
  %328 = vmatpush1.bf16.msra.mxu0 0
  %329 = vmatprep.subr.bf16.mxu0 0
  %330 = vmatpush1.bf16.msra.mxu0 0
  %331 = vmatprep.subr.bf16.mxu0 0
  %332 = vmatpush1.bf16.msra.mxu0 0
  %333 = vmatprep.subr.bf16.mxu0 0
  %334 = vmatpush1.bf16.msra.mxu0 0
  %335 = vmatprep.subr.bf16.mxu0 0
  %336 = vmatpush1.bf16.msra.mxu0 0
  %337 = vmatprep.subr.bf16.mxu0 0
  %338 = vmatpush1.bf16.msra.mxu0 0
  %339 = vmatprep.subr.bf16.mxu0 0
  %340 = vmatpush1.bf16.msra.mxu0 0
  %341 = vmatprep.subr.bf16.mxu0 0
  %342 = vmatpush1.bf16.msra.mxu0 0
  %343 = vmatprep.subr.bf16.mxu0 0
  %344 = vmatpush1.bf16.msra.mxu0 0
  %345 = vmatprep.subr.bf16.mxu0 0
  %346 = vmatpush1.bf16.msra.mxu0 0
  %347 = vmatprep.mubr.bf16.mxu0 0
  %348 = vmatmul.mubr.bf16.gmra.mrb[0].mxu0 %v310
  %v349 = vpop.f32.mrb[0].mxu0
  %v350 = vadd.f32 %v283, %v349
  %v351 = vpop.f32.mrb[0].mxu0
  %v352 = vpop.f32.mrb[0].mxu0
  %v353 = vadd.f32 %v283, %v352
  %v354 = vpop.f32.mrb[0].mxu0
  %355 = vmatprep.mubr.bf16.mxu0 0
  %356 = vmatmul.mubr.bf16.gmra.mrb[0].mxu0 %v313
  %v357 = vpop.f32.mrb[0].mxu0
  %v358 = vadd.f32 %v283, %v357
  %v359 = vpop.f32.mrb[0].mxu0
  %v360 = vpop.f32.mrb[0].mxu0
  %v361 = vpop.f32.mrb[0].mxu0
  %362 = vdwg.mxu0
  %v363 = vld [vmem:[%s10] sm:$0xf]
  %v364 = vld [vmem:[%s10 + $0x4] sm:$0xf]
  %v365 = vld [vmem:[%s10 + $0x8] sm:$0xf]
  %v366 = vld [vmem:[%s10 + $0xc] sm:$0xf]
  %v367 = vld [vmem:[%s10 + $0x10] sm:$0xf]
  %v368 = vld [vmem:[%s10 + $0x14] sm:$0xf]
  %v369 = vld [vmem:[%s10 + $0x18] sm:$0xf]
  %v370 = vld [vmem:[%s10 + $0x1c] sm:$0xf]
  %v371 = vld [vmem:[%s11] sm:$0x1]
  %v373 = vlaneseq
  %v374 = vshrl.u32 %v373, 7
  %v375 = vsub.s32 0, %v374
  %v376 = vrot.slane %v371, %v375
  %v386 = vunpack.c.l.b16 %v363
  %v387 = vunpack.c.l.b16 %v364
  %v388 = vunpack.c.l.b16 %v365
  %v389 = vunpack.c.l.b16 %v366
  %v390 = vunpack.c.l.b16 %v367
  %v391 = vunpack.c.l.b16 %v368
  %v392 = vunpack.c.l.b16 %v369
  %v393 = vunpack.c.l.b16 %v370
  %v394 = vpack.c.b16 %v387, %v386
  %v395 = vpack.c.b16 %v389, %v388
  %v396 = vpack.c.b16 %v391, %v390
  %v397 = vpack.c.b16 %v393, %v392
  %402 = vmatprep.subr.bf16.mxu0 0
  %403 = vmatpush1.bf16.msra.mxu0 %v394
  %404 = vmatprep.subr.bf16.mxu0 0
  %405 = vmatpush1.bf16.msra.mxu0 %v395
  %406 = vmatprep.subr.bf16.mxu0 0
  %407 = vmatpush1.bf16.msra.mxu0 %v396
  %408 = vmatprep.subr.bf16.mxu0 0
  %409 = vmatpush1.bf16.msra.mxu0 %v397
  %410 = vmatprep.subr.bf16.mxu0 0
  %411 = vmatpush1.bf16.msra.mxu0 0
  %412 = vmatprep.subr.bf16.mxu0 0
  %413 = vmatpush1.bf16.msra.mxu0 0
  %414 = vmatprep.subr.bf16.mxu0 0
  %415 = vmatpush1.bf16.msra.mxu0 0
  %416 = vmatprep.subr.bf16.mxu0 0
  %417 = vmatpush1.bf16.msra.mxu0 0
  %418 = vmatprep.subr.bf16.mxu0 0
  %419 = vmatpush1.bf16.msra.mxu0 0
  %420 = vmatprep.subr.bf16.mxu0 0
  %421 = vmatpush1.bf16.msra.mxu0 0
  %422 = vmatprep.subr.bf16.mxu0 0
  %423 = vmatpush1.bf16.msra.mxu0 0
  %424 = vmatprep.subr.bf16.mxu0 0
  %425 = vmatpush1.bf16.msra.mxu0 0
  %426 = vmatprep.subr.bf16.mxu0 0
  %427 = vmatpush1.bf16.msra.mxu0 0
  %428 = vmatprep.subr.bf16.mxu0 0
  %429 = vmatpush1.bf16.msra.mxu0 0
  %430 = vmatprep.subr.bf16.mxu0 0
  %431 = vmatpush1.bf16.msra.mxu0 0
  %432 = vmatprep.subr.bf16.mxu0 0
  %433 = vmatpush1.bf16.msra.mxu0 0
  %434 = vmatprep.mubr.bf16.mxu0 0
  %435 = vmatmul.mubr.bf16.gmra.mrb[0].mxu0 %v310
  %v436 = vpop.f32.mrb[0].mxu0
  %v437 = vadd.f32 %v376, %v436
  %v438 = vpop.f32.mrb[0].mxu0
  %v439 = vpop.f32.mrb[0].mxu0
  %v440 = vadd.f32 %v376, %v439
  %v441 = vpop.f32.mrb[0].mxu0
  %442 = vmatprep.mubr.bf16.mxu0 0
  %443 = vmatmul.mubr.bf16.gmra.mrb[0].mxu0 %v313
  %v444 = vpop.f32.mrb[0].mxu0
  %v445 = vadd.f32 %v376, %v444
  %v446 = vpop.f32.mrb[0].mxu0
  %v447 = vpop.f32.mrb[0].mxu0
  %v448 = vpop.f32.mrb[0].mxu0
  %449 = vdwg.mxu0
  %v450 = vld [vmem:[%s12] sm:$0xf]
  %v451 = vld [vmem:[%s12 + $0x4] sm:$0xf]
  %v452 = vld [vmem:[%s12 + $0x8] sm:$0xf]
  %v453 = vld [vmem:[%s12 + $0xc] sm:$0xf]
  %v454 = vld [vmem:[%s12 + $0x10] sm:$0xf]
  %v455 = vld [vmem:[%s12 + $0x14] sm:$0xf]
  %v456 = vld [vmem:[%s12 + $0x18] sm:$0xf]
  %v457 = vld [vmem:[%s12 + $0x1c] sm:$0xf]
  %v458 = vld [vmem:[%s13] sm:$0x1]
  %v460 = vlaneseq
  %v461 = vshrl.u32 %v460, 7
  %v462 = vsub.s32 0, %v461
  %v463 = vrot.slane %v458, %v462
  %v473 = vunpack.c.l.b16 %v450
  %v474 = vunpack.c.l.b16 %v451
  %v475 = vunpack.c.l.b16 %v452
  %v476 = vunpack.c.l.b16 %v453
  %v477 = vunpack.c.l.b16 %v454
  %v478 = vunpack.c.l.b16 %v455
  %v479 = vunpack.c.l.b16 %v456
  %v480 = vunpack.c.l.b16 %v457
  %v481 = vpack.c.b16 %v474, %v473
  %v482 = vpack.c.b16 %v476, %v475
  %v483 = vpack.c.b16 %v478, %v477
  %v484 = vpack.c.b16 %v480, %v479
  %489 = vmatprep.subr.bf16.mxu0 0
  %490 = vmatpush1.bf16.msra.mxu0 %v481
  %491 = vmatprep.subr.bf16.mxu0 0
  %492 = vmatpush1.bf16.msra.mxu0 %v482
  %493 = vmatprep.subr.bf16.mxu0 0
  %494 = vmatpush1.bf16.msra.mxu0 %v483
  %495 = vmatprep.subr.bf16.mxu0 0
  %496 = vmatpush1.bf16.msra.mxu0 %v484
  %497 = vmatprep.subr.bf16.mxu0 0
  %498 = vmatpush1.bf16.msra.mxu0 0
  %499 = vmatprep.subr.bf16.mxu0 0
  %500 = vmatpush1.bf16.msra.mxu0 0
  %501 = vmatprep.subr.bf16.mxu0 0
  %502 = vmatpush1.bf16.msra.mxu0 0
  %503 = vmatprep.subr.bf16.mxu0 0
  %504 = vmatpush1.bf16.msra.mxu0 0
  %505 = vmatprep.subr.bf16.mxu0 0
  %506 = vmatpush1.bf16.msra.mxu0 0
  %507 = vmatprep.subr.bf16.mxu0 0
  %508 = vmatpush1.bf16.msra.mxu0 0
  %509 = vmatprep.subr.bf16.mxu0 0
  %510 = vmatpush1.bf16.msra.mxu0 0
  %511 = vmatprep.subr.bf16.mxu0 0
  %512 = vmatpush1.bf16.msra.mxu0 0
  %513 = vmatprep.subr.bf16.mxu0 0
  %514 = vmatpush1.bf16.msra.mxu0 0
  %515 = vmatprep.subr.bf16.mxu0 0
  %516 = vmatpush1.bf16.msra.mxu0 0
  %517 = vmatprep.subr.bf16.mxu0 0
  %518 = vmatpush1.bf16.msra.mxu0 0
  %519 = vmatprep.subr.bf16.mxu0 0
  %520 = vmatpush1.bf16.msra.mxu0 0
  %521 = vmatprep.mubr.bf16.mxu0 0
  %522 = vmatmul.mubr.bf16.gmra.mrb[0].mxu0 %v310
  %v523 = vpop.f32.mrb[0].mxu0
  %v524 = vadd.f32 %v463, %v523
  %v525 = vpop.f32.mrb[0].mxu0
  %v526 = vpop.f32.mrb[0].mxu0
  %v527 = vadd.f32 %v463, %v526
  %v528 = vpop.f32.mrb[0].mxu0
  %529 = vmatprep.mubr.bf16.mxu0 0
  %530 = vmatmul.mubr.bf16.gmra.mrb[0].mxu0 %v313
  %v531 = vpop.f32.mrb[0].mxu0
  %v532 = vadd.f32 %v463, %v531
  %v533 = vpop.f32.mrb[0].mxu0
  %v534 = vpop.f32.mrb[0].mxu0
  %v535 = vpop.f32.mrb[0].mxu0
  %536 = vdwg.mxu0
  %v537 = vpack.c.bf16 %v353, %v350
  %v538 = vpack.c.bf16 %v358, %v358
  %v539 = vpack.c.bf16 %v440, %v437
  %v540 = vpack.c.bf16 %v445, %v445
  %vm541 = vcmask 261120
  %v543 = vsel %vm541, %v537, 0
  %v546 = vsel %vm541, %v538, 0
  %v549 = vsel %vm541, %v539, 0
  %v552 = vsel %vm541, %v540, 0
  %554 = vmatprep.subr.bf16.mxu0 0
  %555 = vmatpush1.bf16.xpose.msra.mxu0 %v549
  %556 = vmatprep.subr.bf16.mxu0 0
  %557 = vmatpush1.bf16.xpose.msra.mxu0 %v552
  %558 = vmatprep.subr.bf16.mxu0 0
  %559 = vmatpush1.bf16.xpose.msra.mxu0 0
  %560 = vmatprep.subr.bf16.mxu0 0
  %561 = vmatpush1.bf16.xpose.msra.mxu0 0
  %562 = vmatprep.subr.bf16.mxu0 0
  %563 = vmatpush1.bf16.xpose.msra.mxu0 0
  %564 = vmatprep.subr.bf16.mxu0 0
  %565 = vmatpush1.bf16.xpose.msra.mxu0 0
  %566 = vmatprep.subr.bf16.mxu0 0
  %567 = vmatpush1.bf16.xpose.msra.mxu0 0
  %568 = vmatprep.subr.bf16.mxu0 0
  %569 = vmatpush1.bf16.xpose.msra.mxu0 0
  %570 = vmatprep.subr.bf16.mxu0 0
  %571 = vmatpush1.bf16.xpose.msra.mxu0 0
  %572 = vmatprep.subr.bf16.mxu0 0
  %573 = vmatpush1.bf16.xpose.msra.mxu0 0
  %574 = vmatprep.subr.bf16.mxu0 0
  %575 = vmatpush1.bf16.xpose.msra.mxu0 0
  %576 = vmatprep.subr.bf16.mxu0 0
  %577 = vmatpush1.bf16.xpose.msra.mxu0 0
  %578 = vmatprep.subr.bf16.mxu0 0
  %579 = vmatpush1.bf16.xpose.msra.mxu0 0
  %580 = vmatprep.subr.bf16.mxu0 0
  %581 = vmatpush1.bf16.xpose.msra.mxu0 0
  %582 = vmatprep.subr.bf16.mxu0 0
  %583 = vmatpush1.bf16.xpose.msra.mxu0 0
  %584 = vmatprep.subr.bf16.mxu0 0
  %585 = vmatpush1.bf16.xpose.msra.mxu0 0
  %586 = vmatprep.mubr.bf16.mxu0 0
  %587 = vmatmul.mubr.bf16.gmra.mrb[0].mxu0 %v543
  %v588 = vpop.f32.mrb[0].mxu0
  %v589 = vadd.f32 %v202, %v588
  %v590 = vpop.f32.mrb[0].mxu0
  %v591 = vpop.f32.mrb[0].mxu0
  %v592 = vadd.f32 %v203, %v591
  %v593 = vpop.f32.mrb[0].mxu0
  %594 = vmatprep.mubr.bf16.mxu0 0
  %595 = vmatmul.mubr.bf16.gmra.mrb[0].mxu0 %v546
  %v596 = vpop.f32.mrb[0].mxu0
  %v597 = vadd.f32 %v204, %v596
  %v598 = vpop.f32.mrb[0].mxu0
  %v599 = vpop.f32.mrb[0].mxu0
  %v600 = vpop.f32.mrb[0].mxu0
  %601 = vdwg.mxu0
  %vm602 = vcmask 146432
  %v603 = vsel %vm602, %v589, -inf
  %604 = vmax.xlane.f32.xlu0 %v603
  %v605 = vpop.xlane.xlu0 %604
  %v606 = vsel %vm602, %v592, -inf
  %607 = vmax.xlane.f32.xlu0 %v606
  %v608 = vpop.xlane.xlu0 %607
  %vm609 = vcmask 140288
  %v610 = vsel %vm609, %v597, -inf
  %611 = vmax.xlane.f32.xlu0 %v610
  %v612 = vpop.xlane.xlu0 %611
  %v613 = vsub.f32 %v589, %v605
  %v614 = vsub.f32 %v592, %v608
  %v615 = vsub.f32 %v597, %v612
  %v616 = vmul.f32 %v613, 1.442695
  %v617 = vpow.pop %v616
  %v618 = vmul.f32 %v614, 1.442695
  %v619 = vpow.pop %v618
  %v620 = vmul.f32 %v615, 1.442695
  %v621 = vpow.pop %v620
  %v622 = vsel %vm602, %v617, 0.0
  %623 = vadd.xlane.f32.xlu0 %v622
  %v624 = vpop.xlane.xlu0 %623
  %v625 = vsel %vm602, %v619, 0.0
  %626 = vadd.xlane.f32.xlu0 %v625
  %v627 = vpop.xlane.xlu0 %626
  %v628 = vsel %vm609, %v621, 0.0
  %629 = vadd.xlane.f32.xlu0 %v628
  %v630 = vpop.xlane.xlu0 %629
  %v631 = vpack.c.bf16 %v619, %v617
  %v632 = vpack.c.bf16 %v621, %v621
  %v633 = vpack.c.bf16 %v527, %v524
  %v634 = vpack.c.bf16 %v532, %v532
  %v636 = vsel %vm602, %v631, 0
  %v639 = vsel %vm602, %v632, 0
  %v642 = vsel %vm200, %v634, 0
  %644 = vmatprep.subr.bf16.mxu0 0
  %645 = vmatpush1.bf16.msra.mxu0 %v633
  %646 = vmatprep.subr.bf16.mxu0 0
  %647 = vmatpush1.bf16.msra.mxu0 %v642
  %648 = vmatprep.subr.bf16.mxu0 0
  %649 = vmatpush1.bf16.msra.mxu0 0
  %650 = vmatprep.subr.bf16.mxu0 0
  %651 = vmatpush1.bf16.msra.mxu0 0
  %652 = vmatprep.subr.bf16.mxu0 0
  %653 = vmatpush1.bf16.msra.mxu0 0
  %654 = vmatprep.subr.bf16.mxu0 0
  %655 = vmatpush1.bf16.msra.mxu0 0
  %656 = vmatprep.subr.bf16.mxu0 0
  %657 = vmatpush1.bf16.msra.mxu0 0
  %658 = vmatprep.subr.bf16.mxu0 0
  %659 = vmatpush1.bf16.msra.mxu0 0
  %660 = vmatprep.subr.bf16.mxu0 0
  %661 = vmatpush1.bf16.msra.mxu0 0
  %662 = vmatprep.subr.bf16.mxu0 0
  %663 = vmatpush1.bf16.msra.mxu0 0
  %664 = vmatprep.subr.bf16.mxu0 0
  %665 = vmatpush1.bf16.msra.mxu0 0
  %666 = vmatprep.subr.bf16.mxu0 0
  %667 = vmatpush1.bf16.msra.mxu0 0
  %668 = vmatprep.subr.bf16.mxu0 0
  %669 = vmatpush1.bf16.msra.mxu0 0
  %670 = vmatprep.subr.bf16.mxu0 0
  %671 = vmatpush1.bf16.msra.mxu0 0
  %672 = vmatprep.subr.bf16.mxu0 0
  %673 = vmatpush1.bf16.msra.mxu0 0
  %674 = vmatprep.subr.bf16.mxu0 0
  %675 = vmatpush1.bf16.msra.mxu0 0
  %676 = vmatprep.mubr.bf16.mxu0 0
  %677 = vmatmul.mubr.bf16.gmra.mrb[0].mxu0 %v636
  %v678 = vpop.f32.mrb[0].mxu0
  %v679 = vadd.f32 0.0, %v678
  %v680 = vpop.f32.mrb[0].mxu0
  %v681 = vpop.f32.mrb[0].mxu0
  %v682 = vadd.f32 0.0, %v681
  %v683 = vpop.f32.mrb[0].mxu0
  %684 = vmatprep.mubr.bf16.mxu0 0
  %685 = vmatmul.mubr.bf16.gmra.mrb[0].mxu0 %v639
  %v686 = vpop.f32.mrb[0].mxu0
  %v687 = vadd.f32 0.0, %v686
  %v688 = vpop.f32.mrb[0].mxu0
  %v689 = vpop.f32.mrb[0].mxu0
  %v690 = vpop.f32.mrb[0].mxu0
  %691 = vdwg.mxu0
  %v692 = vrcp.pop %v624
  %v693 = vrcp.pop %v627
  %v694 = vrcp.pop %v630
  %v695 = vmul.f32 %v679, %v692
  %v696 = vmul.f32 %v682, %v693
  %v697 = vmul.f32 %v687, %v694
  %v698 = vpack.c.bf16 %v696, %v695
  %v699 = vpack.c.bf16 %v697, %v697
  %v700 = vld [vmem:[%s14] sm:$0xf]
  %v701 = vld [vmem:[%s14 + $0x4] sm:$0xf]
  %v702 = vld [vmem:[%s14 + $0x8] sm:$0xf]
  %v703 = vld [vmem:[%s14 + $0xc] sm:$0xf]
  %v708 = vunpack.c.l.b16 %v700
  %v709 = vunpack.c.l.b16 %v701
  %v710 = vunpack.c.l.b16 %v702
  %v711 = vunpack.c.l.b16 %v703
  %v712 = vpack.c.b16 %v709, %v708
  %v713 = vpack.c.b16 %v711, %v710
  %v717 = vsel %vm541, %v698, 0
  %v720 = vsel %vm541, %v699, 0
  %722 = vmatprep.subr.bf16.mxu0 0
  %723 = vmatpush1.bf16.msra.mxu0 %v712
  %724 = vmatprep.subr.bf16.mxu0 0
  %725 = vmatpush1.bf16.msra.mxu0 %v713
  %726 = vmatprep.subr.bf16.mxu0 0
  %727 = vmatpush1.bf16.msra.mxu0 0
  %728 = vmatprep.subr.bf16.mxu0 0
  %729 = vmatpush1.bf16.msra.mxu0 0
  %730 = vmatprep.subr.bf16.mxu0 0
  %731 = vmatpush1.bf16.msra.mxu0 0
  %732 = vmatprep.subr.bf16.mxu0 0
  %733 = vmatpush1.bf16.msra.mxu0 0
  %734 = vmatprep.subr.bf16.mxu0 0
  %735 = vmatpush1.bf16.msra.mxu0 0
  %736 = vmatprep.subr.bf16.mxu0 0
  %737 = vmatpush1.bf16.msra.mxu0 0
  %738 = vmatprep.subr.bf16.mxu0 0
  %739 = vmatpush1.bf16.msra.mxu0 0
  %740 = vmatprep.subr.bf16.mxu0 0
  %741 = vmatpush1.bf16.msra.mxu0 0
  %742 = vmatprep.subr.bf16.mxu0 0
  %743 = vmatpush1.bf16.msra.mxu0 0
  %744 = vmatprep.subr.bf16.mxu0 0
  %745 = vmatpush1.bf16.msra.mxu0 0
  %746 = vmatprep.subr.bf16.mxu0 0
  %747 = vmatpush1.bf16.msra.mxu0 0
  %748 = vmatprep.subr.bf16.mxu0 0
  %749 = vmatpush1.bf16.msra.mxu0 0
  %750 = vmatprep.subr.bf16.mxu0 0
  %751 = vmatpush1.bf16.msra.mxu0 0
  %752 = vmatprep.subr.bf16.mxu0 0
  %753 = vmatpush1.bf16.msra.mxu0 0
  %754 = vmatprep.mubr.bf16.mxu0 0
  %755 = vmatmul.mubr.bf16.gmra.mrb[0].mxu0 %v717
  %v756 = vpop.f32.mrb[0].mxu0
  %v757 = vadd.f32 0.0, %v756
  %v758 = vpop.f32.mrb[0].mxu0
  %v759 = vpop.f32.mrb[0].mxu0
  %v760 = vadd.f32 0.0, %v759
  %v761 = vpop.f32.mrb[0].mxu0
  %762 = vmatprep.mubr.bf16.mxu0 0
  %763 = vmatmul.mubr.bf16.gmra.mrb[0].mxu0 %v720
  %v764 = vpop.f32.mrb[0].mxu0
  %v765 = vadd.f32 0.0, %v764
  %v766 = vpop.f32.mrb[0].mxu0
  %v767 = vpop.f32.mrb[0].mxu0
  %v768 = vpop.f32.mrb[0].mxu0
  %769 = vdwg.mxu0
  %v771 = vlaneseq
  %v772 = vshrl.u32 %v771, 7
  %v773 = vsub.s32 0, %v772
  %v774 = vrot.slane %v269, %v773
  %v776 = vadd.f32 %v774, %v757
  %v777 = vadd.f32 %v774, %v760
  %v778 = vadd.f32 %v774, %v765
  %s779 = scalar_lea.vmem %s8, 32
  %v780 = vld [vmem:[%s779] sm:$0xf]
  %v781 = vld [vmem:[%s779 + $0x4] sm:$0xf]
  %v782 = vld [vmem:[%s779 + $0x8] sm:$0xf]
  %v783 = vld [vmem:[%s779 + $0xc] sm:$0xf]
  %v784 = vld [vmem:[%s779 + $0x10] sm:$0xf]
  %v785 = vld [vmem:[%s779 + $0x14] sm:$0xf]
  %v786 = vld [vmem:[%s779 + $0x18] sm:$0xf]
  %v787 = vld [vmem:[%s779 + $0x1c] sm:$0xf]
  %s788 = scalar_lea.vmem %s9, 1
  %v789 = vld [vmem:[%s788] sm:$0x1]
  %v791 = vlaneseq
  %v792 = vshrl.u32 %v791, 7
  %v793 = vsub.s32 0, %v792
  %v794 = vrot.slane %v789, %v793
  %v804 = vunpack.c.l.b16 %v780
  %v805 = vunpack.c.l.b16 %v781
  %v806 = vunpack.c.l.b16 %v782
  %v807 = vunpack.c.l.b16 %v783
  %v808 = vunpack.c.l.b16 %v784
  %v809 = vunpack.c.l.b16 %v785
  %v810 = vunpack.c.l.b16 %v786
  %v811 = vunpack.c.l.b16 %v787
  %v812 = vpack.c.b16 %v805, %v804
  %v813 = vpack.c.b16 %v807, %v806
  %v814 = vpack.c.b16 %v809, %v808
  %v815 = vpack.c.b16 %v811, %v810
  %820 = vmatprep.subr.bf16.mxu0 0
  %821 = vmatpush1.bf16.msra.mxu0 %v812
  %822 = vmatprep.subr.bf16.mxu0 0
  %823 = vmatpush1.bf16.msra.mxu0 %v813
  %824 = vmatprep.subr.bf16.mxu0 0
  %825 = vmatpush1.bf16.msra.mxu0 %v814
  %826 = vmatprep.subr.bf16.mxu0 0
  %827 = vmatpush1.bf16.msra.mxu0 %v815
  %828 = vmatprep.subr.bf16.mxu0 0
  %829 = vmatpush1.bf16.msra.mxu0 0
  %830 = vmatprep.subr.bf16.mxu0 0
  %831 = vmatpush1.bf16.msra.mxu0 0
  %832 = vmatprep.subr.bf16.mxu0 0
  %833 = vmatpush1.bf16.msra.mxu0 0
  %834 = vmatprep.subr.bf16.mxu0 0
  %835 = vmatpush1.bf16.msra.mxu0 0
  %836 = vmatprep.subr.bf16.mxu0 0
  %837 = vmatpush1.bf16.msra.mxu0 0
  %838 = vmatprep.subr.bf16.mxu0 0
  %839 = vmatpush1.bf16.msra.mxu0 0
  %840 = vmatprep.subr.bf16.mxu0 0
  %841 = vmatpush1.bf16.msra.mxu0 0
  %842 = vmatprep.subr.bf16.mxu0 0
  %843 = vmatpush1.bf16.msra.mxu0 0
  %844 = vmatprep.subr.bf16.mxu0 0
  %845 = vmatpush1.bf16.msra.mxu0 0
  %846 = vmatprep.subr.bf16.mxu0 0
  %847 = vmatpush1.bf16.msra.mxu0 0
  %848 = vmatprep.subr.bf16.mxu0 0
  %849 = vmatpush1.bf16.msra.mxu0 0
  %850 = vmatprep.subr.bf16.mxu0 0
  %851 = vmatpush1.bf16.msra.mxu0 0
  %852 = vmatprep.mubr.bf16.mxu0 0
  %853 = vmatmul.mubr.bf16.gmra.mrb[0].mxu0 %v310
  %v854 = vpop.f32.mrb[0].mxu0
  %v855 = vadd.f32 %v794, %v854
  %v856 = vpop.f32.mrb[0].mxu0
  %v857 = vpop.f32.mrb[0].mxu0
  %v858 = vadd.f32 %v794, %v857
  %v859 = vpop.f32.mrb[0].mxu0
  %860 = vmatprep.mubr.bf16.mxu0 0
  %861 = vmatmul.mubr.bf16.gmra.mrb[0].mxu0 %v313
  %v862 = vpop.f32.mrb[0].mxu0
  %v863 = vadd.f32 %v794, %v862
  %v864 = vpop.f32.mrb[0].mxu0
  %v865 = vpop.f32.mrb[0].mxu0
  %v866 = vpop.f32.mrb[0].mxu0
  %867 = vdwg.mxu0
  %s868 = scalar_lea.vmem %s10, 32
  %v869 = vld [vmem:[%s868] sm:$0xf]
  %v870 = vld [vmem:[%s868 + $0x4] sm:$0xf]
  %v871 = vld [vmem:[%s868 + $0x8] sm:$0xf]
  %v872 = vld [vmem:[%s868 + $0xc] sm:$0xf]
  %v873 = vld [vmem:[%s868 + $0x10] sm:$0xf]
  %v874 = vld [vmem:[%s868 + $0x14] sm:$0xf]
  %v875 = vld [vmem:[%s868 + $0x18] sm:$0xf]
  %v876 = vld [vmem:[%s868 + $0x1c] sm:$0xf]
  %s877 = scalar_lea.vmem %s11, 1
  %v878 = vld [vmem:[%s877] sm:$0x1]
  %v880 = vlaneseq
  %v881 = vshrl.u32 %v880, 7
  %v882 = vsub.s32 0, %v881
  %v883 = vrot.slane %v878, %v882
  %v893 = vunpack.c.l.b16 %v869
  %v894 = vunpack.c.l.b16 %v870
  %v895 = vunpack.c.l.b16 %v871
  %v896 = vunpack.c.l.b16 %v872
  %v897 = vunpack.c.l.b16 %v873
  %v898 = vunpack.c.l.b16 %v874
  %v899 = vunpack.c.l.b16 %v875
  %v900 = vunpack.c.l.b16 %v876
  %v901 = vpack.c.b16 %v894, %v893
  %v902 = vpack.c.b16 %v896, %v895
  %v903 = vpack.c.b16 %v898, %v897
  %v904 = vpack.c.b16 %v900, %v899
  %909 = vmatprep.subr.bf16.mxu0 0
  %910 = vmatpush1.bf16.msra.mxu0 %v901
  %911 = vmatprep.subr.bf16.mxu0 0
  %912 = vmatpush1.bf16.msra.mxu0 %v902
  %913 = vmatprep.subr.bf16.mxu0 0
  %914 = vmatpush1.bf16.msra.mxu0 %v903
  %915 = vmatprep.subr.bf16.mxu0 0
  %916 = vmatpush1.bf16.msra.mxu0 %v904
  %917 = vmatprep.subr.bf16.mxu0 0
  %918 = vmatpush1.bf16.msra.mxu0 0
  %919 = vmatprep.subr.bf16.mxu0 0
  %920 = vmatpush1.bf16.msra.mxu0 0
  %921 = vmatprep.subr.bf16.mxu0 0
  %922 = vmatpush1.bf16.msra.mxu0 0
  %923 = vmatprep.subr.bf16.mxu0 0
  %924 = vmatpush1.bf16.msra.mxu0 0
  %925 = vmatprep.subr.bf16.mxu0 0
  %926 = vmatpush1.bf16.msra.mxu0 0
  %927 = vmatprep.subr.bf16.mxu0 0
  %928 = vmatpush1.bf16.msra.mxu0 0
  %929 = vmatprep.subr.bf16.mxu0 0
  %930 = vmatpush1.bf16.msra.mxu0 0
  %931 = vmatprep.subr.bf16.mxu0 0
  %932 = vmatpush1.bf16.msra.mxu0 0
  %933 = vmatprep.subr.bf16.mxu0 0
  %934 = vmatpush1.bf16.msra.mxu0 0
  %935 = vmatprep.subr.bf16.mxu0 0
  %936 = vmatpush1.bf16.msra.mxu0 0
  %937 = vmatprep.subr.bf16.mxu0 0
  %938 = vmatpush1.bf16.msra.mxu0 0
  %939 = vmatprep.subr.bf16.mxu0 0
  %940 = vmatpush1.bf16.msra.mxu0 0
  %941 = vmatprep.mubr.bf16.mxu0 0
  %942 = vmatmul.mubr.bf16.gmra.mrb[0].mxu0 %v310
  %v943 = vpop.f32.mrb[0].mxu0
  %v944 = vadd.f32 %v883, %v943
  %v945 = vpop.f32.mrb[0].mxu0
  %v946 = vpop.f32.mrb[0].mxu0
  %v947 = vadd.f32 %v883, %v946
  %v948 = vpop.f32.mrb[0].mxu0
  %949 = vmatprep.mubr.bf16.mxu0 0
  %950 = vmatmul.mubr.bf16.gmra.mrb[0].mxu0 %v313
  %v951 = vpop.f32.mrb[0].mxu0
  %v952 = vadd.f32 %v883, %v951
  %v953 = vpop.f32.mrb[0].mxu0
  %v954 = vpop.f32.mrb[0].mxu0
  %v955 = vpop.f32.mrb[0].mxu0
  %956 = vdwg.mxu0
  %s957 = scalar_lea.vmem %s12, 32
  %v958 = vld [vmem:[%s957] sm:$0xf]
  %v959 = vld [vmem:[%s957 + $0x4] sm:$0xf]
  %v960 = vld [vmem:[%s957 + $0x8] sm:$0xf]
  %v961 = vld [vmem:[%s957 + $0xc] sm:$0xf]
  %v962 = vld [vmem:[%s957 + $0x10] sm:$0xf]
  %v963 = vld [vmem:[%s957 + $0x14] sm:$0xf]
  %v964 = vld [vmem:[%s957 + $0x18] sm:$0xf]
  %v965 = vld [vmem:[%s957 + $0x1c] sm:$0xf]
  %s966 = scalar_lea.vmem %s13, 1
  %v967 = vld [vmem:[%s966] sm:$0x1]
  %v969 = vlaneseq
  %v970 = vshrl.u32 %v969, 7
  %v971 = vsub.s32 0, %v970
  %v972 = vrot.slane %v967, %v971
  %v982 = vunpack.c.l.b16 %v958
  %v983 = vunpack.c.l.b16 %v959
  %v984 = vunpack.c.l.b16 %v960
  %v985 = vunpack.c.l.b16 %v961
  %v986 = vunpack.c.l.b16 %v962
  %v987 = vunpack.c.l.b16 %v963
  %v988 = vunpack.c.l.b16 %v964
  %v989 = vunpack.c.l.b16 %v965
  %v990 = vpack.c.b16 %v983, %v982
  %v991 = vpack.c.b16 %v985, %v984
  %v992 = vpack.c.b16 %v987, %v986
  %v993 = vpack.c.b16 %v989, %v988
  %998 = vmatprep.subr.bf16.mxu0 0
  %999 = vmatpush1.bf16.msra.mxu0 %v990
  %1000 = vmatprep.subr.bf16.mxu0 0
  %1001 = vmatpush1.bf16.msra.mxu0 %v991
  %1002 = vmatprep.subr.bf16.mxu0 0
  %1003 = vmatpush1.bf16.msra.mxu0 %v992
  %1004 = vmatprep.subr.bf16.mxu0 0
  %1005 = vmatpush1.bf16.msra.mxu0 %v993
  %1006 = vmatprep.subr.bf16.mxu0 0
  %1007 = vmatpush1.bf16.msra.mxu0 0
  %1008 = vmatprep.subr.bf16.mxu0 0
  %1009 = vmatpush1.bf16.msra.mxu0 0
  %1010 = vmatprep.subr.bf16.mxu0 0
  %1011 = vmatpush1.bf16.msra.mxu0 0
  %1012 = vmatprep.subr.bf16.mxu0 0
  %1013 = vmatpush1.bf16.msra.mxu0 0
  %1014 = vmatprep.subr.bf16.mxu0 0
  %1015 = vmatpush1.bf16.msra.mxu0 0
  %1016 = vmatprep.subr.bf16.mxu0 0
  %1017 = vmatpush1.bf16.msra.mxu0 0
  %1018 = vmatprep.subr.bf16.mxu0 0
  %1019 = vmatpush1.bf16.msra.mxu0 0
  %1020 = vmatprep.subr.bf16.mxu0 0
  %1021 = vmatpush1.bf16.msra.mxu0 0
  %1022 = vmatprep.subr.bf16.mxu0 0
  %1023 = vmatpush1.bf16.msra.mxu0 0
  %1024 = vmatprep.subr.bf16.mxu0 0
  %1025 = vmatpush1.bf16.msra.mxu0 0
  %1026 = vmatprep.subr.bf16.mxu0 0
  %1027 = vmatpush1.bf16.msra.mxu0 0
  %1028 = vmatprep.subr.bf16.mxu0 0
  %1029 = vmatpush1.bf16.msra.mxu0 0
  %1030 = vmatprep.mubr.bf16.mxu0 0
  %1031 = vmatmul.mubr.bf16.gmra.mrb[0].mxu0 %v310
  %v1032 = vpop.f32.mrb[0].mxu0
  %v1033 = vadd.f32 %v972, %v1032
  %v1034 = vpop.f32.mrb[0].mxu0
  %v1035 = vpop.f32.mrb[0].mxu0
  %v1036 = vadd.f32 %v972, %v1035
  %v1037 = vpop.f32.mrb[0].mxu0
  %1038 = vmatprep.mubr.bf16.mxu0 0
  %1039 = vmatmul.mubr.bf16.gmra.mrb[0].mxu0 %v313
  %v1040 = vpop.f32.mrb[0].mxu0
  %v1041 = vadd.f32 %v972, %v1040
  %v1042 = vpop.f32.mrb[0].mxu0
  %v1043 = vpop.f32.mrb[0].mxu0
  %v1044 = vpop.f32.mrb[0].mxu0
  %1045 = vdwg.mxu0
  %v1046 = vpack.c.bf16 %v858, %v855
  %v1047 = vpack.c.bf16 %v863, %v863
  %v1048 = vpack.c.bf16 %v947, %v944
  %v1049 = vpack.c.bf16 %v952, %v952
  %v1051 = vsel %vm541, %v1046, 0
  %v1054 = vsel %vm541, %v1047, 0
  %v1057 = vsel %vm541, %v1048, 0
  %v1060 = vsel %vm541, %v1049, 0
  %1062 = vmatprep.subr.bf16.mxu0 0
  %1063 = vmatpush1.bf16.xpose.msra.mxu0 %v1057
  %1064 = vmatprep.subr.bf16.mxu0 0
  %1065 = vmatpush1.bf16.xpose.msra.mxu0 %v1060
  %1066 = vmatprep.subr.bf16.mxu0 0
  %1067 = vmatpush1.bf16.xpose.msra.mxu0 0
  %1068 = vmatprep.subr.bf16.mxu0 0
  %1069 = vmatpush1.bf16.xpose.msra.mxu0 0
  %1070 = vmatprep.subr.bf16.mxu0 0
  %1071 = vmatpush1.bf16.xpose.msra.mxu0 0
  %1072 = vmatprep.subr.bf16.mxu0 0
  %1073 = vmatpush1.bf16.xpose.msra.mxu0 0
  %1074 = vmatprep.subr.bf16.mxu0 0
  %1075 = vmatpush1.bf16.xpose.msra.mxu0 0
  %1076 = vmatprep.subr.bf16.mxu0 0
  %1077 = vmatpush1.bf16.xpose.msra.mxu0 0
  %1078 = vmatprep.subr.bf16.mxu0 0
  %1079 = vmatpush1.bf16.xpose.msra.mxu0 0
  %1080 = vmatprep.subr.bf16.mxu0 0
  %1081 = vmatpush1.bf16.xpose.msra.mxu0 0
  %1082 = vmatprep.subr.bf16.mxu0 0
  %1083 = vmatpush1.bf16.xpose.msra.mxu0 0
  %1084 = vmatprep.subr.bf16.mxu0 0
  %1085 = vmatpush1.bf16.xpose.msra.mxu0 0
  %1086 = vmatprep.subr.bf16.mxu0 0
  %1087 = vmatpush1.bf16.xpose.msra.mxu0 0
  %1088 = vmatprep.subr.bf16.mxu0 0
  %1089 = vmatpush1.bf16.xpose.msra.mxu0 0
  %1090 = vmatprep.subr.bf16.mxu0 0
  %1091 = vmatpush1.bf16.xpose.msra.mxu0 0
  %1092 = vmatprep.subr.bf16.mxu0 0
  %1093 = vmatpush1.bf16.xpose.msra.mxu0 0
  %1094 = vmatprep.mubr.bf16.mxu0 0
  %1095 = vmatmul.mubr.bf16.gmra.mrb[0].mxu0 %v1051
  %v1096 = vpop.f32.mrb[0].mxu0
  %v1097 = vadd.f32 %v202, %v1096
  %v1098 = vpop.f32.mrb[0].mxu0
  %v1099 = vpop.f32.mrb[0].mxu0
  %v1100 = vadd.f32 %v203, %v1099
  %v1101 = vpop.f32.mrb[0].mxu0
  %1102 = vmatprep.mubr.bf16.mxu0 0
  %1103 = vmatmul.mubr.bf16.gmra.mrb[0].mxu0 %v1054
  %v1104 = vpop.f32.mrb[0].mxu0
  %v1105 = vadd.f32 %v204, %v1104
  %v1106 = vpop.f32.mrb[0].mxu0
  %v1107 = vpop.f32.mrb[0].mxu0
  %v1108 = vpop.f32.mrb[0].mxu0
  %1109 = vdwg.mxu0
  %v1110 = vsel %vm602, %v1097, -inf
  %1111 = vmax.xlane.f32.xlu0 %v1110
  %v1112 = vpop.xlane.xlu0 %1111
  %v1113 = vsel %vm602, %v1100, -inf
  %1114 = vmax.xlane.f32.xlu0 %v1113
  %v1115 = vpop.xlane.xlu0 %1114
  %v1116 = vsel %vm609, %v1105, -inf
  %1117 = vmax.xlane.f32.xlu0 %v1116
  %v1118 = vpop.xlane.xlu0 %1117
  %v1119 = vsub.f32 %v1097, %v1112
  %v1120 = vsub.f32 %v1100, %v1115
  %v1121 = vsub.f32 %v1105, %v1118
  %v1122 = vmul.f32 %v1119, 1.442695
  %v1123 = vpow.pop %v1122
  %v1124 = vmul.f32 %v1120, 1.442695
  %v1125 = vpow.pop %v1124
  %v1126 = vmul.f32 %v1121, 1.442695
  %v1127 = vpow.pop %v1126
  %v1128 = vsel %vm602, %v1123, 0.0
  %1129 = vadd.xlane.f32.xlu0 %v1128
  %v1130 = vpop.xlane.xlu0 %1129
  %v1131 = vsel %vm602, %v1125, 0.0
  %1132 = vadd.xlane.f32.xlu0 %v1131
  %v1133 = vpop.xlane.xlu0 %1132
  %v1134 = vsel %vm609, %v1127, 0.0
  %1135 = vadd.xlane.f32.xlu0 %v1134
  %v1136 = vpop.xlane.xlu0 %1135
  %v1137 = vpack.c.bf16 %v1125, %v1123
  %v1138 = vpack.c.bf16 %v1127, %v1127
  %v1139 = vpack.c.bf16 %v1036, %v1033
  %v1140 = vpack.c.bf16 %v1041, %v1041
  %v1142 = vsel %vm602, %v1137, 0
  %v1145 = vsel %vm602, %v1138, 0
  %v1148 = vsel %vm200, %v1140, 0
  %1150 = vmatprep.subr.bf16.mxu0 0
  %1151 = vmatpush1.bf16.msra.mxu0 %v1139
  %1152 = vmatprep.subr.bf16.mxu0 0
  %1153 = vmatpush1.bf16.msra.mxu0 %v1148
  %1154 = vmatprep.subr.bf16.mxu0 0
  %1155 = vmatpush1.bf16.msra.mxu0 0
  %1156 = vmatprep.subr.bf16.mxu0 0
  %1157 = vmatpush1.bf16.msra.mxu0 0
  %1158 = vmatprep.subr.bf16.mxu0 0
  %1159 = vmatpush1.bf16.msra.mxu0 0
  %1160 = vmatprep.subr.bf16.mxu0 0
  %1161 = vmatpush1.bf16.msra.mxu0 0
  %1162 = vmatprep.subr.bf16.mxu0 0
  %1163 = vmatpush1.bf16.msra.mxu0 0
  %1164 = vmatprep.subr.bf16.mxu0 0
  %1165 = vmatpush1.bf16.msra.mxu0 0
  %1166 = vmatprep.subr.bf16.mxu0 0
  %1167 = vmatpush1.bf16.msra.mxu0 0
  %1168 = vmatprep.subr.bf16.mxu0 0
  %1169 = vmatpush1.bf16.msra.mxu0 0
  %1170 = vmatprep.subr.bf16.mxu0 0
  %1171 = vmatpush1.bf16.msra.mxu0 0
  %1172 = vmatprep.subr.bf16.mxu0 0
  %1173 = vmatpush1.bf16.msra.mxu0 0
  %1174 = vmatprep.subr.bf16.mxu0 0
  %1175 = vmatpush1.bf16.msra.mxu0 0
  %1176 = vmatprep.subr.bf16.mxu0 0
  %1177 = vmatpush1.bf16.msra.mxu0 0
  %1178 = vmatprep.subr.bf16.mxu0 0
  %1179 = vmatpush1.bf16.msra.mxu0 0
  %1180 = vmatprep.subr.bf16.mxu0 0
  %1181 = vmatpush1.bf16.msra.mxu0 0
  %1182 = vmatprep.mubr.bf16.mxu0 0
  %1183 = vmatmul.mubr.bf16.gmra.mrb[0].mxu0 %v1142
  %v1184 = vpop.f32.mrb[0].mxu0
  %v1185 = vadd.f32 0.0, %v1184
  %v1186 = vpop.f32.mrb[0].mxu0
  %v1187 = vpop.f32.mrb[0].mxu0
  %v1188 = vadd.f32 0.0, %v1187
  %v1189 = vpop.f32.mrb[0].mxu0
  %1190 = vmatprep.mubr.bf16.mxu0 0
  %1191 = vmatmul.mubr.bf16.gmra.mrb[0].mxu0 %v1145
  %v1192 = vpop.f32.mrb[0].mxu0
  %v1193 = vadd.f32 0.0, %v1192
  %v1194 = vpop.f32.mrb[0].mxu0
  %v1195 = vpop.f32.mrb[0].mxu0
  %v1196 = vpop.f32.mrb[0].mxu0
  %1197 = vdwg.mxu0
  %v1198 = vrcp.pop %v1130
  %v1199 = vrcp.pop %v1133
  %v1200 = vrcp.pop %v1136
  %v1201 = vmul.f32 %v1185, %v1198
  %v1202 = vmul.f32 %v1188, %v1199
  %v1203 = vmul.f32 %v1193, %v1200
  %v1204 = vpack.c.bf16 %v1202, %v1201
  %v1205 = vpack.c.bf16 %v1203, %v1203
  %s1206 = scalar_lea.vmem %s14, 16
  %v1207 = vld [vmem:[%s1206] sm:$0xf]
  %v1208 = vld [vmem:[%s1206 + $0x4] sm:$0xf]
  %v1209 = vld [vmem:[%s1206 + $0x8] sm:$0xf]
  %v1210 = vld [vmem:[%s1206 + $0xc] sm:$0xf]
  %v1215 = vunpack.c.l.b16 %v1207
  %v1216 = vunpack.c.l.b16 %v1208
  %v1217 = vunpack.c.l.b16 %v1209
  %v1218 = vunpack.c.l.b16 %v1210
  %v1219 = vpack.c.b16 %v1216, %v1215
  %v1220 = vpack.c.b16 %v1218, %v1217
  %v1224 = vsel %vm541, %v1204, 0
  %v1227 = vsel %vm541, %v1205, 0
  %1229 = vmatprep.subr.bf16.mxu0 0
  %1230 = vmatpush1.bf16.msra.mxu0 %v1219
  %1231 = vmatprep.subr.bf16.mxu0 0
  %1232 = vmatpush1.bf16.msra.mxu0 %v1220
  %1233 = vmatprep.subr.bf16.mxu0 0
  %1234 = vmatpush1.bf16.msra.mxu0 0
  %1235 = vmatprep.subr.bf16.mxu0 0
  %1236 = vmatpush1.bf16.msra.mxu0 0
  %1237 = vmatprep.subr.bf16.mxu0 0
  %1238 = vmatpush1.bf16.msra.mxu0 0
  %1239 = vmatprep.subr.bf16.mxu0 0
  %1240 = vmatpush1.bf16.msra.mxu0 0
  %1241 = vmatprep.subr.bf16.mxu0 0
  %1242 = vmatpush1.bf16.msra.mxu0 0
  %1243 = vmatprep.subr.bf16.mxu0 0
  %1244 = vmatpush1.bf16.msra.mxu0 0
  %1245 = vmatprep.subr.bf16.mxu0 0
  %1246 = vmatpush1.bf16.msra.mxu0 0
  %1247 = vmatprep.subr.bf16.mxu0 0
  %1248 = vmatpush1.bf16.msra.mxu0 0
  %1249 = vmatprep.subr.bf16.mxu0 0
  %1250 = vmatpush1.bf16.msra.mxu0 0
  %1251 = vmatprep.subr.bf16.mxu0 0
  %1252 = vmatpush1.bf16.msra.mxu0 0
  %1253 = vmatprep.subr.bf16.mxu0 0
  %1254 = vmatpush1.bf16.msra.mxu0 0
  %1255 = vmatprep.subr.bf16.mxu0 0
  %1256 = vmatpush1.bf16.msra.mxu0 0
  %1257 = vmatprep.subr.bf16.mxu0 0
  %1258 = vmatpush1.bf16.msra.mxu0 0
  %1259 = vmatprep.subr.bf16.mxu0 0
  %1260 = vmatpush1.bf16.msra.mxu0 0
  %1261 = vmatprep.mubr.bf16.mxu0 0
  %1262 = vmatmul.mubr.bf16.gmra.mrb[0].mxu0 %v1224
  %v1263 = vpop.f32.mrb[0].mxu0
  %v1264 = vadd.f32 0.0, %v1263
  %v1265 = vpop.f32.mrb[0].mxu0
  %v1266 = vpop.f32.mrb[0].mxu0
  %v1267 = vadd.f32 0.0, %v1266
  %v1268 = vpop.f32.mrb[0].mxu0
  %1269 = vmatprep.mubr.bf16.mxu0 0
  %1270 = vmatmul.mubr.bf16.gmra.mrb[0].mxu0 %v1227
  %v1271 = vpop.f32.mrb[0].mxu0
  %v1272 = vadd.f32 0.0, %v1271
  %v1273 = vpop.f32.mrb[0].mxu0
  %v1274 = vpop.f32.mrb[0].mxu0
  %v1275 = vpop.f32.mrb[0].mxu0
  %1276 = vdwg.mxu0
  %v1277 = vadd.f32 %v776, %v1264
  %v1278 = vadd.f32 %v777, %v1267
  %v1279 = vadd.f32 %v778, %v1272
  %v1280 = vadd.f32 %v191, %v1277
  %v1281 = vadd.f32 %v192, %v1278
  %v1282 = vadd.f32 %v201, %v1279
  %v1283 = vld [vmem:[%s16] sm:$0x1]
  %v1284 = vld [vmem:[%s17] sm:$0x1]
  %v1285 = vsel %vm207, %v1280, 0.0
  %1286 = vadd.xlane.f32.xlu0 %v1285
  %v1287 = vpop.xlane.xlu0 %1286
  %v1288 = vsel %vm207, %v1281, 0.0
  %1289 = vadd.xlane.f32.xlu0 %v1288
  %v1290 = vpop.xlane.xlu0 %1289
  %v1291 = vsel %vm214, %v1282, 0.0
  %1292 = vadd.xlane.f32.xlu0 %v1291
  %v1293 = vpop.xlane.xlu0 %1292
  %v1294 = vmul.f32 %v1287, %v218
  %v1295 = vmul.f32 %v1290, %v218
  %v1296 = vmul.f32 %v1293, %v218
  %v1297 = vsub.f32 %v1280, %v1294
  %v1298 = vsub.f32 %v1281, %v1295
  %v1299 = vsub.f32 %v1282, %v1296
  %v1300 = vmul.f32 %v1297, %v1297
  %v1301 = vmul.f32 %v1298, %v1298
  %v1302 = vmul.f32 %v1299, %v1299
  %v1303 = vsel %vm207, %v1300, 0.0
  %1304 = vadd.xlane.f32.xlu0 %v1303
  %v1305 = vpop.xlane.xlu0 %1304
  %v1306 = vsel %vm207, %v1301, 0.0
  %1307 = vadd.xlane.f32.xlu0 %v1306
  %v1308 = vpop.xlane.xlu0 %1307
  %v1309 = vsel %vm214, %v1302, 0.0
  %1310 = vadd.xlane.f32.xlu0 %v1309
  %v1311 = vpop.xlane.xlu0 %1310
  %v1312 = vmul.f32 %v1305, %v218
  %v1313 = vmul.f32 %v1308, %v218
  %v1314 = vmul.f32 %v1311, %v218
  %v1315 = vadd.f32 %v1312, 1e-05
  %v1316 = vadd.f32 %v1313, 1e-05
  %v1317 = vadd.f32 %v1314, 1e-05
  %v1318 = vrsqrt.pop %v1315
  %v1319 = vrsqrt.pop %v1316
  %v1320 = vrsqrt.pop %v1317
  %v1321 = vmul.f32 %v1297, %v1318
  %v1322 = vmul.f32 %v1298, %v1319
  %v1323 = vmul.f32 %v1299, %v1320
  %v1325 = vlaneseq
  %v1326 = vshrl.u32 %v1325, 7
  %v1327 = vsub.s32 0, %v1326
  %v1328 = vrot.slane %v1283, %v1327
  %v1330 = vmul.f32 %v1321, %v1328
  %v1331 = vmul.f32 %v1322, %v1328
  %v1332 = vmul.f32 %v1323, %v1328
  %v1334 = vlaneseq
  %v1335 = vshrl.u32 %v1334, 7
  %v1336 = vsub.s32 0, %v1335
  %v1337 = vrot.slane %v1284, %v1336
  %v1339 = vadd.f32 %v1330, %v1337
  %v1340 = vadd.f32 %v1331, %v1337
  %v1341 = vadd.f32 %v1332, %v1337
  %v1342 = vpack.c.bf16 %v1340, %v1339
  %v1343 = vpack.c.bf16 %v1341, %v1341
  %v1344 = vld [vmem:[%s18] sm:$0xff]
  %v1345 = vld [vmem:[%s18 + $0x8] sm:$0xff]
  %v1346 = vld [vmem:[%s18 + $0x10] sm:$0xff]
  %v1347 = vld [vmem:[%s18 + $0x18] sm:$0xff]
  %v1348 = vld [vmem:[%s18 + $0x20] sm:$0xff]
  %v1349 = vld [vmem:[%s18 + $0x28] sm:$0xff]
  %v1350 = vld [vmem:[%s18 + $0x30] sm:$0xff]
  %v1351 = vld [vmem:[%s18 + $0x38] sm:$0xff]
  %v1352 = vld [vmem:[%s19] sm:$0x3]
  %v1354 = vlaneseq
  %v1355 = vshrl.u32 %v1354, 7
  %v1356 = vsub.s32 0, %v1355
  %v1357 = vrot.slane %v1352, %v1356
  %v1358 = vlaneseq
  %v1359 = vshrl.u32 %v1358, 7
  %v1360 = vsub.s32 1, %v1359
  %v1361 = vrot.slane %v1352, %v1360
  %v1372 = vunpack.c.l.b16 %v1344
  %v1373 = vunpack.c.h.b16 %v1344
  %v1374 = vunpack.c.l.b16 %v1345
  %v1375 = vunpack.c.h.b16 %v1345
  %v1376 = vunpack.c.l.b16 %v1346
  %v1377 = vunpack.c.h.b16 %v1346
  %v1378 = vunpack.c.l.b16 %v1347
  %v1379 = vunpack.c.h.b16 %v1347
  %v1380 = vunpack.c.l.b16 %v1348
  %v1381 = vunpack.c.h.b16 %v1348
  %v1382 = vunpack.c.l.b16 %v1349
  %v1383 = vunpack.c.h.b16 %v1349
  %v1384 = vunpack.c.l.b16 %v1350
  %v1385 = vunpack.c.h.b16 %v1350
  %v1386 = vunpack.c.l.b16 %v1351
  %v1387 = vunpack.c.h.b16 %v1351
  %v1388 = vpack.c.b16 %v1374, %v1372
  %v1389 = vpack.c.b16 %v1375, %v1373
  %v1390 = vpack.c.b16 %v1378, %v1376
  %v1391 = vpack.c.b16 %v1379, %v1377
  %v1392 = vpack.c.b16 %v1382, %v1380
  %v1393 = vpack.c.b16 %v1383, %v1381
  %v1394 = vpack.c.b16 %v1386, %v1384
  %v1395 = vpack.c.b16 %v1387, %v1385
  %v1405 = vsel %vm207, %v1342, 0
  %v1408 = vsel %vm207, %v1343, 0
  %1410 = vmatprep.subr.bf16.mxu0 %v1389
  %1411 = vmatpush1.bf16.msra.mxu0 %v1388
  %1412 = vmatprep.subr.bf16.mxu0 %v1391
  %1413 = vmatpush1.bf16.msra.mxu0 %v1390
  %1414 = vmatprep.subr.bf16.mxu0 %v1393
  %1415 = vmatpush1.bf16.msra.mxu0 %v1392
  %1416 = vmatprep.subr.bf16.mxu0 %v1395
  %1417 = vmatpush1.bf16.msra.mxu0 %v1394
  %1418 = vmatprep.subr.bf16.mxu0 0
  %1419 = vmatpush1.bf16.msra.mxu0 0
  %1420 = vmatprep.subr.bf16.mxu0 0
  %1421 = vmatpush1.bf16.msra.mxu0 0
  %1422 = vmatprep.subr.bf16.mxu0 0
  %1423 = vmatpush1.bf16.msra.mxu0 0
  %1424 = vmatprep.subr.bf16.mxu0 0
  %1425 = vmatpush1.bf16.msra.mxu0 0
  %1426 = vmatprep.subr.bf16.mxu0 0
  %1427 = vmatpush1.bf16.msra.mxu0 0
  %1428 = vmatprep.subr.bf16.mxu0 0
  %1429 = vmatpush1.bf16.msra.mxu0 0
  %1430 = vmatprep.subr.bf16.mxu0 0
  %1431 = vmatpush1.bf16.msra.mxu0 0
  %1432 = vmatprep.subr.bf16.mxu0 0
  %1433 = vmatpush1.bf16.msra.mxu0 0
  %1434 = vmatprep.subr.bf16.mxu0 0
  %1435 = vmatpush1.bf16.msra.mxu0 0
  %1436 = vmatprep.subr.bf16.mxu0 0
  %1437 = vmatpush1.bf16.msra.mxu0 0
  %1438 = vmatprep.subr.bf16.mxu0 0
  %1439 = vmatpush1.bf16.msra.mxu0 0
  %1440 = vmatprep.subr.bf16.mxu0 0
  %1441 = vmatpush1.bf16.msra.mxu0 0
  %1442 = vmatprep.mubr.bf16.mxu0 0
  %1443 = vmatmul.mubr.bf16.gmra.mrb[0].mxu0 %v1405
  %v1444 = vpop.f32.mrb[0].mxu0
  %v1445 = vadd.f32 %v1357, %v1444
  %v1446 = vpop.f32.mrb[0].mxu0
  %v1447 = vadd.f32 %v1361, %v1446
  %v1448 = vpop.f32.mrb[0].mxu0
  %v1449 = vadd.f32 %v1357, %v1448
  %v1450 = vpop.f32.mrb[0].mxu0
  %v1451 = vadd.f32 %v1361, %v1450
  %1452 = vmatprep.mubr.bf16.mxu0 0
  %1453 = vmatmul.mubr.bf16.gmra.mrb[0].mxu0 %v1408
  %v1454 = vpop.f32.mrb[0].mxu0
  %v1455 = vadd.f32 %v1357, %v1454
  %v1456 = vpop.f32.mrb[0].mxu0
  %v1457 = vadd.f32 %v1361, %v1456
  %v1458 = vpop.f32.mrb[0].mxu0
  %v1459 = vpop.f32.mrb[0].mxu0
  %1460 = vdwg.mxu0
  %v1461 = vmul.f32 %v1445, 0.5
  %v1462 = vmul.f32 %v1447, 0.5
  %v1463 = vmul.f32 %v1449, 0.5
  %v1464 = vmul.f32 %v1451, 0.5
  %v1465 = vmul.f32 %v1455, 0.5
  %v1466 = vmul.f32 %v1457, 0.5
  %v1467 = vmul.f32 %v1445, 0.044715
  %v1468 = vmul.f32 %v1447, 0.044715
  %v1469 = vmul.f32 %v1449, 0.044715
  %v1470 = vmul.f32 %v1451, 0.044715
  %v1471 = vmul.f32 %v1455, 0.044715
  %v1472 = vmul.f32 %v1457, 0.044715
  %v1473 = vmul.f32 %v1467, %v1445
  %v1474 = vmul.f32 %v1468, %v1447
  %v1475 = vmul.f32 %v1469, %v1449
  %v1476 = vmul.f32 %v1470, %v1451
  %v1477 = vmul.f32 %v1471, %v1455
  %v1478 = vmul.f32 %v1472, %v1457
  %v1479 = vmul.f32 %v1473, %v1445
  %v1480 = vmul.f32 %v1474, %v1447
  %v1481 = vmul.f32 %v1475, %v1449
  %v1482 = vmul.f32 %v1476, %v1451
  %v1483 = vmul.f32 %v1477, %v1455
  %v1484 = vmul.f32 %v1478, %v1457
  %v1485 = vadd.f32 %v1445, %v1479
  %v1486 = vadd.f32 %v1447, %v1480
  %v1487 = vadd.f32 %v1449, %v1481
  %v1488 = vadd.f32 %v1451, %v1482
  %v1489 = vadd.f32 %v1455, %v1483
  %v1490 = vadd.f32 %v1457, %v1484
  %v1491 = vmul.f32 %v1485, 0.7978846
  %v1492 = vmul.f32 %v1486, 0.7978846
  %v1493 = vmul.f32 %v1487, 0.7978846
  %v1494 = vmul.f32 %v1488, 0.7978846
  %v1495 = vmul.f32 %v1489, 0.7978846
  %v1496 = vmul.f32 %v1490, 0.7978846
  %v1497 = vtanh.pop %v1491
  %v1498 = vtanh.pop %v1492
  %v1499 = vtanh.pop %v1493
  %v1500 = vtanh.pop %v1494
  %v1501 = vtanh.pop %v1495
  %v1502 = vtanh.pop %v1496
  %v1503 = vadd.f32 %v1497, 1.0
  %v1504 = vadd.f32 %v1498, 1.0
  %v1505 = vadd.f32 %v1499, 1.0
  %v1506 = vadd.f32 %v1500, 1.0
  %v1507 = vadd.f32 %v1501, 1.0
  %v1508 = vadd.f32 %v1502, 1.0
  %v1509 = vmul.f32 %v1461, %v1503
  %v1510 = vmul.f32 %v1462, %v1504
  %v1511 = vmul.f32 %v1463, %v1505
  %v1512 = vmul.f32 %v1464, %v1506
  %v1513 = vmul.f32 %v1465, %v1507
  %v1514 = vmul.f32 %v1466, %v1508
  %v1515 = vpack.c.bf16 %v1511, %v1509
  %v1516 = vpack.c.bf16 %v1512, %v1510
  %v1517 = vpack.c.bf16 %v1513, %v1513
  %v1518 = vpack.c.bf16 %v1514, %v1514
  %v1519 = vld [vmem:[%s20] sm:$0xf]
  %v1520 = vld [vmem:[%s20 + $0x4] sm:$0xf]
  %v1521 = vld [vmem:[%s20 + $0x8] sm:$0xf]
  %v1522 = vld [vmem:[%s20 + $0xc] sm:$0xf]
  %v1523 = vld [vmem:[%s20 + $0x10] sm:$0xf]
  %v1524 = vld [vmem:[%s20 + $0x14] sm:$0xf]
  %v1525 = vld [vmem:[%s20 + $0x18] sm:$0xf]
  %v1526 = vld [vmem:[%s20 + $0x1c] sm:$0xf]
  %v1527 = vld [vmem:[%s20 + $0x20] sm:$0xf]
  %v1528 = vld [vmem:[%s20 + $0x24] sm:$0xf]
  %v1529 = vld [vmem:[%s20 + $0x28] sm:$0xf]
  %v1530 = vld [vmem:[%s20 + $0x2c] sm:$0xf]
  %v1531 = vld [vmem:[%s20 + $0x30] sm:$0xf]
  %v1532 = vld [vmem:[%s20 + $0x34] sm:$0xf]
  %v1533 = vld [vmem:[%s20 + $0x38] sm:$0xf]
  %v1534 = vld [vmem:[%s20 + $0x3c] sm:$0xf]
  %v1535 = vld [vmem:[%s20 + $0x40] sm:$0xf]
  %v1536 = vld [vmem:[%s20 + $0x44] sm:$0xf]
  %v1537 = vld [vmem:[%s20 + $0x48] sm:$0xf]
  %v1538 = vld [vmem:[%s20 + $0x4c] sm:$0xf]
  %v1539 = vld [vmem:[%s20 + $0x50] sm:$0xf]
  %v1540 = vld [vmem:[%s20 + $0x54] sm:$0xf]
  %v1541 = vld [vmem:[%s20 + $0x58] sm:$0xf]
  %v1542 = vld [vmem:[%s20 + $0x5c] sm:$0xf]
  %v1543 = vld [vmem:[%s20 + $0x60] sm:$0xf]
  %v1544 = vld [vmem:[%s20 + $0x64] sm:$0xf]
  %v1545 = vld [vmem:[%s20 + $0x68] sm:$0xf]
  %v1546 = vld [vmem:[%s20 + $0x6c] sm:$0xf]
  %v1547 = vld [vmem:[%s20 + $0x70] sm:$0xf]
  %v1548 = vld [vmem:[%s20 + $0x74] sm:$0xf]
  %v1549 = vld [vmem:[%s20 + $0x78] sm:$0xf]
  %v1550 = vld [vmem:[%s20 + $0x7c] sm:$0xf]
  %v1551 = vld [vmem:[%s21] sm:$0x1]
  %v1553 = vlaneseq
  %v1554 = vshrl.u32 %v1553, 7
  %v1555 = vsub.s32 0, %v1554
  %v1556 = vrot.slane %v1551, %v1555
  %v1590 = vunpack.c.l.b16 %v1519
  %v1591 = vunpack.c.l.b16 %v1520
  %v1592 = vunpack.c.l.b16 %v1521
  %v1593 = vunpack.c.l.b16 %v1522
  %v1594 = vunpack.c.l.b16 %v1523
  %v1595 = vunpack.c.l.b16 %v1524
  %v1596 = vunpack.c.l.b16 %v1525
  %v1597 = vunpack.c.l.b16 %v1526
  %v1598 = vunpack.c.l.b16 %v1527
  %v1599 = vunpack.c.l.b16 %v1528
  %v1600 = vunpack.c.l.b16 %v1529
  %v1601 = vunpack.c.l.b16 %v1530
  %v1602 = vunpack.c.l.b16 %v1531
  %v1603 = vunpack.c.l.b16 %v1532
  %v1604 = vunpack.c.l.b16 %v1533
  %v1605 = vunpack.c.l.b16 %v1534
  %v1606 = vunpack.c.l.b16 %v1535
  %v1607 = vunpack.c.l.b16 %v1536
  %v1608 = vunpack.c.l.b16 %v1537
  %v1609 = vunpack.c.l.b16 %v1538
  %v1610 = vunpack.c.l.b16 %v1539
  %v1611 = vunpack.c.l.b16 %v1540
  %v1612 = vunpack.c.l.b16 %v1541
  %v1613 = vunpack.c.l.b16 %v1542
  %v1614 = vunpack.c.l.b16 %v1543
  %v1615 = vunpack.c.l.b16 %v1544
  %v1616 = vunpack.c.l.b16 %v1545
  %v1617 = vunpack.c.l.b16 %v1546
  %v1618 = vunpack.c.l.b16 %v1547
  %v1619 = vunpack.c.l.b16 %v1548
  %v1620 = vunpack.c.l.b16 %v1549
  %v1621 = vunpack.c.l.b16 %v1550
  %v1622 = vpack.c.b16 %v1591, %v1590
  %v1623 = vpack.c.b16 %v1593, %v1592
  %v1624 = vpack.c.b16 %v1595, %v1594
  %v1625 = vpack.c.b16 %v1597, %v1596
  %v1626 = vpack.c.b16 %v1599, %v1598
  %v1627 = vpack.c.b16 %v1601, %v1600
  %v1628 = vpack.c.b16 %v1603, %v1602
  %v1629 = vpack.c.b16 %v1605, %v1604
  %v1630 = vpack.c.b16 %v1607, %v1606
  %v1631 = vpack.c.b16 %v1609, %v1608
  %v1632 = vpack.c.b16 %v1611, %v1610
  %v1633 = vpack.c.b16 %v1613, %v1612
  %v1634 = vpack.c.b16 %v1615, %v1614
  %v1635 = vpack.c.b16 %v1617, %v1616
  %v1636 = vpack.c.b16 %v1619, %v1618
  %v1637 = vpack.c.b16 %v1621, %v1620
  %1654 = vmatprep.subr.bf16.mxu0 0
  %1655 = vmatpush1.bf16.msra.mxu0 %v1622
  %1656 = vmatprep.subr.bf16.mxu0 0
  %1657 = vmatpush1.bf16.msra.mxu0 %v1623
  %1658 = vmatprep.subr.bf16.mxu0 0
  %1659 = vmatpush1.bf16.msra.mxu0 %v1624
  %1660 = vmatprep.subr.bf16.mxu0 0
  %1661 = vmatpush1.bf16.msra.mxu0 %v1625
  %1662 = vmatprep.subr.bf16.mxu0 0
  %1663 = vmatpush1.bf16.msra.mxu0 %v1626
  %1664 = vmatprep.subr.bf16.mxu0 0
  %1665 = vmatpush1.bf16.msra.mxu0 %v1627
  %1666 = vmatprep.subr.bf16.mxu0 0
  %1667 = vmatpush1.bf16.msra.mxu0 %v1628
  %1668 = vmatprep.subr.bf16.mxu0 0
  %1669 = vmatpush1.bf16.msra.mxu0 %v1629
  %1670 = vmatprep.subr.bf16.mxu0 0
  %1671 = vmatpush1.bf16.msra.mxu0 %v1630
  %1672 = vmatprep.subr.bf16.mxu0 0
  %1673 = vmatpush1.bf16.msra.mxu0 %v1631
  %1674 = vmatprep.subr.bf16.mxu0 0
  %1675 = vmatpush1.bf16.msra.mxu0 %v1632
  %1676 = vmatprep.subr.bf16.mxu0 0
  %1677 = vmatpush1.bf16.msra.mxu0 %v1633
  %1678 = vmatprep.subr.bf16.mxu0 0
  %1679 = vmatpush1.bf16.msra.mxu0 %v1634
  %1680 = vmatprep.subr.bf16.mxu0 0
  %1681 = vmatpush1.bf16.msra.mxu0 %v1635
  %1682 = vmatprep.subr.bf16.mxu0 0
  %1683 = vmatpush1.bf16.msra.mxu0 %v1636
  %1684 = vmatprep.subr.bf16.mxu0 0
  %1685 = vmatpush1.bf16.msra.mxu0 %v1637
  %1686 = vmatprep.mubr.bf16.mxu0 %v1516
  %1687 = vmatmul.mubr.bf16.gmra.mrb[0].mxu0 %v1515
  %v1688 = vpop.f32.mrb[0].mxu0
  %v1689 = vadd.f32 %v1556, %v1688
  %v1690 = vpop.f32.mrb[0].mxu0
  %v1691 = vpop.f32.mrb[0].mxu0
  %v1692 = vadd.f32 %v1556, %v1691
  %v1693 = vpop.f32.mrb[0].mxu0
  %1694 = vmatprep.mubr.bf16.mxu0 %v1518
  %1695 = vmatmul.mubr.bf16.gmra.mrb[0].mxu0 %v1517
  %v1696 = vpop.f32.mrb[0].mxu0
  %v1697 = vadd.f32 %v1556, %v1696
  %v1698 = vpop.f32.mrb[0].mxu0
  %v1699 = vpop.f32.mrb[0].mxu0
  %v1700 = vpop.f32.mrb[0].mxu0
  %1701 = vdwg.mxu0
  %v1702 = vadd.f32 %v1280, %v1689
  %v1703 = vadd.f32 %v1281, %v1692
  %v1704 = vadd.f32 %v1282, %v1697
  %s1705 = scalar_lea.vmem %s6, 1
  %v1706 = vld [vmem:[%s1705] sm:$0x1]
  %s1707 = scalar_lea.vmem %s7, 1
  %v1708 = vld [vmem:[%s1707] sm:$0x1]
  %v1709 = vsel %vm207, %v1702, 0.0
  %1710 = vadd.xlane.f32.xlu0 %v1709
  %v1711 = vpop.xlane.xlu0 %1710
  %v1712 = vsel %vm207, %v1703, 0.0
  %1713 = vadd.xlane.f32.xlu0 %v1712
  %v1714 = vpop.xlane.xlu0 %1713
  %v1715 = vsel %vm214, %v1704, 0.0
  %1716 = vadd.xlane.f32.xlu0 %v1715
  %v1717 = vpop.xlane.xlu0 %1716
  %v1718 = vmul.f32 %v1711, %v218
  %v1719 = vmul.f32 %v1714, %v218
  %v1720 = vmul.f32 %v1717, %v218
  %v1721 = vsub.f32 %v1702, %v1718
  %v1722 = vsub.f32 %v1703, %v1719
  %v1723 = vsub.f32 %v1704, %v1720
  %v1724 = vmul.f32 %v1721, %v1721
  %v1725 = vmul.f32 %v1722, %v1722
  %v1726 = vmul.f32 %v1723, %v1723
  %v1727 = vsel %vm207, %v1724, 0.0
  %1728 = vadd.xlane.f32.xlu0 %v1727
  %v1729 = vpop.xlane.xlu0 %1728
  %v1730 = vsel %vm207, %v1725, 0.0
  %1731 = vadd.xlane.f32.xlu0 %v1730
  %v1732 = vpop.xlane.xlu0 %1731
  %v1733 = vsel %vm214, %v1726, 0.0
  %1734 = vadd.xlane.f32.xlu0 %v1733
  %v1735 = vpop.xlane.xlu0 %1734
  %v1736 = vmul.f32 %v1729, %v218
  %v1737 = vmul.f32 %v1732, %v218
  %v1738 = vmul.f32 %v1735, %v218
  %v1739 = vadd.f32 %v1736, 1e-05
  %v1740 = vadd.f32 %v1737, 1e-05
  %v1741 = vadd.f32 %v1738, 1e-05
  %v1742 = vrsqrt.pop %v1739
  %v1743 = vrsqrt.pop %v1740
  %v1744 = vrsqrt.pop %v1741
  %v1745 = vmul.f32 %v1721, %v1742
  %v1746 = vmul.f32 %v1722, %v1743
  %v1747 = vmul.f32 %v1723, %v1744
  %v1749 = vlaneseq
  %v1750 = vshrl.u32 %v1749, 7
  %v1751 = vsub.s32 0, %v1750
  %v1752 = vrot.slane %v1706, %v1751
  %v1754 = vmul.f32 %v1745, %v1752
  %v1755 = vmul.f32 %v1746, %v1752
  %v1756 = vmul.f32 %v1747, %v1752
  %v1758 = vlaneseq
  %v1759 = vshrl.u32 %v1758, 7
  %v1760 = vsub.s32 0, %v1759
  %v1761 = vrot.slane %v1708, %v1760
  %v1763 = vadd.f32 %v1754, %v1761
  %v1764 = vadd.f32 %v1755, %v1761
  %v1765 = vadd.f32 %v1756, %v1761
  %v1766 = vpack.c.bf16 %v1764, %v1763
  %v1767 = vpack.c.bf16 %v1765, %v1765
  %s1768 = scalar_lea.vmem %s15, 1
  %v1769 = vld [vmem:[%s1768] sm:$0x1]
  %s1770 = scalar_lea.vmem %s8, 64
  %v1771 = vld [vmem:[%s1770] sm:$0xf]
  %v1772 = vld [vmem:[%s1770 + $0x4] sm:$0xf]
  %v1773 = vld [vmem:[%s1770 + $0x8] sm:$0xf]
  %v1774 = vld [vmem:[%s1770 + $0xc] sm:$0xf]
  %v1775 = vld [vmem:[%s1770 + $0x10] sm:$0xf]
  %v1776 = vld [vmem:[%s1770 + $0x14] sm:$0xf]
  %v1777 = vld [vmem:[%s1770 + $0x18] sm:$0xf]
  %v1778 = vld [vmem:[%s1770 + $0x1c] sm:$0xf]
  %s1779 = scalar_lea.vmem %s9, 2
  %v1780 = vld [vmem:[%s1779] sm:$0x1]
  %v1782 = vlaneseq
  %v1783 = vshrl.u32 %v1782, 7
  %v1784 = vsub.s32 0, %v1783
  %v1785 = vrot.slane %v1780, %v1784
  %v1795 = vunpack.c.l.b16 %v1771
  %v1796 = vunpack.c.l.b16 %v1772
  %v1797 = vunpack.c.l.b16 %v1773
  %v1798 = vunpack.c.l.b16 %v1774
  %v1799 = vunpack.c.l.b16 %v1775
  %v1800 = vunpack.c.l.b16 %v1776
  %v1801 = vunpack.c.l.b16 %v1777
  %v1802 = vunpack.c.l.b16 %v1778
  %v1803 = vpack.c.b16 %v1796, %v1795
  %v1804 = vpack.c.b16 %v1798, %v1797
  %v1805 = vpack.c.b16 %v1800, %v1799
  %v1806 = vpack.c.b16 %v1802, %v1801
  %v1812 = vsel %vm207, %v1766, 0
  %v1815 = vsel %vm207, %v1767, 0
  %1817 = vmatprep.subr.bf16.mxu0 0
  %1818 = vmatpush1.bf16.msra.mxu0 %v1803
  %1819 = vmatprep.subr.bf16.mxu0 0
  %1820 = vmatpush1.bf16.msra.mxu0 %v1804
  %1821 = vmatprep.subr.bf16.mxu0 0
  %1822 = vmatpush1.bf16.msra.mxu0 %v1805
  %1823 = vmatprep.subr.bf16.mxu0 0
  %1824 = vmatpush1.bf16.msra.mxu0 %v1806
  %1825 = vmatprep.subr.bf16.mxu0 0
  %1826 = vmatpush1.bf16.msra.mxu0 0
  %1827 = vmatprep.subr.bf16.mxu0 0
  %1828 = vmatpush1.bf16.msra.mxu0 0
  %1829 = vmatprep.subr.bf16.mxu0 0
  %1830 = vmatpush1.bf16.msra.mxu0 0
  %1831 = vmatprep.subr.bf16.mxu0 0
  %1832 = vmatpush1.bf16.msra.mxu0 0
  %1833 = vmatprep.subr.bf16.mxu0 0
  %1834 = vmatpush1.bf16.msra.mxu0 0
  %1835 = vmatprep.subr.bf16.mxu0 0
  %1836 = vmatpush1.bf16.msra.mxu0 0
  %1837 = vmatprep.subr.bf16.mxu0 0
  %1838 = vmatpush1.bf16.msra.mxu0 0
  %1839 = vmatprep.subr.bf16.mxu0 0
  %1840 = vmatpush1.bf16.msra.mxu0 0
  %1841 = vmatprep.subr.bf16.mxu0 0
  %1842 = vmatpush1.bf16.msra.mxu0 0
  %1843 = vmatprep.subr.bf16.mxu0 0
  %1844 = vmatpush1.bf16.msra.mxu0 0
  %1845 = vmatprep.subr.bf16.mxu0 0
  %1846 = vmatpush1.bf16.msra.mxu0 0
  %1847 = vmatprep.subr.bf16.mxu0 0
  %1848 = vmatpush1.bf16.msra.mxu0 0
  %1849 = vmatprep.mubr.bf16.mxu0 0
  %1850 = vmatmul.mubr.bf16.gmra.mrb[0].mxu0 %v1812
  %v1851 = vpop.f32.mrb[0].mxu0
  %v1852 = vadd.f32 %v1785, %v1851
  %v1853 = vpop.f32.mrb[0].mxu0
  %v1854 = vpop.f32.mrb[0].mxu0
  %v1855 = vadd.f32 %v1785, %v1854
  %v1856 = vpop.f32.mrb[0].mxu0
  %1857 = vmatprep.mubr.bf16.mxu0 0
  %1858 = vmatmul.mubr.bf16.gmra.mrb[0].mxu0 %v1815
  %v1859 = vpop.f32.mrb[0].mxu0
  %v1860 = vadd.f32 %v1785, %v1859
  %v1861 = vpop.f32.mrb[0].mxu0
  %v1862 = vpop.f32.mrb[0].mxu0
  %v1863 = vpop.f32.mrb[0].mxu0
  %1864 = vdwg.mxu0
  %s1865 = scalar_lea.vmem %s10, 64
  %v1866 = vld [vmem:[%s1865] sm:$0xf]
  %v1867 = vld [vmem:[%s1865 + $0x4] sm:$0xf]
  %v1868 = vld [vmem:[%s1865 + $0x8] sm:$0xf]
  %v1869 = vld [vmem:[%s1865 + $0xc] sm:$0xf]
  %v1870 = vld [vmem:[%s1865 + $0x10] sm:$0xf]
  %v1871 = vld [vmem:[%s1865 + $0x14] sm:$0xf]
  %v1872 = vld [vmem:[%s1865 + $0x18] sm:$0xf]
  %v1873 = vld [vmem:[%s1865 + $0x1c] sm:$0xf]
  %s1874 = scalar_lea.vmem %s11, 2
  %v1875 = vld [vmem:[%s1874] sm:$0x1]
  %v1877 = vlaneseq
  %v1878 = vshrl.u32 %v1877, 7
  %v1879 = vsub.s32 0, %v1878
  %v1880 = vrot.slane %v1875, %v1879
  %v1890 = vunpack.c.l.b16 %v1866
  %v1891 = vunpack.c.l.b16 %v1867
  %v1892 = vunpack.c.l.b16 %v1868
  %v1893 = vunpack.c.l.b16 %v1869
  %v1894 = vunpack.c.l.b16 %v1870
  %v1895 = vunpack.c.l.b16 %v1871
  %v1896 = vunpack.c.l.b16 %v1872
  %v1897 = vunpack.c.l.b16 %v1873
  %v1898 = vpack.c.b16 %v1891, %v1890
  %v1899 = vpack.c.b16 %v1893, %v1892
  %v1900 = vpack.c.b16 %v1895, %v1894
  %v1901 = vpack.c.b16 %v1897, %v1896
  %1906 = vmatprep.subr.bf16.mxu0 0
  %1907 = vmatpush1.bf16.msra.mxu0 %v1898
  %1908 = vmatprep.subr.bf16.mxu0 0
  %1909 = vmatpush1.bf16.msra.mxu0 %v1899
  %1910 = vmatprep.subr.bf16.mxu0 0
  %1911 = vmatpush1.bf16.msra.mxu0 %v1900
  %1912 = vmatprep.subr.bf16.mxu0 0
  %1913 = vmatpush1.bf16.msra.mxu0 %v1901
  %1914 = vmatprep.subr.bf16.mxu0 0
  %1915 = vmatpush1.bf16.msra.mxu0 0
  %1916 = vmatprep.subr.bf16.mxu0 0
  %1917 = vmatpush1.bf16.msra.mxu0 0
  %1918 = vmatprep.subr.bf16.mxu0 0
  %1919 = vmatpush1.bf16.msra.mxu0 0
  %1920 = vmatprep.subr.bf16.mxu0 0
  %1921 = vmatpush1.bf16.msra.mxu0 0
  %1922 = vmatprep.subr.bf16.mxu0 0
  %1923 = vmatpush1.bf16.msra.mxu0 0
  %1924 = vmatprep.subr.bf16.mxu0 0
  %1925 = vmatpush1.bf16.msra.mxu0 0
  %1926 = vmatprep.subr.bf16.mxu0 0
  %1927 = vmatpush1.bf16.msra.mxu0 0
  %1928 = vmatprep.subr.bf16.mxu0 0
  %1929 = vmatpush1.bf16.msra.mxu0 0
  %1930 = vmatprep.subr.bf16.mxu0 0
  %1931 = vmatpush1.bf16.msra.mxu0 0
  %1932 = vmatprep.subr.bf16.mxu0 0
  %1933 = vmatpush1.bf16.msra.mxu0 0
  %1934 = vmatprep.subr.bf16.mxu0 0
  %1935 = vmatpush1.bf16.msra.mxu0 0
  %1936 = vmatprep.subr.bf16.mxu0 0
  %1937 = vmatpush1.bf16.msra.mxu0 0
  %1938 = vmatprep.mubr.bf16.mxu0 0
  %1939 = vmatmul.mubr.bf16.gmra.mrb[0].mxu0 %v1812
  %v1940 = vpop.f32.mrb[0].mxu0
  %v1941 = vadd.f32 %v1880, %v1940
  %v1942 = vpop.f32.mrb[0].mxu0
  %v1943 = vpop.f32.mrb[0].mxu0
  %v1944 = vadd.f32 %v1880, %v1943
  %v1945 = vpop.f32.mrb[0].mxu0
  %1946 = vmatprep.mubr.bf16.mxu0 0
  %1947 = vmatmul.mubr.bf16.gmra.mrb[0].mxu0 %v1815
  %v1948 = vpop.f32.mrb[0].mxu0
  %v1949 = vadd.f32 %v1880, %v1948
  %v1950 = vpop.f32.mrb[0].mxu0
  %v1951 = vpop.f32.mrb[0].mxu0
  %v1952 = vpop.f32.mrb[0].mxu0
  %1953 = vdwg.mxu0
  %s1954 = scalar_lea.vmem %s12, 64
  %v1955 = vld [vmem:[%s1954] sm:$0xf]
  %v1956 = vld [vmem:[%s1954 + $0x4] sm:$0xf]
  %v1957 = vld [vmem:[%s1954 + $0x8] sm:$0xf]
  %v1958 = vld [vmem:[%s1954 + $0xc] sm:$0xf]
  %v1959 = vld [vmem:[%s1954 + $0x10] sm:$0xf]
  %v1960 = vld [vmem:[%s1954 + $0x14] sm:$0xf]
  %v1961 = vld [vmem:[%s1954 + $0x18] sm:$0xf]
  %v1962 = vld [vmem:[%s1954 + $0x1c] sm:$0xf]
  %s1963 = scalar_lea.vmem %s13, 2
  %v1964 = vld [vmem:[%s1963] sm:$0x1]
  %v1966 = vlaneseq
  %v1967 = vshrl.u32 %v1966, 7
  %v1968 = vsub.s32 0, %v1967
  %v1969 = vrot.slane %v1964, %v1968
  %v1979 = vunpack.c.l.b16 %v1955
  %v1980 = vunpack.c.l.b16 %v1956
  %v1981 = vunpack.c.l.b16 %v1957
  %v1982 = vunpack.c.l.b16 %v1958
  %v1983 = vunpack.c.l.b16 %v1959
  %v1984 = vunpack.c.l.b16 %v1960
  %v1985 = vunpack.c.l.b16 %v1961
  %v1986 = vunpack.c.l.b16 %v1962
  %v1987 = vpack.c.b16 %v1980, %v1979
  %v1988 = vpack.c.b16 %v1982, %v1981
  %v1989 = vpack.c.b16 %v1984, %v1983
  %v1990 = vpack.c.b16 %v1986, %v1985
  %1995 = vmatprep.subr.bf16.mxu0 0
  %1996 = vmatpush1.bf16.msra.mxu0 %v1987
  %1997 = vmatprep.subr.bf16.mxu0 0
  %1998 = vmatpush1.bf16.msra.mxu0 %v1988
  %1999 = vmatprep.subr.bf16.mxu0 0
  %2000 = vmatpush1.bf16.msra.mxu0 %v1989
  %2001 = vmatprep.subr.bf16.mxu0 0
  %2002 = vmatpush1.bf16.msra.mxu0 %v1990
  %2003 = vmatprep.subr.bf16.mxu0 0
  %2004 = vmatpush1.bf16.msra.mxu0 0
  %2005 = vmatprep.subr.bf16.mxu0 0
  %2006 = vmatpush1.bf16.msra.mxu0 0
  %2007 = vmatprep.subr.bf16.mxu0 0
  %2008 = vmatpush1.bf16.msra.mxu0 0
  %2009 = vmatprep.subr.bf16.mxu0 0
  %2010 = vmatpush1.bf16.msra.mxu0 0
  %2011 = vmatprep.subr.bf16.mxu0 0
  %2012 = vmatpush1.bf16.msra.mxu0 0
  %2013 = vmatprep.subr.bf16.mxu0 0
  %2014 = vmatpush1.bf16.msra.mxu0 0
  %2015 = vmatprep.subr.bf16.mxu0 0
  %2016 = vmatpush1.bf16.msra.mxu0 0
  %2017 = vmatprep.subr.bf16.mxu0 0
  %2018 = vmatpush1.bf16.msra.mxu0 0
  %2019 = vmatprep.subr.bf16.mxu0 0
  %2020 = vmatpush1.bf16.msra.mxu0 0
  %2021 = vmatprep.subr.bf16.mxu0 0
  %2022 = vmatpush1.bf16.msra.mxu0 0
  %2023 = vmatprep.subr.bf16.mxu0 0
  %2024 = vmatpush1.bf16.msra.mxu0 0
  %2025 = vmatprep.subr.bf16.mxu0 0
  %2026 = vmatpush1.bf16.msra.mxu0 0
  %2027 = vmatprep.mubr.bf16.mxu0 0
  %2028 = vmatmul.mubr.bf16.gmra.mrb[0].mxu0 %v1812
  %v2029 = vpop.f32.mrb[0].mxu0
  %v2030 = vadd.f32 %v1969, %v2029
  %v2031 = vpop.f32.mrb[0].mxu0
  %v2032 = vpop.f32.mrb[0].mxu0
  %v2033 = vadd.f32 %v1969, %v2032
  %v2034 = vpop.f32.mrb[0].mxu0
  %2035 = vmatprep.mubr.bf16.mxu0 0
  %2036 = vmatmul.mubr.bf16.gmra.mrb[0].mxu0 %v1815
  %v2037 = vpop.f32.mrb[0].mxu0
  %v2038 = vadd.f32 %v1969, %v2037
  %v2039 = vpop.f32.mrb[0].mxu0
  %v2040 = vpop.f32.mrb[0].mxu0
  %v2041 = vpop.f32.mrb[0].mxu0
  %2042 = vdwg.mxu0
  %v2043 = vpack.c.bf16 %v1855, %v1852
  %v2044 = vpack.c.bf16 %v1860, %v1860
  %v2045 = vpack.c.bf16 %v1944, %v1941
  %v2046 = vpack.c.bf16 %v1949, %v1949
  %v2048 = vsel %vm541, %v2043, 0
  %v2051 = vsel %vm541, %v2044, 0
  %v2054 = vsel %vm541, %v2045, 0
  %v2057 = vsel %vm541, %v2046, 0
  %2059 = vmatprep.subr.bf16.mxu0 0
  %2060 = vmatpush1.bf16.xpose.msra.mxu0 %v2054
  %2061 = vmatprep.subr.bf16.mxu0 0
  %2062 = vmatpush1.bf16.xpose.msra.mxu0 %v2057
  %2063 = vmatprep.subr.bf16.mxu0 0
  %2064 = vmatpush1.bf16.xpose.msra.mxu0 0
  %2065 = vmatprep.subr.bf16.mxu0 0
  %2066 = vmatpush1.bf16.xpose.msra.mxu0 0
  %2067 = vmatprep.subr.bf16.mxu0 0
  %2068 = vmatpush1.bf16.xpose.msra.mxu0 0
  %2069 = vmatprep.subr.bf16.mxu0 0
  %2070 = vmatpush1.bf16.xpose.msra.mxu0 0
  %2071 = vmatprep.subr.bf16.mxu0 0
  %2072 = vmatpush1.bf16.xpose.msra.mxu0 0
  %2073 = vmatprep.subr.bf16.mxu0 0
  %2074 = vmatpush1.bf16.xpose.msra.mxu0 0
  %2075 = vmatprep.subr.bf16.mxu0 0
  %2076 = vmatpush1.bf16.xpose.msra.mxu0 0
  %2077 = vmatprep.subr.bf16.mxu0 0
  %2078 = vmatpush1.bf16.xpose.msra.mxu0 0
  %2079 = vmatprep.subr.bf16.mxu0 0
  %2080 = vmatpush1.bf16.xpose.msra.mxu0 0
  %2081 = vmatprep.subr.bf16.mxu0 0
  %2082 = vmatpush1.bf16.xpose.msra.mxu0 0
  %2083 = vmatprep.subr.bf16.mxu0 0
  %2084 = vmatpush1.bf16.xpose.msra.mxu0 0
  %2085 = vmatprep.subr.bf16.mxu0 0
  %2086 = vmatpush1.bf16.xpose.msra.mxu0 0
  %2087 = vmatprep.subr.bf16.mxu0 0
  %2088 = vmatpush1.bf16.xpose.msra.mxu0 0
  %2089 = vmatprep.subr.bf16.mxu0 0
  %2090 = vmatpush1.bf16.xpose.msra.mxu0 0
  %2091 = vmatprep.mubr.bf16.mxu0 0
  %2092 = vmatmul.mubr.bf16.gmra.mrb[0].mxu0 %v2048
  %v2093 = vpop.f32.mrb[0].mxu0
  %v2094 = vadd.f32 %v202, %v2093
  %v2095 = vpop.f32.mrb[0].mxu0
  %v2096 = vpop.f32.mrb[0].mxu0
  %v2097 = vadd.f32 %v203, %v2096
  %v2098 = vpop.f32.mrb[0].mxu0
  %2099 = vmatprep.mubr.bf16.mxu0 0
  %2100 = vmatmul.mubr.bf16.gmra.mrb[0].mxu0 %v2051
  %v2101 = vpop.f32.mrb[0].mxu0
  %v2102 = vadd.f32 %v204, %v2101
  %v2103 = vpop.f32.mrb[0].mxu0
  %v2104 = vpop.f32.mrb[0].mxu0
  %v2105 = vpop.f32.mrb[0].mxu0
  %2106 = vdwg.mxu0
  %v2107 = vsel %vm602, %v2094, -inf
  %2108 = vmax.xlane.f32.xlu0 %v2107
  %v2109 = vpop.xlane.xlu0 %2108
  %v2110 = vsel %vm602, %v2097, -inf
  %2111 = vmax.xlane.f32.xlu0 %v2110
  %v2112 = vpop.xlane.xlu0 %2111
  %v2113 = vsel %vm609, %v2102, -inf
  %2114 = vmax.xlane.f32.xlu0 %v2113
  %v2115 = vpop.xlane.xlu0 %2114
  %v2116 = vsub.f32 %v2094, %v2109
  %v2117 = vsub.f32 %v2097, %v2112
  %v2118 = vsub.f32 %v2102, %v2115
  %v2119 = vmul.f32 %v2116, 1.442695
  %v2120 = vpow.pop %v2119
  %v2121 = vmul.f32 %v2117, 1.442695
  %v2122 = vpow.pop %v2121
  %v2123 = vmul.f32 %v2118, 1.442695
  %v2124 = vpow.pop %v2123
  %v2125 = vsel %vm602, %v2120, 0.0
  %2126 = vadd.xlane.f32.xlu0 %v2125
  %v2127 = vpop.xlane.xlu0 %2126
  %v2128 = vsel %vm602, %v2122, 0.0
  %2129 = vadd.xlane.f32.xlu0 %v2128
  %v2130 = vpop.xlane.xlu0 %2129
  %v2131 = vsel %vm609, %v2124, 0.0
  %2132 = vadd.xlane.f32.xlu0 %v2131
  %v2133 = vpop.xlane.xlu0 %2132
  %v2134 = vpack.c.bf16 %v2122, %v2120
  %v2135 = vpack.c.bf16 %v2124, %v2124
  %v2136 = vpack.c.bf16 %v2033, %v2030
  %v2137 = vpack.c.bf16 %v2038, %v2038
  %v2139 = vsel %vm602, %v2134, 0
  %v2142 = vsel %vm602, %v2135, 0
  %v2145 = vsel %vm200, %v2137, 0
  %2147 = vmatprep.subr.bf16.mxu0 0
  %2148 = vmatpush1.bf16.msra.mxu0 %v2136
  %2149 = vmatprep.subr.bf16.mxu0 0
  %2150 = vmatpush1.bf16.msra.mxu0 %v2145
  %2151 = vmatprep.subr.bf16.mxu0 0
  %2152 = vmatpush1.bf16.msra.mxu0 0
  %2153 = vmatprep.subr.bf16.mxu0 0
  %2154 = vmatpush1.bf16.msra.mxu0 0
  %2155 = vmatprep.subr.bf16.mxu0 0
  %2156 = vmatpush1.bf16.msra.mxu0 0
  %2157 = vmatprep.subr.bf16.mxu0 0
  %2158 = vmatpush1.bf16.msra.mxu0 0
  %2159 = vmatprep.subr.bf16.mxu0 0
  %2160 = vmatpush1.bf16.msra.mxu0 0
  %2161 = vmatprep.subr.bf16.mxu0 0
  %2162 = vmatpush1.bf16.msra.mxu0 0
  %2163 = vmatprep.subr.bf16.mxu0 0
  %2164 = vmatpush1.bf16.msra.mxu0 0
  %2165 = vmatprep.subr.bf16.mxu0 0
  %2166 = vmatpush1.bf16.msra.mxu0 0
  %2167 = vmatprep.subr.bf16.mxu0 0
  %2168 = vmatpush1.bf16.msra.mxu0 0
  %2169 = vmatprep.subr.bf16.mxu0 0
  %2170 = vmatpush1.bf16.msra.mxu0 0
  %2171 = vmatprep.subr.bf16.mxu0 0
  %2172 = vmatpush1.bf16.msra.mxu0 0
  %2173 = vmatprep.subr.bf16.mxu0 0
  %2174 = vmatpush1.bf16.msra.mxu0 0
  %2175 = vmatprep.subr.bf16.mxu0 0
  %2176 = vmatpush1.bf16.msra.mxu0 0
  %2177 = vmatprep.subr.bf16.mxu0 0
  %2178 = vmatpush1.bf16.msra.mxu0 0
  %2179 = vmatprep.mubr.bf16.mxu0 0
  %2180 = vmatmul.mubr.bf16.gmra.mrb[0].mxu0 %v2139
  %v2181 = vpop.f32.mrb[0].mxu0
  %v2182 = vadd.f32 0.0, %v2181
  %v2183 = vpop.f32.mrb[0].mxu0
  %v2184 = vpop.f32.mrb[0].mxu0
  %v2185 = vadd.f32 0.0, %v2184
  %v2186 = vpop.f32.mrb[0].mxu0
  %2187 = vmatprep.mubr.bf16.mxu0 0
  %2188 = vmatmul.mubr.bf16.gmra.mrb[0].mxu0 %v2142
  %v2189 = vpop.f32.mrb[0].mxu0
  %v2190 = vadd.f32 0.0, %v2189
  %v2191 = vpop.f32.mrb[0].mxu0
  %v2192 = vpop.f32.mrb[0].mxu0
  %v2193 = vpop.f32.mrb[0].mxu0
  %2194 = vdwg.mxu0
  %v2195 = vrcp.pop %v2127
  %v2196 = vrcp.pop %v2130
  %v2197 = vrcp.pop %v2133
  %v2198 = vmul.f32 %v2182, %v2195
  %v2199 = vmul.f32 %v2185, %v2196
  %v2200 = vmul.f32 %v2190, %v2197
  %v2201 = vpack.c.bf16 %v2199, %v2198
  %v2202 = vpack.c.bf16 %v2200, %v2200
  %s2203 = scalar_lea.vmem %s14, 32
  %v2204 = vld [vmem:[%s2203] sm:$0xf]
  %v2205 = vld [vmem:[%s2203 + $0x4] sm:$0xf]
  %v2206 = vld [vmem:[%s2203 + $0x8] sm:$0xf]
  %v2207 = vld [vmem:[%s2203 + $0xc] sm:$0xf]
  %v2212 = vunpack.c.l.b16 %v2204
  %v2213 = vunpack.c.l.b16 %v2205
  %v2214 = vunpack.c.l.b16 %v2206
  %v2215 = vunpack.c.l.b16 %v2207
  %v2216 = vpack.c.b16 %v2213, %v2212
  %v2217 = vpack.c.b16 %v2215, %v2214
  %v2221 = vsel %vm541, %v2201, 0
  %v2224 = vsel %vm541, %v2202, 0
  %2226 = vmatprep.subr.bf16.mxu0 0
  %2227 = vmatpush1.bf16.msra.mxu0 %v2216
  %2228 = vmatprep.subr.bf16.mxu0 0
  %2229 = vmatpush1.bf16.msra.mxu0 %v2217
  %2230 = vmatprep.subr.bf16.mxu0 0
  %2231 = vmatpush1.bf16.msra.mxu0 0
  %2232 = vmatprep.subr.bf16.mxu0 0
  %2233 = vmatpush1.bf16.msra.mxu0 0
  %2234 = vmatprep.subr.bf16.mxu0 0
  %2235 = vmatpush1.bf16.msra.mxu0 0
  %2236 = vmatprep.subr.bf16.mxu0 0
  %2237 = vmatpush1.bf16.msra.mxu0 0
  %2238 = vmatprep.subr.bf16.mxu0 0
  %2239 = vmatpush1.bf16.msra.mxu0 0
  %2240 = vmatprep.subr.bf16.mxu0 0
  %2241 = vmatpush1.bf16.msra.mxu0 0
  %2242 = vmatprep.subr.bf16.mxu0 0
  %2243 = vmatpush1.bf16.msra.mxu0 0
  %2244 = vmatprep.subr.bf16.mxu0 0
  %2245 = vmatpush1.bf16.msra.mxu0 0
  %2246 = vmatprep.subr.bf16.mxu0 0
  %2247 = vmatpush1.bf16.msra.mxu0 0
  %2248 = vmatprep.subr.bf16.mxu0 0
  %2249 = vmatpush1.bf16.msra.mxu0 0
  %2250 = vmatprep.subr.bf16.mxu0 0
  %2251 = vmatpush1.bf16.msra.mxu0 0
  %2252 = vmatprep.subr.bf16.mxu0 0
  %2253 = vmatpush1.bf16.msra.mxu0 0
  %2254 = vmatprep.subr.bf16.mxu0 0
  %2255 = vmatpush1.bf16.msra.mxu0 0
  %2256 = vmatprep.subr.bf16.mxu0 0
  %2257 = vmatpush1.bf16.msra.mxu0 0
  %2258 = vmatprep.mubr.bf16.mxu0 0
  %2259 = vmatmul.mubr.bf16.gmra.mrb[0].mxu0 %v2221
  %v2260 = vpop.f32.mrb[0].mxu0
  %v2261 = vadd.f32 0.0, %v2260
  %v2262 = vpop.f32.mrb[0].mxu0
  %v2263 = vpop.f32.mrb[0].mxu0
  %v2264 = vadd.f32 0.0, %v2263
  %v2265 = vpop.f32.mrb[0].mxu0
  %2266 = vmatprep.mubr.bf16.mxu0 0
  %2267 = vmatmul.mubr.bf16.gmra.mrb[0].mxu0 %v2224
  %v2268 = vpop.f32.mrb[0].mxu0
  %v2269 = vadd.f32 0.0, %v2268
  %v2270 = vpop.f32.mrb[0].mxu0
  %v2271 = vpop.f32.mrb[0].mxu0
  %v2272 = vpop.f32.mrb[0].mxu0
  %2273 = vdwg.mxu0
  %v2275 = vlaneseq
  %v2276 = vshrl.u32 %v2275, 7
  %v2277 = vsub.s32 0, %v2276
  %v2278 = vrot.slane %v1769, %v2277
  %v2280 = vadd.f32 %v2278, %v2261
  %v2281 = vadd.f32 %v2278, %v2264
  %v2282 = vadd.f32 %v2278, %v2269
  %s2283 = scalar_lea.vmem %s8, 96
  %v2284 = vld [vmem:[%s2283] sm:$0xf]
  %v2285 = vld [vmem:[%s2283 + $0x4] sm:$0xf]
  %v2286 = vld [vmem:[%s2283 + $0x8] sm:$0xf]
  %v2287 = vld [vmem:[%s2283 + $0xc] sm:$0xf]
  %v2288 = vld [vmem:[%s2283 + $0x10] sm:$0xf]
  %v2289 = vld [vmem:[%s2283 + $0x14] sm:$0xf]
  %v2290 = vld [vmem:[%s2283 + $0x18] sm:$0xf]
  %v2291 = vld [vmem:[%s2283 + $0x1c] sm:$0xf]
  %s2292 = scalar_lea.vmem %s9, 3
  %v2293 = vld [vmem:[%s2292] sm:$0x1]
  %v2295 = vlaneseq
  %v2296 = vshrl.u32 %v2295, 7
  %v2297 = vsub.s32 0, %v2296
  %v2298 = vrot.slane %v2293, %v2297
  %v2308 = vunpack.c.l.b16 %v2284
  %v2309 = vunpack.c.l.b16 %v2285
  %v2310 = vunpack.c.l.b16 %v2286
  %v2311 = vunpack.c.l.b16 %v2287
  %v2312 = vunpack.c.l.b16 %v2288
  %v2313 = vunpack.c.l.b16 %v2289
  %v2314 = vunpack.c.l.b16 %v2290
  %v2315 = vunpack.c.l.b16 %v2291
  %v2316 = vpack.c.b16 %v2309, %v2308
  %v2317 = vpack.c.b16 %v2311, %v2310
  %v2318 = vpack.c.b16 %v2313, %v2312
  %v2319 = vpack.c.b16 %v2315, %v2314
  %2324 = vmatprep.subr.bf16.mxu0 0
  %2325 = vmatpush1.bf16.msra.mxu0 %v2316
  %2326 = vmatprep.subr.bf16.mxu0 0
  %2327 = vmatpush1.bf16.msra.mxu0 %v2317
  %2328 = vmatprep.subr.bf16.mxu0 0
  %2329 = vmatpush1.bf16.msra.mxu0 %v2318
  %2330 = vmatprep.subr.bf16.mxu0 0
  %2331 = vmatpush1.bf16.msra.mxu0 %v2319
  %2332 = vmatprep.subr.bf16.mxu0 0
  %2333 = vmatpush1.bf16.msra.mxu0 0
  %2334 = vmatprep.subr.bf16.mxu0 0
  %2335 = vmatpush1.bf16.msra.mxu0 0
  %2336 = vmatprep.subr.bf16.mxu0 0
  %2337 = vmatpush1.bf16.msra.mxu0 0
  %2338 = vmatprep.subr.bf16.mxu0 0
  %2339 = vmatpush1.bf16.msra.mxu0 0
  %2340 = vmatprep.subr.bf16.mxu0 0
  %2341 = vmatpush1.bf16.msra.mxu0 0
  %2342 = vmatprep.subr.bf16.mxu0 0
  %2343 = vmatpush1.bf16.msra.mxu0 0
  %2344 = vmatprep.subr.bf16.mxu0 0
  %2345 = vmatpush1.bf16.msra.mxu0 0
  %2346 = vmatprep.subr.bf16.mxu0 0
  %2347 = vmatpush1.bf16.msra.mxu0 0
  %2348 = vmatprep.subr.bf16.mxu0 0
  %2349 = vmatpush1.bf16.msra.mxu0 0
  %2350 = vmatprep.subr.bf16.mxu0 0
  %2351 = vmatpush1.bf16.msra.mxu0 0
  %2352 = vmatprep.subr.bf16.mxu0 0
  %2353 = vmatpush1.bf16.msra.mxu0 0
  %2354 = vmatprep.subr.bf16.mxu0 0
  %2355 = vmatpush1.bf16.msra.mxu0 0
  %2356 = vmatprep.mubr.bf16.mxu0 0
  %2357 = vmatmul.mubr.bf16.gmra.mrb[0].mxu0 %v1812
  %v2358 = vpop.f32.mrb[0].mxu0
  %v2359 = vadd.f32 %v2298, %v2358
  %v2360 = vpop.f32.mrb[0].mxu0
  %v2361 = vpop.f32.mrb[0].mxu0
  %v2362 = vadd.f32 %v2298, %v2361
  %v2363 = vpop.f32.mrb[0].mxu0
  %2364 = vmatprep.mubr.bf16.mxu0 0
  %2365 = vmatmul.mubr.bf16.gmra.mrb[0].mxu0 %v1815
  %v2366 = vpop.f32.mrb[0].mxu0
  %v2367 = vadd.f32 %v2298, %v2366
  %v2368 = vpop.f32.mrb[0].mxu0
  %v2369 = vpop.f32.mrb[0].mxu0
  %v2370 = vpop.f32.mrb[0].mxu0
  %2371 = vdwg.mxu0
  %s2372 = scalar_lea.vmem %s10, 96
  %v2373 = vld [vmem:[%s2372] sm:$0xf]
  %v2374 = vld [vmem:[%s2372 + $0x4] sm:$0xf]
  %v2375 = vld [vmem:[%s2372 + $0x8] sm:$0xf]
  %v2376 = vld [vmem:[%s2372 + $0xc] sm:$0xf]
  %v2377 = vld [vmem:[%s2372 + $0x10] sm:$0xf]
  %v2378 = vld [vmem:[%s2372 + $0x14] sm:$0xf]
  %v2379 = vld [vmem:[%s2372 + $0x18] sm:$0xf]
  %v2380 = vld [vmem:[%s2372 + $0x1c] sm:$0xf]
  %s2381 = scalar_lea.vmem %s11, 3
  %v2382 = vld [vmem:[%s2381] sm:$0x1]
  %v2384 = vlaneseq
  %v2385 = vshrl.u32 %v2384, 7
  %v2386 = vsub.s32 0, %v2385
  %v2387 = vrot.slane %v2382, %v2386
  %v2397 = vunpack.c.l.b16 %v2373
  %v2398 = vunpack.c.l.b16 %v2374
  %v2399 = vunpack.c.l.b16 %v2375
  %v2400 = vunpack.c.l.b16 %v2376
  %v2401 = vunpack.c.l.b16 %v2377
  %v2402 = vunpack.c.l.b16 %v2378
  %v2403 = vunpack.c.l.b16 %v2379
  %v2404 = vunpack.c.l.b16 %v2380
  %v2405 = vpack.c.b16 %v2398, %v2397
  %v2406 = vpack.c.b16 %v2400, %v2399
  %v2407 = vpack.c.b16 %v2402, %v2401
  %v2408 = vpack.c.b16 %v2404, %v2403
  %2413 = vmatprep.subr.bf16.mxu0 0
  %2414 = vmatpush1.bf16.msra.mxu0 %v2405
  %2415 = vmatprep.subr.bf16.mxu0 0
  %2416 = vmatpush1.bf16.msra.mxu0 %v2406
  %2417 = vmatprep.subr.bf16.mxu0 0
  %2418 = vmatpush1.bf16.msra.mxu0 %v2407
  %2419 = vmatprep.subr.bf16.mxu0 0
  %2420 = vmatpush1.bf16.msra.mxu0 %v2408
  %2421 = vmatprep.subr.bf16.mxu0 0
  %2422 = vmatpush1.bf16.msra.mxu0 0
  %2423 = vmatprep.subr.bf16.mxu0 0
  %2424 = vmatpush1.bf16.msra.mxu0 0
  %2425 = vmatprep.subr.bf16.mxu0 0
  %2426 = vmatpush1.bf16.msra.mxu0 0
  %2427 = vmatprep.subr.bf16.mxu0 0
  %2428 = vmatpush1.bf16.msra.mxu0 0
  %2429 = vmatprep.subr.bf16.mxu0 0
  %2430 = vmatpush1.bf16.msra.mxu0 0
  %2431 = vmatprep.subr.bf16.mxu0 0
  %2432 = vmatpush1.bf16.msra.mxu0 0
  %2433 = vmatprep.subr.bf16.mxu0 0
  %2434 = vmatpush1.bf16.msra.mxu0 0
  %2435 = vmatprep.subr.bf16.mxu0 0
  %2436 = vmatpush1.bf16.msra.mxu0 0
  %2437 = vmatprep.subr.bf16.mxu0 0
  %2438 = vmatpush1.bf16.msra.mxu0 0
  %2439 = vmatprep.subr.bf16.mxu0 0
  %2440 = vmatpush1.bf16.msra.mxu0 0
  %2441 = vmatprep.subr.bf16.mxu0 0
  %2442 = vmatpush1.bf16.msra.mxu0 0
  %2443 = vmatprep.subr.bf16.mxu0 0
  %2444 = vmatpush1.bf16.msra.mxu0 0
  %2445 = vmatprep.mubr.bf16.mxu0 0
  %2446 = vmatmul.mubr.bf16.gmra.mrb[0].mxu0 %v1812
  %v2447 = vpop.f32.mrb[0].mxu0
  %v2448 = vadd.f32 %v2387, %v2447
  %v2449 = vpop.f32.mrb[0].mxu0
  %v2450 = vpop.f32.mrb[0].mxu0
  %v2451 = vadd.f32 %v2387, %v2450
  %v2452 = vpop.f32.mrb[0].mxu0
  %2453 = vmatprep.mubr.bf16.mxu0 0
  %2454 = vmatmul.mubr.bf16.gmra.mrb[0].mxu0 %v1815
  %v2455 = vpop.f32.mrb[0].mxu0
  %v2456 = vadd.f32 %v2387, %v2455
  %v2457 = vpop.f32.mrb[0].mxu0
  %v2458 = vpop.f32.mrb[0].mxu0
  %v2459 = vpop.f32.mrb[0].mxu0
  %2460 = vdwg.mxu0
  %s2461 = scalar_lea.vmem %s12, 96
  %v2462 = vld [vmem:[%s2461] sm:$0xf]
  %v2463 = vld [vmem:[%s2461 + $0x4] sm:$0xf]
  %v2464 = vld [vmem:[%s2461 + $0x8] sm:$0xf]
  %v2465 = vld [vmem:[%s2461 + $0xc] sm:$0xf]
  %v2466 = vld [vmem:[%s2461 + $0x10] sm:$0xf]
  %v2467 = vld [vmem:[%s2461 + $0x14] sm:$0xf]
  %v2468 = vld [vmem:[%s2461 + $0x18] sm:$0xf]
  %v2469 = vld [vmem:[%s2461 + $0x1c] sm:$0xf]
  %s2470 = scalar_lea.vmem %s13, 3
  %v2471 = vld [vmem:[%s2470] sm:$0x1]
  %v2473 = vlaneseq
  %v2474 = vshrl.u32 %v2473, 7
  %v2475 = vsub.s32 0, %v2474
  %v2476 = vrot.slane %v2471, %v2475
  %v2486 = vunpack.c.l.b16 %v2462
  %v2487 = vunpack.c.l.b16 %v2463
  %v2488 = vunpack.c.l.b16 %v2464
  %v2489 = vunpack.c.l.b16 %v2465
  %v2490 = vunpack.c.l.b16 %v2466
  %v2491 = vunpack.c.l.b16 %v2467
  %v2492 = vunpack.c.l.b16 %v2468
  %v2493 = vunpack.c.l.b16 %v2469
  %v2494 = vpack.c.b16 %v2487, %v2486
  %v2495 = vpack.c.b16 %v2489, %v2488
  %v2496 = vpack.c.b16 %v2491, %v2490
  %v2497 = vpack.c.b16 %v2493, %v2492
  %2502 = vmatprep.subr.bf16.mxu0 0
  %2503 = vmatpush1.bf16.msra.mxu0 %v2494
  %2504 = vmatprep.subr.bf16.mxu0 0
  %2505 = vmatpush1.bf16.msra.mxu0 %v2495
  %2506 = vmatprep.subr.bf16.mxu0 0
  %2507 = vmatpush1.bf16.msra.mxu0 %v2496
  %2508 = vmatprep.subr.bf16.mxu0 0
  %2509 = vmatpush1.bf16.msra.mxu0 %v2497
  %2510 = vmatprep.subr.bf16.mxu0 0
  %2511 = vmatpush1.bf16.msra.mxu0 0
  %2512 = vmatprep.subr.bf16.mxu0 0
  %2513 = vmatpush1.bf16.msra.mxu0 0
  %2514 = vmatprep.subr.bf16.mxu0 0
  %2515 = vmatpush1.bf16.msra.mxu0 0
  %2516 = vmatprep.subr.bf16.mxu0 0
  %2517 = vmatpush1.bf16.msra.mxu0 0
  %2518 = vmatprep.subr.bf16.mxu0 0
  %2519 = vmatpush1.bf16.msra.mxu0 0
  %2520 = vmatprep.subr.bf16.mxu0 0
  %2521 = vmatpush1.bf16.msra.mxu0 0
  %2522 = vmatprep.subr.bf16.mxu0 0
  %2523 = vmatpush1.bf16.msra.mxu0 0
  %2524 = vmatprep.subr.bf16.mxu0 0
  %2525 = vmatpush1.bf16.msra.mxu0 0
  %2526 = vmatprep.subr.bf16.mxu0 0
  %2527 = vmatpush1.bf16.msra.mxu0 0
  %2528 = vmatprep.subr.bf16.mxu0 0
  %2529 = vmatpush1.bf16.msra.mxu0 0
  %2530 = vmatprep.subr.bf16.mxu0 0
  %2531 = vmatpush1.bf16.msra.mxu0 0
  %2532 = vmatprep.subr.bf16.mxu0 0
  %2533 = vmatpush1.bf16.msra.mxu0 0
  %2534 = vmatprep.mubr.bf16.mxu0 0
  %2535 = vmatmul.mubr.bf16.gmra.mrb[0].mxu0 %v1812
  %v2536 = vpop.f32.mrb[0].mxu0
  %v2537 = vadd.f32 %v2476, %v2536
  %v2538 = vpop.f32.mrb[0].mxu0
  %v2539 = vpop.f32.mrb[0].mxu0
  %v2540 = vadd.f32 %v2476, %v2539
  %v2541 = vpop.f32.mrb[0].mxu0
  %2542 = vmatprep.mubr.bf16.mxu0 0
  %2543 = vmatmul.mubr.bf16.gmra.mrb[0].mxu0 %v1815
  %v2544 = vpop.f32.mrb[0].mxu0
  %v2545 = vadd.f32 %v2476, %v2544
  %v2546 = vpop.f32.mrb[0].mxu0
  %v2547 = vpop.f32.mrb[0].mxu0
  %v2548 = vpop.f32.mrb[0].mxu0
  %2549 = vdwg.mxu0
  %v2550 = vpack.c.bf16 %v2362, %v2359
  %v2551 = vpack.c.bf16 %v2367, %v2367
  %v2552 = vpack.c.bf16 %v2451, %v2448
  %v2553 = vpack.c.bf16 %v2456, %v2456
  %v2555 = vsel %vm541, %v2550, 0
  %v2558 = vsel %vm541, %v2551, 0
  %v2561 = vsel %vm541, %v2552, 0
  %v2564 = vsel %vm541, %v2553, 0
  %2566 = vmatprep.subr.bf16.mxu0 0
  %2567 = vmatpush1.bf16.xpose.msra.mxu0 %v2561
  %2568 = vmatprep.subr.bf16.mxu0 0
  %2569 = vmatpush1.bf16.xpose.msra.mxu0 %v2564
  %2570 = vmatprep.subr.bf16.mxu0 0
  %2571 = vmatpush1.bf16.xpose.msra.mxu0 0
  %2572 = vmatprep.subr.bf16.mxu0 0
  %2573 = vmatpush1.bf16.xpose.msra.mxu0 0
  %2574 = vmatprep.subr.bf16.mxu0 0
  %2575 = vmatpush1.bf16.xpose.msra.mxu0 0
  %2576 = vmatprep.subr.bf16.mxu0 0
  %2577 = vmatpush1.bf16.xpose.msra.mxu0 0
  %2578 = vmatprep.subr.bf16.mxu0 0
  %2579 = vmatpush1.bf16.xpose.msra.mxu0 0
  %2580 = vmatprep.subr.bf16.mxu0 0
  %2581 = vmatpush1.bf16.xpose.msra.mxu0 0
  %2582 = vmatprep.subr.bf16.mxu0 0
  %2583 = vmatpush1.bf16.xpose.msra.mxu0 0
  %2584 = vmatprep.subr.bf16.mxu0 0
  %2585 = vmatpush1.bf16.xpose.msra.mxu0 0
  %2586 = vmatprep.subr.bf16.mxu0 0
  %2587 = vmatpush1.bf16.xpose.msra.mxu0 0
  %2588 = vmatprep.subr.bf16.mxu0 0
  %2589 = vmatpush1.bf16.xpose.msra.mxu0 0
  %2590 = vmatprep.subr.bf16.mxu0 0
  %2591 = vmatpush1.bf16.xpose.msra.mxu0 0
  %2592 = vmatprep.subr.bf16.mxu0 0
  %2593 = vmatpush1.bf16.xpose.msra.mxu0 0
  %2594 = vmatprep.subr.bf16.mxu0 0
  %2595 = vmatpush1.bf16.xpose.msra.mxu0 0
  %2596 = vmatprep.subr.bf16.mxu0 0
  %2597 = vmatpush1.bf16.xpose.msra.mxu0 0
  %2598 = vmatprep.mubr.bf16.mxu0 0
  %2599 = vmatmul.mubr.bf16.gmra.mrb[0].mxu0 %v2555
  %v2600 = vpop.f32.mrb[0].mxu0
  %v2601 = vadd.f32 %v202, %v2600
  %v2602 = vpop.f32.mrb[0].mxu0
  %v2603 = vpop.f32.mrb[0].mxu0
  %v2604 = vadd.f32 %v203, %v2603
  %v2605 = vpop.f32.mrb[0].mxu0
  %2606 = vmatprep.mubr.bf16.mxu0 0
  %2607 = vmatmul.mubr.bf16.gmra.mrb[0].mxu0 %v2558
  %v2608 = vpop.f32.mrb[0].mxu0
  %v2609 = vadd.f32 %v204, %v2608
  %v2610 = vpop.f32.mrb[0].mxu0
  %v2611 = vpop.f32.mrb[0].mxu0
  %v2612 = vpop.f32.mrb[0].mxu0
  %2613 = vdwg.mxu0
  %v2614 = vsel %vm602, %v2601, -inf
  %2615 = vmax.xlane.f32.xlu0 %v2614
  %v2616 = vpop.xlane.xlu0 %2615
  %v2617 = vsel %vm602, %v2604, -inf
  %2618 = vmax.xlane.f32.xlu0 %v2617
  %v2619 = vpop.xlane.xlu0 %2618
  %v2620 = vsel %vm609, %v2609, -inf
  %2621 = vmax.xlane.f32.xlu0 %v2620
  %v2622 = vpop.xlane.xlu0 %2621
  %v2623 = vsub.f32 %v2601, %v2616
  %v2624 = vsub.f32 %v2604, %v2619
  %v2625 = vsub.f32 %v2609, %v2622
  %v2626 = vmul.f32 %v2623, 1.442695
  %v2627 = vpow.pop %v2626
  %v2628 = vmul.f32 %v2624, 1.442695
  %v2629 = vpow.pop %v2628
  %v2630 = vmul.f32 %v2625, 1.442695
  %v2631 = vpow.pop %v2630
  %v2632 = vsel %vm602, %v2627, 0.0
  %2633 = vadd.xlane.f32.xlu0 %v2632
  %v2634 = vpop.xlane.xlu0 %2633
  %v2635 = vsel %vm602, %v2629, 0.0
  %2636 = vadd.xlane.f32.xlu0 %v2635
  %v2637 = vpop.xlane.xlu0 %2636
  %v2638 = vsel %vm609, %v2631, 0.0
  %2639 = vadd.xlane.f32.xlu0 %v2638
  %v2640 = vpop.xlane.xlu0 %2639
  %v2641 = vpack.c.bf16 %v2629, %v2627
  %v2642 = vpack.c.bf16 %v2631, %v2631
  %v2643 = vpack.c.bf16 %v2540, %v2537
  %v2644 = vpack.c.bf16 %v2545, %v2545
  %v2646 = vsel %vm602, %v2641, 0
  %v2649 = vsel %vm602, %v2642, 0
  %v2652 = vsel %vm200, %v2644, 0
  %2654 = vmatprep.subr.bf16.mxu0 0
  %2655 = vmatpush1.bf16.msra.mxu0 %v2643
  %2656 = vmatprep.subr.bf16.mxu0 0
  %2657 = vmatpush1.bf16.msra.mxu0 %v2652
  %2658 = vmatprep.subr.bf16.mxu0 0
  %2659 = vmatpush1.bf16.msra.mxu0 0
  %2660 = vmatprep.subr.bf16.mxu0 0
  %2661 = vmatpush1.bf16.msra.mxu0 0
  %2662 = vmatprep.subr.bf16.mxu0 0
  %2663 = vmatpush1.bf16.msra.mxu0 0
  %2664 = vmatprep.subr.bf16.mxu0 0
  %2665 = vmatpush1.bf16.msra.mxu0 0
  %2666 = vmatprep.subr.bf16.mxu0 0
  %2667 = vmatpush1.bf16.msra.mxu0 0
  %2668 = vmatprep.subr.bf16.mxu0 0
  %2669 = vmatpush1.bf16.msra.mxu0 0
  %2670 = vmatprep.subr.bf16.mxu0 0
  %2671 = vmatpush1.bf16.msra.mxu0 0
  %2672 = vmatprep.subr.bf16.mxu0 0
  %2673 = vmatpush1.bf16.msra.mxu0 0
  %2674 = vmatprep.subr.bf16.mxu0 0
  %2675 = vmatpush1.bf16.msra.mxu0 0
  %2676 = vmatprep.subr.bf16.mxu0 0
  %2677 = vmatpush1.bf16.msra.mxu0 0
  %2678 = vmatprep.subr.bf16.mxu0 0
  %2679 = vmatpush1.bf16.msra.mxu0 0
  %2680 = vmatprep.subr.bf16.mxu0 0
  %2681 = vmatpush1.bf16.msra.mxu0 0
  %2682 = vmatprep.subr.bf16.mxu0 0
  %2683 = vmatpush1.bf16.msra.mxu0 0
  %2684 = vmatprep.subr.bf16.mxu0 0
  %2685 = vmatpush1.bf16.msra.mxu0 0
  %2686 = vmatprep.mubr.bf16.mxu0 0
  %2687 = vmatmul.mubr.bf16.gmra.mrb[0].mxu0 %v2646
  %v2688 = vpop.f32.mrb[0].mxu0
  %v2689 = vadd.f32 0.0, %v2688
  %v2690 = vpop.f32.mrb[0].mxu0
  %v2691 = vpop.f32.mrb[0].mxu0
  %v2692 = vadd.f32 0.0, %v2691
  %v2693 = vpop.f32.mrb[0].mxu0
  %2694 = vmatprep.mubr.bf16.mxu0 0
  %2695 = vmatmul.mubr.bf16.gmra.mrb[0].mxu0 %v2649
  %v2696 = vpop.f32.mrb[0].mxu0
  %v2697 = vadd.f32 0.0, %v2696
  %v2698 = vpop.f32.mrb[0].mxu0
  %v2699 = vpop.f32.mrb[0].mxu0
  %v2700 = vpop.f32.mrb[0].mxu0
  %2701 = vdwg.mxu0
  %v2702 = vrcp.pop %v2634
  %v2703 = vrcp.pop %v2637
  %v2704 = vrcp.pop %v2640
  %v2705 = vmul.f32 %v2689, %v2702
  %v2706 = vmul.f32 %v2692, %v2703
  %v2707 = vmul.f32 %v2697, %v2704
  %v2708 = vpack.c.bf16 %v2706, %v2705
  %v2709 = vpack.c.bf16 %v2707, %v2707
  %s2710 = scalar_lea.vmem %s14, 48
  %v2711 = vld [vmem:[%s2710] sm:$0xf]
  %v2712 = vld [vmem:[%s2710 + $0x4] sm:$0xf]
  %v2713 = vld [vmem:[%s2710 + $0x8] sm:$0xf]
  %v2714 = vld [vmem:[%s2710 + $0xc] sm:$0xf]
  %v2719 = vunpack.c.l.b16 %v2711
  %v2720 = vunpack.c.l.b16 %v2712
  %v2721 = vunpack.c.l.b16 %v2713
  %v2722 = vunpack.c.l.b16 %v2714
  %v2723 = vpack.c.b16 %v2720, %v2719
  %v2724 = vpack.c.b16 %v2722, %v2721
  %v2728 = vsel %vm541, %v2708, 0
  %v2731 = vsel %vm541, %v2709, 0
  %2733 = vmatprep.subr.bf16.mxu0 0
  %2734 = vmatpush1.bf16.msra.mxu0 %v2723
  %2735 = vmatprep.subr.bf16.mxu0 0
  %2736 = vmatpush1.bf16.msra.mxu0 %v2724
  %2737 = vmatprep.subr.bf16.mxu0 0
  %2738 = vmatpush1.bf16.msra.mxu0 0
  %2739 = vmatprep.subr.bf16.mxu0 0
  %2740 = vmatpush1.bf16.msra.mxu0 0
  %2741 = vmatprep.subr.bf16.mxu0 0
  %2742 = vmatpush1.bf16.msra.mxu0 0
  %2743 = vmatprep.subr.bf16.mxu0 0
  %2744 = vmatpush1.bf16.msra.mxu0 0
  %2745 = vmatprep.subr.bf16.mxu0 0
  %2746 = vmatpush1.bf16.msra.mxu0 0
  %2747 = vmatprep.subr.bf16.mxu0 0
  %2748 = vmatpush1.bf16.msra.mxu0 0
  %2749 = vmatprep.subr.bf16.mxu0 0
  %2750 = vmatpush1.bf16.msra.mxu0 0
  %2751 = vmatprep.subr.bf16.mxu0 0
  %2752 = vmatpush1.bf16.msra.mxu0 0
  %2753 = vmatprep.subr.bf16.mxu0 0
  %2754 = vmatpush1.bf16.msra.mxu0 0
  %2755 = vmatprep.subr.bf16.mxu0 0
  %2756 = vmatpush1.bf16.msra.mxu0 0
  %2757 = vmatprep.subr.bf16.mxu0 0
  %2758 = vmatpush1.bf16.msra.mxu0 0
  %2759 = vmatprep.subr.bf16.mxu0 0
  %2760 = vmatpush1.bf16.msra.mxu0 0
  %2761 = vmatprep.subr.bf16.mxu0 0
  %2762 = vmatpush1.bf16.msra.mxu0 0
  %2763 = vmatprep.subr.bf16.mxu0 0
  %2764 = vmatpush1.bf16.msra.mxu0 0
  %2765 = vmatprep.mubr.bf16.mxu0 0
  %2766 = vmatmul.mubr.bf16.gmra.mrb[0].mxu0 %v2728
  %v2767 = vpop.f32.mrb[0].mxu0
  %v2768 = vadd.f32 0.0, %v2767
  %v2769 = vpop.f32.mrb[0].mxu0
  %v2770 = vpop.f32.mrb[0].mxu0
  %v2771 = vadd.f32 0.0, %v2770
  %v2772 = vpop.f32.mrb[0].mxu0
  %2773 = vmatprep.mubr.bf16.mxu0 0
  %2774 = vmatmul.mubr.bf16.gmra.mrb[0].mxu0 %v2731
  %v2775 = vpop.f32.mrb[0].mxu0
  %v2776 = vadd.f32 0.0, %v2775
  %v2777 = vpop.f32.mrb[0].mxu0
  %v2778 = vpop.f32.mrb[0].mxu0
  %v2779 = vpop.f32.mrb[0].mxu0
  %2780 = vdwg.mxu0
  %v2781 = vadd.f32 %v2280, %v2768
  %v2782 = vadd.f32 %v2281, %v2771
  %v2783 = vadd.f32 %v2282, %v2776
  %v2784 = vadd.f32 %v1702, %v2781
  %v2785 = vadd.f32 %v1703, %v2782
  %v2786 = vadd.f32 %v1704, %v2783
  %s2787 = scalar_lea.vmem %s16, 1
  %v2788 = vld [vmem:[%s2787] sm:$0x1]
  %s2789 = scalar_lea.vmem %s17, 1
  %v2790 = vld [vmem:[%s2789] sm:$0x1]
  %v2791 = vsel %vm207, %v2784, 0.0
  %2792 = vadd.xlane.f32.xlu0 %v2791
  %v2793 = vpop.xlane.xlu0 %2792
  %v2794 = vsel %vm207, %v2785, 0.0
  %2795 = vadd.xlane.f32.xlu0 %v2794
  %v2796 = vpop.xlane.xlu0 %2795
  %v2797 = vsel %vm214, %v2786, 0.0
  %2798 = vadd.xlane.f32.xlu0 %v2797
  %v2799 = vpop.xlane.xlu0 %2798
  %v2800 = vmul.f32 %v2793, %v218
  %v2801 = vmul.f32 %v2796, %v218
  %v2802 = vmul.f32 %v2799, %v218
  %v2803 = vsub.f32 %v2784, %v2800
  %v2804 = vsub.f32 %v2785, %v2801
  %v2805 = vsub.f32 %v2786, %v2802
  %v2806 = vmul.f32 %v2803, %v2803
  %v2807 = vmul.f32 %v2804, %v2804
  %v2808 = vmul.f32 %v2805, %v2805
  %v2809 = vsel %vm207, %v2806, 0.0
  %2810 = vadd.xlane.f32.xlu0 %v2809
  %v2811 = vpop.xlane.xlu0 %2810
  %v2812 = vsel %vm207, %v2807, 0.0
  %2813 = vadd.xlane.f32.xlu0 %v2812
  %v2814 = vpop.xlane.xlu0 %2813
  %v2815 = vsel %vm214, %v2808, 0.0
  %2816 = vadd.xlane.f32.xlu0 %v2815
  %v2817 = vpop.xlane.xlu0 %2816
  %v2818 = vmul.f32 %v2811, %v218
  %v2819 = vmul.f32 %v2814, %v218
  %v2820 = vmul.f32 %v2817, %v218
  %v2821 = vadd.f32 %v2818, 1e-05
  %v2822 = vadd.f32 %v2819, 1e-05
  %v2823 = vadd.f32 %v2820, 1e-05
  %v2824 = vrsqrt.pop %v2821
  %v2825 = vrsqrt.pop %v2822
  %v2826 = vrsqrt.pop %v2823
  %v2827 = vmul.f32 %v2803, %v2824
  %v2828 = vmul.f32 %v2804, %v2825
  %v2829 = vmul.f32 %v2805, %v2826
  %v2831 = vlaneseq
  %v2832 = vshrl.u32 %v2831, 7
  %v2833 = vsub.s32 0, %v2832
  %v2834 = vrot.slane %v2788, %v2833
  %v2836 = vmul.f32 %v2827, %v2834
  %v2837 = vmul.f32 %v2828, %v2834
  %v2838 = vmul.f32 %v2829, %v2834
  %v2840 = vlaneseq
  %v2841 = vshrl.u32 %v2840, 7
  %v2842 = vsub.s32 0, %v2841
  %v2843 = vrot.slane %v2790, %v2842
  %v2845 = vadd.f32 %v2836, %v2843
  %v2846 = vadd.f32 %v2837, %v2843
  %v2847 = vadd.f32 %v2838, %v2843
  %v2848 = vpack.c.bf16 %v2846, %v2845
  %v2849 = vpack.c.bf16 %v2847, %v2847
  %s2850 = scalar_lea.vmem %s18, 64
  %v2851 = vld [vmem:[%s2850] sm:$0xff]
  %v2852 = vld [vmem:[%s2850 + $0x8] sm:$0xff]
  %v2853 = vld [vmem:[%s2850 + $0x10] sm:$0xff]
  %v2854 = vld [vmem:[%s2850 + $0x18] sm:$0xff]
  %v2855 = vld [vmem:[%s2850 + $0x20] sm:$0xff]
  %v2856 = vld [vmem:[%s2850 + $0x28] sm:$0xff]
  %v2857 = vld [vmem:[%s2850 + $0x30] sm:$0xff]
  %v2858 = vld [vmem:[%s2850 + $0x38] sm:$0xff]
  %s2859 = scalar_lea.vmem %s19, 2
  %v2860 = vld [vmem:[%s2859] sm:$0x3]
  %v2862 = vlaneseq
  %v2863 = vshrl.u32 %v2862, 7
  %v2864 = vsub.s32 0, %v2863
  %v2865 = vrot.slane %v2860, %v2864
  %v2866 = vlaneseq
  %v2867 = vshrl.u32 %v2866, 7
  %v2868 = vsub.s32 1, %v2867
  %v2869 = vrot.slane %v2860, %v2868
  %v2880 = vunpack.c.l.b16 %v2851
  %v2881 = vunpack.c.h.b16 %v2851
  %v2882 = vunpack.c.l.b16 %v2852
  %v2883 = vunpack.c.h.b16 %v2852
  %v2884 = vunpack.c.l.b16 %v2853
  %v2885 = vunpack.c.h.b16 %v2853
  %v2886 = vunpack.c.l.b16 %v2854
  %v2887 = vunpack.c.h.b16 %v2854
  %v2888 = vunpack.c.l.b16 %v2855
  %v2889 = vunpack.c.h.b16 %v2855
  %v2890 = vunpack.c.l.b16 %v2856
  %v2891 = vunpack.c.h.b16 %v2856
  %v2892 = vunpack.c.l.b16 %v2857
  %v2893 = vunpack.c.h.b16 %v2857
  %v2894 = vunpack.c.l.b16 %v2858
  %v2895 = vunpack.c.h.b16 %v2858
  %v2896 = vpack.c.b16 %v2882, %v2880
  %v2897 = vpack.c.b16 %v2883, %v2881
  %v2898 = vpack.c.b16 %v2886, %v2884
  %v2899 = vpack.c.b16 %v2887, %v2885
  %v2900 = vpack.c.b16 %v2890, %v2888
  %v2901 = vpack.c.b16 %v2891, %v2889
  %v2902 = vpack.c.b16 %v2894, %v2892
  %v2903 = vpack.c.b16 %v2895, %v2893
  %v2913 = vsel %vm207, %v2848, 0
  %v2916 = vsel %vm207, %v2849, 0
  %2918 = vmatprep.subr.bf16.mxu0 %v2897
  %2919 = vmatpush1.bf16.msra.mxu0 %v2896
  %2920 = vmatprep.subr.bf16.mxu0 %v2899
  %2921 = vmatpush1.bf16.msra.mxu0 %v2898
  %2922 = vmatprep.subr.bf16.mxu0 %v2901
  %2923 = vmatpush1.bf16.msra.mxu0 %v2900
  %2924 = vmatprep.subr.bf16.mxu0 %v2903
  %2925 = vmatpush1.bf16.msra.mxu0 %v2902
  %2926 = vmatprep.subr.bf16.mxu0 0
  %2927 = vmatpush1.bf16.msra.mxu0 0
  %2928 = vmatprep.subr.bf16.mxu0 0
  %2929 = vmatpush1.bf16.msra.mxu0 0
  %2930 = vmatprep.subr.bf16.mxu0 0
  %2931 = vmatpush1.bf16.msra.mxu0 0
  %2932 = vmatprep.subr.bf16.mxu0 0
  %2933 = vmatpush1.bf16.msra.mxu0 0
  %2934 = vmatprep.subr.bf16.mxu0 0
  %2935 = vmatpush1.bf16.msra.mxu0 0
  %2936 = vmatprep.subr.bf16.mxu0 0
  %2937 = vmatpush1.bf16.msra.mxu0 0
  %2938 = vmatprep.subr.bf16.mxu0 0
  %2939 = vmatpush1.bf16.msra.mxu0 0
  %2940 = vmatprep.subr.bf16.mxu0 0
  %2941 = vmatpush1.bf16.msra.mxu0 0
  %2942 = vmatprep.subr.bf16.mxu0 0
  %2943 = vmatpush1.bf16.msra.mxu0 0
  %2944 = vmatprep.subr.bf16.mxu0 0
  %2945 = vmatpush1.bf16.msra.mxu0 0
  %2946 = vmatprep.subr.bf16.mxu0 0
  %2947 = vmatpush1.bf16.msra.mxu0 0
  %2948 = vmatprep.subr.bf16.mxu0 0
  %2949 = vmatpush1.bf16.msra.mxu0 0
  %2950 = vmatprep.mubr.bf16.mxu0 0
  %2951 = vmatmul.mubr.bf16.gmra.mrb[0].mxu0 %v2913
  %v2952 = vpop.f32.mrb[0].mxu0
  %v2953 = vadd.f32 %v2865, %v2952
  %v2954 = vpop.f32.mrb[0].mxu0
  %v2955 = vadd.f32 %v2869, %v2954
  %v2956 = vpop.f32.mrb[0].mxu0
  %v2957 = vadd.f32 %v2865, %v2956
  %v2958 = vpop.f32.mrb[0].mxu0
  %v2959 = vadd.f32 %v2869, %v2958
  %2960 = vmatprep.mubr.bf16.mxu0 0
  %2961 = vmatmul.mubr.bf16.gmra.mrb[0].mxu0 %v2916
  %v2962 = vpop.f32.mrb[0].mxu0
  %v2963 = vadd.f32 %v2865, %v2962
  %v2964 = vpop.f32.mrb[0].mxu0
  %v2965 = vadd.f32 %v2869, %v2964
  %v2966 = vpop.f32.mrb[0].mxu0
  %v2967 = vpop.f32.mrb[0].mxu0
  %2968 = vdwg.mxu0
  %v2969 = vmul.f32 %v2953, 0.5
  %v2970 = vmul.f32 %v2955, 0.5
  %v2971 = vmul.f32 %v2957, 0.5
  %v2972 = vmul.f32 %v2959, 0.5
  %v2973 = vmul.f32 %v2963, 0.5
  %v2974 = vmul.f32 %v2965, 0.5
  %v2975 = vmul.f32 %v2953, 0.044715
  %v2976 = vmul.f32 %v2955, 0.044715
  %v2977 = vmul.f32 %v2957, 0.044715
  %v2978 = vmul.f32 %v2959, 0.044715
  %v2979 = vmul.f32 %v2963, 0.044715
  %v2980 = vmul.f32 %v2965, 0.044715
  %v2981 = vmul.f32 %v2975, %v2953
  %v2982 = vmul.f32 %v2976, %v2955
  %v2983 = vmul.f32 %v2977, %v2957
  %v2984 = vmul.f32 %v2978, %v2959
  %v2985 = vmul.f32 %v2979, %v2963
  %v2986 = vmul.f32 %v2980, %v2965
  %v2987 = vmul.f32 %v2981, %v2953
  %v2988 = vmul.f32 %v2982, %v2955
  %v2989 = vmul.f32 %v2983, %v2957
  %v2990 = vmul.f32 %v2984, %v2959
  %v2991 = vmul.f32 %v2985, %v2963
  %v2992 = vmul.f32 %v2986, %v2965
  %v2993 = vadd.f32 %v2953, %v2987
  %v2994 = vadd.f32 %v2955, %v2988
  %v2995 = vadd.f32 %v2957, %v2989
  %v2996 = vadd.f32 %v2959, %v2990
  %v2997 = vadd.f32 %v2963, %v2991
  %v2998 = vadd.f32 %v2965, %v2992
  %v2999 = vmul.f32 %v2993, 0.7978846
  %v3000 = vmul.f32 %v2994, 0.7978846
  %v3001 = vmul.f32 %v2995, 0.7978846
  %v3002 = vmul.f32 %v2996, 0.7978846
  %v3003 = vmul.f32 %v2997, 0.7978846
  %v3004 = vmul.f32 %v2998, 0.7978846
  %v3005 = vtanh.pop %v2999
  %v3006 = vtanh.pop %v3000
  %v3007 = vtanh.pop %v3001
  %v3008 = vtanh.pop %v3002
  %v3009 = vtanh.pop %v3003
  %v3010 = vtanh.pop %v3004
  %v3011 = vadd.f32 %v3005, 1.0
  %v3012 = vadd.f32 %v3006, 1.0
  %v3013 = vadd.f32 %v3007, 1.0
  %v3014 = vadd.f32 %v3008, 1.0
  %v3015 = vadd.f32 %v3009, 1.0
  %v3016 = vadd.f32 %v3010, 1.0
  %v3017 = vmul.f32 %v2969, %v3011
  %v3018 = vmul.f32 %v2970, %v3012
  %v3019 = vmul.f32 %v2971, %v3013
  %v3020 = vmul.f32 %v2972, %v3014
  %v3021 = vmul.f32 %v2973, %v3015
  %v3022 = vmul.f32 %v2974, %v3016
  %v3023 = vpack.c.bf16 %v3019, %v3017
  %v3024 = vpack.c.bf16 %v3020, %v3018
  %v3025 = vpack.c.bf16 %v3021, %v3021
  %v3026 = vpack.c.bf16 %v3022, %v3022
  %s3027 = scalar_lea.vmem %s20, 128
  %v3028 = vld [vmem:[%s3027] sm:$0xf]
  %v3029 = vld [vmem:[%s3027 + $0x4] sm:$0xf]
  %v3030 = vld [vmem:[%s3027 + $0x8] sm:$0xf]
  %v3031 = vld [vmem:[%s3027 + $0xc] sm:$0xf]
  %v3032 = vld [vmem:[%s3027 + $0x10] sm:$0xf]
  %v3033 = vld [vmem:[%s3027 + $0x14] sm:$0xf]
  %v3034 = vld [vmem:[%s3027 + $0x18] sm:$0xf]
  %v3035 = vld [vmem:[%s3027 + $0x1c] sm:$0xf]
  %v3036 = vld [vmem:[%s3027 + $0x20] sm:$0xf]
  %v3037 = vld [vmem:[%s3027 + $0x24] sm:$0xf]
  %v3038 = vld [vmem:[%s3027 + $0x28] sm:$0xf]
  %v3039 = vld [vmem:[%s3027 + $0x2c] sm:$0xf]
  %v3040 = vld [vmem:[%s3027 + $0x30] sm:$0xf]
  %v3041 = vld [vmem:[%s3027 + $0x34] sm:$0xf]
  %v3042 = vld [vmem:[%s3027 + $0x38] sm:$0xf]
  %v3043 = vld [vmem:[%s3027 + $0x3c] sm:$0xf]
  %v3044 = vld [vmem:[%s3027 + $0x40] sm:$0xf]
  %v3045 = vld [vmem:[%s3027 + $0x44] sm:$0xf]
  %v3046 = vld [vmem:[%s3027 + $0x48] sm:$0xf]
  %v3047 = vld [vmem:[%s3027 + $0x4c] sm:$0xf]
  %v3048 = vld [vmem:[%s3027 + $0x50] sm:$0xf]
  %v3049 = vld [vmem:[%s3027 + $0x54] sm:$0xf]
  %v3050 = vld [vmem:[%s3027 + $0x58] sm:$0xf]
  %v3051 = vld [vmem:[%s3027 + $0x5c] sm:$0xf]
  %v3052 = vld [vmem:[%s3027 + $0x60] sm:$0xf]
  %v3053 = vld [vmem:[%s3027 + $0x64] sm:$0xf]
  %v3054 = vld [vmem:[%s3027 + $0x68] sm:$0xf]
  %v3055 = vld [vmem:[%s3027 + $0x6c] sm:$0xf]
  %v3056 = vld [vmem:[%s3027 + $0x70] sm:$0xf]
  %v3057 = vld [vmem:[%s3027 + $0x74] sm:$0xf]
  %v3058 = vld [vmem:[%s3027 + $0x78] sm:$0xf]
  %v3059 = vld [vmem:[%s3027 + $0x7c] sm:$0xf]
  %s3060 = scalar_lea.vmem %s21, 1
  %v3061 = vld [vmem:[%s3060] sm:$0x1]
  %v3063 = vlaneseq
  %v3064 = vshrl.u32 %v3063, 7
  %v3065 = vsub.s32 0, %v3064
  %v3066 = vrot.slane %v3061, %v3065
  %v3100 = vunpack.c.l.b16 %v3028
  %v3101 = vunpack.c.l.b16 %v3029
  %v3102 = vunpack.c.l.b16 %v3030
  %v3103 = vunpack.c.l.b16 %v3031
  %v3104 = vunpack.c.l.b16 %v3032
  %v3105 = vunpack.c.l.b16 %v3033
  %v3106 = vunpack.c.l.b16 %v3034
  %v3107 = vunpack.c.l.b16 %v3035
  %v3108 = vunpack.c.l.b16 %v3036
  %v3109 = vunpack.c.l.b16 %v3037
  %v3110 = vunpack.c.l.b16 %v3038
  %v3111 = vunpack.c.l.b16 %v3039
  %v3112 = vunpack.c.l.b16 %v3040
  %v3113 = vunpack.c.l.b16 %v3041
  %v3114 = vunpack.c.l.b16 %v3042
  %v3115 = vunpack.c.l.b16 %v3043
  %v3116 = vunpack.c.l.b16 %v3044
  %v3117 = vunpack.c.l.b16 %v3045
  %v3118 = vunpack.c.l.b16 %v3046
  %v3119 = vunpack.c.l.b16 %v3047
  %v3120 = vunpack.c.l.b16 %v3048
  %v3121 = vunpack.c.l.b16 %v3049
  %v3122 = vunpack.c.l.b16 %v3050
  %v3123 = vunpack.c.l.b16 %v3051
  %v3124 = vunpack.c.l.b16 %v3052
  %v3125 = vunpack.c.l.b16 %v3053
  %v3126 = vunpack.c.l.b16 %v3054
  %v3127 = vunpack.c.l.b16 %v3055
  %v3128 = vunpack.c.l.b16 %v3056
  %v3129 = vunpack.c.l.b16 %v3057
  %v3130 = vunpack.c.l.b16 %v3058
  %v3131 = vunpack.c.l.b16 %v3059
  %v3132 = vpack.c.b16 %v3101, %v3100
  %v3133 = vpack.c.b16 %v3103, %v3102
  %v3134 = vpack.c.b16 %v3105, %v3104
  %v3135 = vpack.c.b16 %v3107, %v3106
  %v3136 = vpack.c.b16 %v3109, %v3108
  %v3137 = vpack.c.b16 %v3111, %v3110
  %v3138 = vpack.c.b16 %v3113, %v3112
  %v3139 = vpack.c.b16 %v3115, %v3114
  %v3140 = vpack.c.b16 %v3117, %v3116
  %v3141 = vpack.c.b16 %v3119, %v3118
  %v3142 = vpack.c.b16 %v3121, %v3120
  %v3143 = vpack.c.b16 %v3123, %v3122
  %v3144 = vpack.c.b16 %v3125, %v3124
  %v3145 = vpack.c.b16 %v3127, %v3126
  %v3146 = vpack.c.b16 %v3129, %v3128
  %v3147 = vpack.c.b16 %v3131, %v3130
  %3164 = vmatprep.subr.bf16.mxu0 0
  %3165 = vmatpush1.bf16.msra.mxu0 %v3132
  %3166 = vmatprep.subr.bf16.mxu0 0
  %3167 = vmatpush1.bf16.msra.mxu0 %v3133
  %3168 = vmatprep.subr.bf16.mxu0 0
  %3169 = vmatpush1.bf16.msra.mxu0 %v3134
  %3170 = vmatprep.subr.bf16.mxu0 0
  %3171 = vmatpush1.bf16.msra.mxu0 %v3135
  %3172 = vmatprep.subr.bf16.mxu0 0
  %3173 = vmatpush1.bf16.msra.mxu0 %v3136
  %3174 = vmatprep.subr.bf16.mxu0 0
  %3175 = vmatpush1.bf16.msra.mxu0 %v3137
  %3176 = vmatprep.subr.bf16.mxu0 0
  %3177 = vmatpush1.bf16.msra.mxu0 %v3138
  %3178 = vmatprep.subr.bf16.mxu0 0
  %3179 = vmatpush1.bf16.msra.mxu0 %v3139
  %3180 = vmatprep.subr.bf16.mxu0 0
  %3181 = vmatpush1.bf16.msra.mxu0 %v3140
  %3182 = vmatprep.subr.bf16.mxu0 0
  %3183 = vmatpush1.bf16.msra.mxu0 %v3141
  %3184 = vmatprep.subr.bf16.mxu0 0
  %3185 = vmatpush1.bf16.msra.mxu0 %v3142
  %3186 = vmatprep.subr.bf16.mxu0 0
  %3187 = vmatpush1.bf16.msra.mxu0 %v3143
  %3188 = vmatprep.subr.bf16.mxu0 0
  %3189 = vmatpush1.bf16.msra.mxu0 %v3144
  %3190 = vmatprep.subr.bf16.mxu0 0
  %3191 = vmatpush1.bf16.msra.mxu0 %v3145
  %3192 = vmatprep.subr.bf16.mxu0 0
  %3193 = vmatpush1.bf16.msra.mxu0 %v3146
  %3194 = vmatprep.subr.bf16.mxu0 0
  %3195 = vmatpush1.bf16.msra.mxu0 %v3147
  %3196 = vmatprep.mubr.bf16.mxu0 %v3024
  %3197 = vmatmul.mubr.bf16.gmra.mrb[0].mxu0 %v3023
  %v3198 = vpop.f32.mrb[0].mxu0
  %v3199 = vpop.f32.mrb[0].mxu0
  %v3200 = vpop.f32.mrb[0].mxu0
  %v3201 = vpop.f32.mrb[0].mxu0
  %3202 = vmatprep.mubr.bf16.mxu0 %v3026
  %3203 = vmatmul.mubr.bf16.gmra.mrb[0].mxu0 %v3025
  %v3204 = vpop.f32.mrb[0].mxu0
  %v3205 = vadd.f32 %v3066, %v3204
  %v3206 = vpop.f32.mrb[0].mxu0
  %v3207 = vpop.f32.mrb[0].mxu0
  %v3208 = vpop.f32.mrb[0].mxu0
  %3209 = vdwg.mxu0
  %v3210 = vadd.f32 %v2786, %v3205
  %v3211 = vld [vmem:[%s22] sm:$0x1]
  %v3212 = vld [vmem:[%s23] sm:$0x1]
  %v3213 = vsel %vm214, %v3210, 0.0
  %3214 = vadd.xlane.f32.xlu0 %v3213
  %v3215 = vpop.xlane.xlu0 %3214
  %v3216 = vmul.f32 %v3215, %v218
  %v3217 = vsub.f32 %v3210, %v3216
  %v3218 = vmul.f32 %v3217, %v3217
  %v3219 = vsel %vm214, %v3218, 0.0
  %3220 = vadd.xlane.f32.xlu0 %v3219
  %v3221 = vpop.xlane.xlu0 %3220
  %v3222 = vmul.f32 %v3221, %v218
  %v3223 = vadd.f32 %v3222, 1e-05
  %v3224 = vrsqrt.pop %v3223
  %v3225 = vmul.f32 %v3217, %v3224
  %v3227 = vlaneseq
  %v3228 = vshrl.u32 %v3227, 7
  %v3229 = vsub.s32 0, %v3228
  %v3230 = vrot.slane %v3211, %v3229
  %v3232 = vmul.f32 %v3225, %v3230
  %v3234 = vlaneseq
  %v3235 = vshrl.u32 %v3234, 7
  %v3236 = vsub.s32 0, %v3235
  %v3237 = vrot.slane %v3212, %v3236
  %v3239 = vadd.f32 %v3232, %v3237
  %v3240 = vpack.c.bf16 %v3239, %v3239
  %v3241 = vld [vmem:[%s24] sm:$0xff]
  %v3242 = vld [vmem:[%s24 + $0x8] sm:$0xff]
  %v3243 = vld [vmem:[%s24 + $0x10] sm:$0xff]
  %v3244 = vld [vmem:[%s24 + $0x18] sm:$0xff]
  %v3245 = vld [vmem:[%s24 + $0x20] sm:$0xff]
  %v3246 = vld [vmem:[%s24 + $0x28] sm:$0xff]
  %v3247 = vld [vmem:[%s24 + $0x30] sm:$0xff]
  %v3248 = vld [vmem:[%s24 + $0x38] sm:$0xff]
  %v3257 = vunpack.c.l.b16 %v3241
  %v3258 = vunpack.c.h.b16 %v3241
  %v3259 = vunpack.c.l.b16 %v3242
  %v3260 = vunpack.c.h.b16 %v3242
  %v3261 = vunpack.c.l.b16 %v3243
  %v3262 = vunpack.c.h.b16 %v3243
  %v3263 = vunpack.c.l.b16 %v3244
  %v3264 = vunpack.c.h.b16 %v3244
  %v3265 = vunpack.c.l.b16 %v3245
  %v3266 = vunpack.c.h.b16 %v3245
  %v3267 = vunpack.c.l.b16 %v3246
  %v3268 = vunpack.c.h.b16 %v3246
  %v3269 = vunpack.c.l.b16 %v3247
  %v3270 = vunpack.c.h.b16 %v3247
  %v3271 = vunpack.c.l.b16 %v3248
  %v3272 = vunpack.c.h.b16 %v3248
  %v3273 = vpack.c.b16 %v3259, %v3257
  %v3274 = vpack.c.b16 %v3260, %v3258
  %v3275 = vpack.c.b16 %v3263, %v3261
  %v3276 = vpack.c.b16 %v3264, %v3262
  %v3277 = vpack.c.b16 %v3267, %v3265
  %v3278 = vpack.c.b16 %v3268, %v3266
  %v3279 = vpack.c.b16 %v3271, %v3269
  %v3280 = vpack.c.b16 %v3272, %v3270
  %v3290 = vsel %vm207, %v3240, 0
  %3292 = vmatprep.subr.bf16.mxu0 %v3274
  %3293 = vmatpush1.bf16.msra.mxu0 %v3273
  %3294 = vmatprep.subr.bf16.mxu0 %v3276
  %3295 = vmatpush1.bf16.msra.mxu0 %v3275
  %3296 = vmatprep.subr.bf16.mxu0 %v3278
  %3297 = vmatpush1.bf16.msra.mxu0 %v3277
  %3298 = vmatprep.subr.bf16.mxu0 %v3280
  %3299 = vmatpush1.bf16.msra.mxu0 %v3279
  %3300 = vmatprep.subr.bf16.mxu0 0
  %3301 = vmatpush1.bf16.msra.mxu0 0
  %3302 = vmatprep.subr.bf16.mxu0 0
  %3303 = vmatpush1.bf16.msra.mxu0 0
  %3304 = vmatprep.subr.bf16.mxu0 0
  %3305 = vmatpush1.bf16.msra.mxu0 0
  %3306 = vmatprep.subr.bf16.mxu0 0
  %3307 = vmatpush1.bf16.msra.mxu0 0
  %3308 = vmatprep.subr.bf16.mxu0 0
  %3309 = vmatpush1.bf16.msra.mxu0 0
  %3310 = vmatprep.subr.bf16.mxu0 0
  %3311 = vmatpush1.bf16.msra.mxu0 0
  %3312 = vmatprep.subr.bf16.mxu0 0
  %3313 = vmatpush1.bf16.msra.mxu0 0
  %3314 = vmatprep.subr.bf16.mxu0 0
  %3315 = vmatpush1.bf16.msra.mxu0 0
  %3316 = vmatprep.subr.bf16.mxu0 0
  %3317 = vmatpush1.bf16.msra.mxu0 0
  %3318 = vmatprep.subr.bf16.mxu0 0
  %3319 = vmatpush1.bf16.msra.mxu0 0
  %3320 = vmatprep.subr.bf16.mxu0 0
  %3321 = vmatpush1.bf16.msra.mxu0 0
  %3322 = vmatprep.subr.bf16.mxu0 0
  %3323 = vmatpush1.bf16.msra.mxu0 0
  %3324 = vmatprep.mubr.bf16.mxu0 0
  %3325 = vmatmul.mubr.bf16.gmra.mrb[0].mxu0 %v3290
  %v3326 = vpop.f32.mrb[0].mxu0
  %v3327 = vadd.f32 0.0, %v3326
  %v3328 = vpop.f32.mrb[0].mxu0
  %v3329 = vadd.f32 0.0, %v3328
  %v3330 = vpop.f32.mrb[0].mxu0
  %v3331 = vpop.f32.mrb[0].mxu0
  %3332 = vdwg.mxu0
  %v3333 = vld [vmem:[%s25] sm:$0xff]
  %v3334 = vld [vmem:[%s25 + $0x8] sm:$0xff]
  %v3335 = vld [vmem:[%s25 + $0x10] sm:$0xff]
  %v3336 = vld [vmem:[%s25 + $0x18] sm:$0xff]
  %v3337 = vld [vmem:[%s25 + $0x20] sm:$0xff]
  %v3338 = vld [vmem:[%s25 + $0x28] sm:$0xff]
  %v3339 = vld [vmem:[%s25 + $0x30] sm:$0xff]
  %v3340 = vld [vmem:[%s25 + $0x38] sm:$0xff]
  %v3349 = vunpack.c.l.b16 %v3333
  %v3350 = vunpack.c.h.b16 %v3333
  %v3351 = vunpack.c.l.b16 %v3334
  %v3352 = vunpack.c.h.b16 %v3334
  %v3353 = vunpack.c.l.b16 %v3335
  %v3354 = vunpack.c.h.b16 %v3335
  %v3355 = vunpack.c.l.b16 %v3336
  %v3356 = vunpack.c.h.b16 %v3336
  %v3357 = vunpack.c.l.b16 %v3337
  %v3358 = vunpack.c.h.b16 %v3337
  %v3359 = vunpack.c.l.b16 %v3338
  %v3360 = vunpack.c.h.b16 %v3338
  %v3361 = vunpack.c.l.b16 %v3339
  %v3362 = vunpack.c.h.b16 %v3339
  %v3363 = vunpack.c.l.b16 %v3340
  %v3364 = vunpack.c.h.b16 %v3340
  %v3365 = vpack.c.b16 %v3351, %v3349
  %v3366 = vpack.c.b16 %v3352, %v3350
  %v3367 = vpack.c.b16 %v3355, %v3353
  %v3368 = vpack.c.b16 %v3356, %v3354
  %v3369 = vpack.c.b16 %v3359, %v3357
  %v3370 = vpack.c.b16 %v3360, %v3358
  %v3371 = vpack.c.b16 %v3363, %v3361
  %v3372 = vpack.c.b16 %v3364, %v3362
  %3381 = vmatprep.subr.bf16.mxu0 %v3366
  %3382 = vmatpush1.bf16.msra.mxu0 %v3365
  %3383 = vmatprep.subr.bf16.mxu0 %v3368
  %3384 = vmatpush1.bf16.msra.mxu0 %v3367
  %3385 = vmatprep.subr.bf16.mxu0 %v3370
  %3386 = vmatpush1.bf16.msra.mxu0 %v3369
  %3387 = vmatprep.subr.bf16.mxu0 %v3372
  %3388 = vmatpush1.bf16.msra.mxu0 %v3371
  %3389 = vmatprep.subr.bf16.mxu0 0
  %3390 = vmatpush1.bf16.msra.mxu0 0
  %3391 = vmatprep.subr.bf16.mxu0 0
  %3392 = vmatpush1.bf16.msra.mxu0 0
  %3393 = vmatprep.subr.bf16.mxu0 0
  %3394 = vmatpush1.bf16.msra.mxu0 0
  %3395 = vmatprep.subr.bf16.mxu0 0
  %3396 = vmatpush1.bf16.msra.mxu0 0
  %3397 = vmatprep.subr.bf16.mxu0 0
  %3398 = vmatpush1.bf16.msra.mxu0 0
  %3399 = vmatprep.subr.bf16.mxu0 0
  %3400 = vmatpush1.bf16.msra.mxu0 0
  %3401 = vmatprep.subr.bf16.mxu0 0
  %3402 = vmatpush1.bf16.msra.mxu0 0
  %3403 = vmatprep.subr.bf16.mxu0 0
  %3404 = vmatpush1.bf16.msra.mxu0 0
  %3405 = vmatprep.subr.bf16.mxu0 0
  %3406 = vmatpush1.bf16.msra.mxu0 0
  %3407 = vmatprep.subr.bf16.mxu0 0
  %3408 = vmatpush1.bf16.msra.mxu0 0
  %3409 = vmatprep.subr.bf16.mxu0 0
  %3410 = vmatpush1.bf16.msra.mxu0 0
  %3411 = vmatprep.subr.bf16.mxu0 0
  %3412 = vmatpush1.bf16.msra.mxu0 0
  %3413 = vmatprep.mubr.bf16.mxu0 0
  %3414 = vmatmul.mubr.bf16.gmra.mrb[0].mxu0 %v3290
  %v3415 = vpop.f32.mrb[0].mxu0
  %v3416 = vadd.f32 0.0, %v3415
  %v3417 = vpop.f32.mrb[0].mxu0
  %v3418 = vadd.f32 0.0, %v3417
  %v3419 = vpop.f32.mrb[0].mxu0
  %v3420 = vpop.f32.mrb[0].mxu0
  %3421 = vdwg.mxu0
  %v3422 = vmul.f32 %v3416, 0.5
  %v3423 = vmul.f32 %v3418, 0.5
  %v3424 = vmul.f32 %v3416, 0.044715
  %v3425 = vmul.f32 %v3418, 0.044715
  %v3426 = vmul.f32 %v3424, %v3416
  %v3427 = vmul.f32 %v3425, %v3418
  %v3428 = vmul.f32 %v3426, %v3416
  %v3429 = vmul.f32 %v3427, %v3418
  %v3430 = vadd.f32 %v3416, %v3428
  %v3431 = vadd.f32 %v3418, %v3429
  %v3432 = vmul.f32 %v3430, 0.7978846
  %v3433 = vmul.f32 %v3431, 0.7978846
  %v3434 = vtanh.pop %v3432
  %v3435 = vtanh.pop %v3433
  %v3436 = vadd.f32 %v3434, 1.0
  %v3437 = vadd.f32 %v3435, 1.0
  %v3438 = vmul.f32 %v3422, %v3436
  %v3439 = vmul.f32 %v3423, %v3437
  %v3440 = vmul.f32 %v3327, %v3438
  %v3441 = vmul.f32 %v3329, %v3439
  %v3442 = vld [vmem:[%s26] sm:$0x3]
  %v3444 = vlaneseq
  %v3445 = vshrl.u32 %v3444, 7
  %v3446 = vsub.s32 0, %v3445
  %v3447 = vrot.slane %v3442, %v3446
  %v3448 = vlaneseq
  %v3449 = vshrl.u32 %v3448, 7
  %v3450 = vsub.s32 1, %v3449
  %v3451 = vrot.slane %v3442, %v3450
  %v3454 = vmul.f32 %v3440, %v3447
  %v3455 = vmul.f32 %v3441, %v3451
  %vm3456 = vcmask 1041408
  %v3457 = vsel %vm3456, %v3454, 0.0
  %v3458 = vsel %vm214, %v3455, 0.0
  %v3459 = vadd.f32 %v3457, %v3458
  %3460 = vadd.xlane.f32.xlu0 %v3459
  %v3461 = vpop.xlane.xlu0 %3460
  %vm3462 = vcmask 1024
  %3463 = vst.msk [vmem:[%s27] sm:$0x3] %vm3462, %v3461
  // Predicated region
  $region110: #{tpu_custom_call.1} parent=0 // pred_check
    _
  $region111: #{tpu_custom_call.1} parent=0 // pred_check_branch
    %3465 = sbr.rel (0) target = $region113
  $region112: #{tpu_custom_call.1} parent=0 // pred_region
    _
  $region113: #{tpu_custom_call.1} parent=0 // pred_fallthru
    _
  // Predicated region
  $region114: #{tpu_custom_call.1} parent=0 // pred_check
    _
  $region115: #{tpu_custom_call.1} parent=0 // pred_check_branch
    %3467 = sbr.rel (0) target = $region117
  $region116: #{tpu_custom_call.1} parent=0 // pred_region
    _
  $region117: #{tpu_custom_call.1} parent=0 // pred_fallthru
    _

</llo_original>
